<compile_context>
chip_gen: v5e
topology: v5e:2x2
jax: 0.10.0
libtpu: 0.0.40
codegen_flags: <defaults>
</compile_context>

<pallas_src>
import functools

import jax
import jax.numpy as jnp
from jax import lax
from jax.experimental import pallas as pl
from jax.experimental.pallas import tpu as pltpu

EPS = 1e-5
_VMEM_LIMIT_BYTES = 48 * 1024 * 1024   # within v5e/v6e/v7x physical VMEM


# ----------------------------------------------------------------------------
# Small helpers
# ----------------------------------------------------------------------------
def _pick_tile(n, target, mult=1):
    """Largest divisor of n that is <= target and a multiple of mult."""
    t = min(target, n)
    t -= t % mult
    for cand in range(t, 0, -mult):
        if n % cand == 0:
            return cand
    return n


def _round_up(x, m):
    return ((x + m - 1) // m) * m


def _stats_rows(y):
    """Pack per-tile BN partial stats into one (8, C) block.

    Row 0 = sum(y, axis=0), row 1 = sum(y*y, axis=0), rows 2..7 = 0."""
    s = jnp.sum(y, axis=0, keepdims=True)
    q = jnp.sum(y * y, axis=0, keepdims=True)
    row = lax.broadcasted_iota(jnp.int32, (8, y.shape[-1]), 0)
    return jnp.where(row == 0, s, jnp.where(row == 1, q, 0.0))


def _bn_scale_shift(stats, count, gamma, beta, eps=EPS):
    """Fold partial batch statistics into per-channel affine y*scale + shift."""
    # TODO(synk): E[x^2]-E[x]^2 in fp32 can cancel for large-magnitude
    # activations; switch to a two-pass mean/variance for production inputs.
    total = jnp.sum(stats[:, 0, :], axis=0)
    total_sq = jnp.sum(stats[:, 1, :], axis=0)
    mean = total / count
    var = jnp.maximum(total_sq / count - mean * mean, 0.0)
    scale = gamma * lax.rsqrt(var + eps)
    shift = beta - mean * scale
    return (scale.reshape(1, -1).astype(jnp.float32),
            shift.reshape(1, -1).astype(jnp.float32))


# ----------------------------------------------------------------------------
# Kernel 1: 1x1 conv (matmul) + per-tile BN partial stats   (cbnr_1 matmul)
# ----------------------------------------------------------------------------
def _conv1x1_stats_kernel(x_ref, w_ref, y_ref, st_ref):
    y = jnp.dot(x_ref[...], w_ref[...], preferred_element_type=jnp.float32)
    y_ref[...] = y.astype(jnp.bfloat16)          # bf16 intermediate storage
    st_ref[0] = _stats_rows(y)                   # stats from the fp32 result


def conv1x1_stats(x_flat, w, *, m_tile):
    M, cin = x_flat.shape
    cout = w.shape[1]
    tm = _pick_tile(M, m_tile, mult=16)          # bf16 sublane packing
    T = M // tm
    return pl.pallas_call(
        _conv1x1_stats_kernel,
        out_shape=(jax.ShapeDtypeStruct((M, cout), jnp.bfloat16),
                   jax.ShapeDtypeStruct((T, 8, cout), jnp.float32)),
        grid=(T,),
        in_specs=[
            pl.BlockSpec((tm, cin), lambda i: (i, 0)),
            pl.BlockSpec((cin, cout), lambda i: (0, 0)),     # weight resident
        ],
        out_specs=(
            pl.BlockSpec((tm, cout), lambda i: (i, 0)),
            pl.BlockSpec((1, 8, cout), lambda i: (i, 0, 0)),
        ),
        compiler_params=pltpu.CompilerParams(
            dimension_semantics=("parallel",),
            vmem_limit_bytes=_VMEM_LIMIT_BYTES),
    )(x_flat, w)


# ----------------------------------------------------------------------------
# Kernel 2: 3x3 conv (stride/dilation) + fused input BN1+ReLU+zero-pad
#           + per-tile BN2 partial stats                    (cbnr_2 matmul)
# ----------------------------------------------------------------------------
def _conv3x3_stats_kernel(y1_ref, w_ref, sc_ref, sh_ref, y2_ref, st_ref,
                          pad_scr,
                          *, stride, dilation, pad, col0, tr, wo,
                          hp, wp, h, w):
    rb = pl.program_id(1)
    mid_in = y1_ref.shape[3]
    cout = y2_ref.shape[3]

    # Build the zero-padded, BN1+ReLU-applied, bf16 image once per batch
    # element inside VMEM.  rb is the inner ("arbitrary") grid axis, so
    # rb == 0 runs first per image.  Only the pad border is zeroed; the
    # interior is fully overwritten by the fused store.
    @pl.when(rb == 0)
    def _build_padded_input():
        zdt = jnp.bfloat16
        pad_scr[pl.ds(0, pad), :, :] = jnp.zeros((pad, wp, mid_in), zdt)
        pad_scr[pl.ds(pad + h, hp - pad - h), :, :] = (
            jnp.zeros((hp - pad - h, wp, mid_in), zdt))
        pad_scr[pl.ds(pad, h), pl.ds(0, col0), :] = (
            jnp.zeros((h, col0, mid_in), zdt))
        pad_scr[pl.ds(pad, h), pl.ds(col0 + w, wp - col0 - w), :] = (
            jnp.zeros((h, wp - col0 - w, mid_in), zdt))
        h1 = jnp.maximum(y1_ref[0] * sc_ref[...] + sh_ref[...], 0.0)
        pad_scr[pl.ds(pad, h), pl.ds(col0, w), :] = h1.astype(zdt)

    row0 = rb * (tr * stride)
    acc = None
    for tap in range(9):                       # jnp value accumulator
        kh, kw = tap // 3, tap % 3
        rs = row0 + kh * dilation
        cs = col0 - pad + kw * dilation
        if stride == 1:
            xs = pad_scr[pl.ds(rs, tr), pl.ds(cs, wo), :]
        else:
            # Dense (unit-stride) ref load, then static strided slice on the
            # VALUE (no strided Ref indexing).  s^2 overfetch is VMEM-local.
            dense = pad_scr[pl.ds(rs, tr * stride), pl.ds(cs, wo * stride), :]
            xs = dense[::stride, ::stride, :]
        xs = xs.reshape(tr * wo, mid_in)
        contrib = jnp.dot(xs, w_ref[tap], preferred_element_type=jnp.float32)
        acc = contrib if acc is None else acc + contrib

    y2_ref[0] = acc.reshape(tr, wo, cout).astype(jnp.bfloat16)
    st_ref[0] = _stats_rows(acc)               # stats from the fp32 result


def conv3x3_stats(y1_img, w_taps, scale1, shift1, *, stride, dilation,
                  out_hw, r_tile):
    N, H, W, mid_in = y1_img.shape
    cout = w_taps.shape[-1]
    Ho, Wo = out_hw
    pad = dilation
    tr = _pick_tile(Ho, r_tile)
    RB = Ho // tr

    # Padded-image scratch; interior column offset aligned to the bf16
    # sublane tile so the per-image interior store is unmasked.  Sized so the
    # dense (stride-overfetch) tap loads stay in bounds.
    col0 = _round_up(pad, 16)
    hp = Ho * stride + 2 * pad
    wp = col0 + Wo * stride + pad

    kernel = functools.partial(
        _conv3x3_stats_kernel, stride=stride, dilation=dilation,
        pad=pad, col0=col0, tr=tr, wo=Wo, hp=hp, wp=wp, h=H, w=W)

    return pl.pallas_call(
        kernel,
        out_shape=(jax.ShapeDtypeStruct((N, Ho, Wo, cout), jnp.bfloat16),
                   jax.ShapeDtypeStruct((N * RB, 8, cout), jnp.float32)),
        grid=(N, RB),
        in_specs=[
            pl.BlockSpec((1, H, W, mid_in), lambda n, rb: (n, 0, 0, 0)),
            pl.BlockSpec((9, mid_in, cout), lambda n, rb: (0, 0, 0)),
            pl.BlockSpec((1, mid_in), lambda n, rb: (0, 0)),
            pl.BlockSpec((1, mid_in), lambda n, rb: (0, 0)),
        ],
        out_specs=(
            pl.BlockSpec((1, tr, Wo, cout), lambda n, rb: (n, rb, 0, 0)),
            pl.BlockSpec((1, 8, cout), lambda n, rb: (n * RB + rb, 0, 0)),
        ),
        scratch_shapes=[pltpu.VMEM((hp, wp, mid_in), jnp.bfloat16)],
        compiler_params=pltpu.CompilerParams(
            # rb must stay sequential per image: the padded-image scratch is
            # built at rb == 0 and reused by later row blocks.
            dimension_semantics=("parallel", "arbitrary"),
            vmem_limit_bytes=_VMEM_LIMIT_BYTES),
    )(y1_img, w_taps, scale1, shift1)


# ----------------------------------------------------------------------------
# Kernel 3: fused head matmuls — BN2+ReLU on the fly, cbn_1 and cbn_residual
#           1x1 convs back-to-back, per-tile BN3/BNres partial stats.
#           The residual input is already stride-decimated in the wrapper.
# ----------------------------------------------------------------------------
def _head_matmul_kernel(y2_ref, xs_ref, sc2_ref, sh2_ref, w3_ref, wr_ref,
                        y3_ref, yr_ref, st3_ref, str_ref, *, tr, wo):
    mid_in = y2_ref.shape[3]
    cin = xs_ref.shape[3]
    cout = y3_ref.shape[3]

    # cbn_1 path: BN2 + ReLU applied to the incoming 3x3 output, then matmul.
    h2 = jnp.maximum(y2_ref[0] * sc2_ref[...] + sh2_ref[...], 0.0)
    h2 = h2.reshape(tr * wo, mid_in).astype(jnp.bfloat16)
    y3 = jnp.dot(h2, w3_ref[...], preferred_element_type=jnp.float32)

    # cbn_residual path: 1x1 conv on the pre-strided input block.
    xr = xs_ref[0].reshape(tr * wo, cin)
    yr = jnp.dot(xr, wr_ref[...], preferred_element_type=jnp.float32)

    y3_ref[0] = y3.reshape(tr, wo, cout).astype(jnp.bfloat16)
    yr_ref[0] = yr.reshape(tr, wo, cout).astype(jnp.bfloat16)
    st3_ref[0] = _stats_rows(y3)
    str_ref[0] = _stats_rows(yr)


def head_matmuls(y2, x_res, scale2, shift2, w3, wres, *, r_tile):
    N, Ho, Wo, mid_in = y2.shape
    cin = x_res.shape[3]
    cout = w3.shape[1]
    tr = _pick_tile(Ho, r_tile)
    RB = Ho // tr
    kernel = functools.partial(_head_matmul_kernel, tr=tr, wo=Wo)
    return pl.pallas_call(
        kernel,
        out_shape=(jax.ShapeDtypeStruct((N, Ho, Wo, cout), jnp.bfloat16),
                   jax.ShapeDtypeStruct((N, Ho, Wo, cout), jnp.bfloat16),
                   jax.ShapeDtypeStruct((N * RB, 8, cout), jnp.float32),
                   jax.ShapeDtypeStruct((N * RB, 8, cout), jnp.float32)),
        grid=(N, RB),
        in_specs=[
            pl.BlockSpec((1, tr, Wo, mid_in), lambda n, rb: (n, rb, 0, 0)),
            pl.BlockSpec((1, tr, Wo, cin), lambda n, rb: (n, rb, 0, 0)),
            pl.BlockSpec((1, mid_in), lambda n, rb: (0, 0)),
            pl.BlockSpec((1, mid_in), lambda n, rb: (0, 0)),
            pl.BlockSpec((mid_in, cout), lambda n, rb: (0, 0)),  # resident
            pl.BlockSpec((cin, cout), lambda n, rb: (0, 0)),     # resident
        ],
        out_specs=(
            pl.BlockSpec((1, tr, Wo, cout), lambda n, rb: (n, rb, 0, 0)),
            pl.BlockSpec((1, tr, Wo, cout), lambda n, rb: (n, rb, 0, 0)),
            pl.BlockSpec((1, 8, cout), lambda n, rb: (n * RB + rb, 0, 0)),
            pl.BlockSpec((1, 8, cout), lambda n, rb: (n * RB + rb, 0, 0)),
        ),
        compiler_params=pltpu.CompilerParams(
            dimension_semantics=("parallel", "parallel"),
            vmem_limit_bytes=_VMEM_LIMIT_BYTES),
    )(y2, x_res, scale2, shift2, w3, wres)


# ----------------------------------------------------------------------------
# Kernel 4: finalize — BN3 + BNres + add + ReLU (fp32 module output)
# ----------------------------------------------------------------------------
def _finalize_kernel(y3_ref, yr_ref, s3_ref, b3_ref, sr_ref, br_ref, o_ref):
    y = (y3_ref[0] * s3_ref[...] + b3_ref[...]
         + yr_ref[0] * sr_ref[...] + br_ref[...])
    o_ref[0] = jnp.maximum(y, 0.0)


def finalize(y3, yres, s3, b3, sr, br, *, r_tile):
    N, Ho, Wo, cout = y3.shape
    tr = _pick_tile(Ho, r_tile)
    return pl.pallas_call(
        _finalize_kernel,
        out_shape=jax.ShapeDtypeStruct((N, Ho, Wo, cout), jnp.float32),
        grid=(N, Ho // tr),
        in_specs=[
            pl.BlockSpec((1, tr, Wo, cout), lambda n, rb: (n, rb, 0, 0)),
            pl.BlockSpec((1, tr, Wo, cout), lambda n, rb: (n, rb, 0, 0)),
            pl.BlockSpec((1, cout), lambda n, rb: (0, 0)),
            pl.BlockSpec((1, cout), lambda n, rb: (0, 0)),
            pl.BlockSpec((1, cout), lambda n, rb: (0, 0)),
            pl.BlockSpec((1, cout), lambda n, rb: (0, 0)),
        ],
        out_specs=pl.BlockSpec((1, tr, Wo, cout), lambda n, rb: (n, rb, 0, 0)),
        compiler_params=pltpu.CompilerParams(
            dimension_semantics=("parallel", "parallel"),
            vmem_limit_bytes=_VMEM_LIMIT_BYTES),
    )(y3, yres, s3, b3, sr, br)


# ----------------------------------------------------------------------------
# Parameter init (deterministic, synthetic) + full forward
# ----------------------------------------------------------------------------
def init_params(key, in_ch, mid_ch, out_ch):
    k1, k2, k3, k4 = jax.random.split(key, 4)
    bn = lambda c: (jnp.ones((c,), jnp.float32), jnp.zeros((c,), jnp.float32))
    return dict(
        w1=0.1 * jax.random.normal(k1, (in_ch, mid_ch), jnp.float32),         # 1x1
        w2=0.1 * jax.random.normal(k2, (3, 3, mid_ch, mid_ch), jnp.float32),  # HWIO
        w3=0.1 * jax.random.normal(k3, (mid_ch, out_ch), jnp.float32),        # 1x1
        wres=0.1 * jax.random.normal(k4, (in_ch, out_ch), jnp.float32),       # 1x1
        bn1=bn(mid_ch), bn2=bn(mid_ch), bn3=bn(out_ch), bnres=bn(out_ch),
    )


def bottleneck_psp_forward(x_nchw, params, *, stride=1, dilation=1,
                           m_tile=1024, r_tile=64):
    x = jnp.transpose(x_nchw, (0, 2, 3, 1)).astype(jnp.float32)   # NHWC
    N, H, W, cin = x.shape
    mid = params["w1"].shape[1]

    g1, b1 = params["bn1"]
    g2, b2 = params["bn2"]
    g3, b3 = params["bn3"]
    gr, br = params["bnres"]

    # bf16 matmul operands and bf16 intermediate storage everywhere
    # (fp32 MXU accumulation / BN statistics / final output).
    x_bf = x.astype(jnp.bfloat16)
    w1 = params["w1"].astype(jnp.bfloat16)
    w2 = params["w2"].reshape(9, mid, mid).astype(jnp.bfloat16)   # (tap,ci,co)
    w3 = params["w3"].astype(jnp.bfloat16)
    wres = params["wres"].astype(jnp.bfloat16)

    Ho = (H - 1) // stride + 1
    Wo = (W - 1) // stride + 1
    M1 = N * H * W
    M2 = N * Ho * Wo

    # --- cbnr_1: tiled 1x1 conv + partial BN stats --------------------------
    y1, st1 = conv1x1_stats(x_bf.reshape(M1, cin), w1, m_tile=m_tile)
    sc1, sh1 = _bn_scale_shift(st1, M1, g1, b1)

    # --- cbnr_2: 3x3 conv; BN1+ReLU+zero-pad fused into a VMEM scratch ------
    y2, st2 = conv3x3_stats(y1.reshape(N, H, W, mid), w2, sc1, sh1,
                            stride=stride, dilation=dilation,
                            out_hw=(Ho, Wo), r_tile=r_tile)
    sc2, sh2 = _bn_scale_shift(st2, M2, g2, b2)

    # --- cbn_1 + cbn_residual matmuls (BN2+ReLU fused on the input side) ----
    # Residual input is pre-strided here (fused with the transpose/astype
    # pass) so the head kernel only DMAs the rows/cols it actually uses.
    x_res = x_bf if stride == 1 else x_bf[:, ::stride, ::stride, :]
    y3, yres, st3, stres = head_matmuls(y2, x_res, sc2, sh2, w3, wres,
                                        r_tile=r_tile)
    sc3, sh3 = _bn_scale_shift(st3, M2, g3, b3)
    scres, shres = _bn_scale_shift(stres, M2, gr, br)

    # --- BN3 + BNres + add + ReLU -------------------------------------------
    out = finalize(y3, yres, sc3, sh3, scres, shres, r_tile=r_tile)
    return jnp.transpose(out, (0, 3, 1, 2))                       # back to NCHW


# ----------------------------------------------------------------------------
# Plain-JAX reference mirroring the kernel precision policy
# (bf16 matmul operands, fp32 accumulation, bf16 intermediate storage,
#  BN stats computed from the fp32 conv results).
# ----------------------------------------------------------------------------
def reference_forward(x_nchw, params, *, stride=1, dilation=1):
    x = jnp.transpose(x_nchw, (0, 2, 3, 1)).astype(jnp.float32)
    N, H, W, cin = x.shape

    def q(y):                       # bf16 storage round-trip
        return y.astype(jnp.bfloat16).astype(jnp.float32)

    def bn_affine(y, gamma, beta):
        m = jnp.mean(y, axis=(0, 1, 2))
        v = jnp.maximum(jnp.mean(y * y, axis=(0, 1, 2)) - m * m, 0.0)
        scale = gamma * lax.rsqrt(v + EPS)
        return scale, beta - m * scale

    def conv1x1(z_bf, w):
        n, h, w_, c = z_bf.shape
        y = jnp.dot(z_bf.reshape(-1, c), w.astype(jnp.bfloat16),
                    preferred_element_type=jnp.float32)
        return y.reshape(n, h, w_, -1)

    xb = x.astype(jnp.bfloat16)

    # cbnr_1
    y1 = conv1x1(xb, params["w1"])
    s1, t1 = bn_affine(y1, *params["bn1"])
    h1 = jnp.maximum(q(y1) * s1 + t1, 0.0)

    # cbnr_2
    y2 = lax.conv_general_dilated(
        h1.astype(jnp.bfloat16), params["w2"].astype(jnp.bfloat16),
        (stride, stride), [(dilation, dilation), (dilation, dilation)],
        rhs_dilation=(dilation, dilation),
        dimension_numbers=("NHWC", "HWIO", "NHWC"),
        preferred_element_type=jnp.float32)
    s2, t2 = bn_affine(y2, *params["bn2"])
    h2 = jnp.maximum(q(y2) * s2 + t2, 0.0)

    # cbn_1
    y3 = conv1x1(h2.astype(jnp.bfloat16), params["w3"])
    s3, t3 = bn_affine(y3, *params["bn3"])

    # cbn_residual
    xr = xb if stride == 1 else xb[:, ::stride, ::stride, :]
    yr = conv1x1(xr, params["wres"])
    sr, tr_ = bn_affine(yr, *params["bnres"])

    out = jnp.maximum(q(y3) * s3 + t3 + q(yr) * sr + tr_, 0.0)
    return jnp.transpose(out, (0, 3, 1, 2))


# ----------------------------------------------------------------------------
if __name__ == "__main__":
    key = jax.random.PRNGKey(0)
    kx, kp = jax.random.split(key)

    N, C_in, H, W = 2, 4, 16, 16
    mid_ch, out_ch = 4, 8

    x = jax.random.normal(kx, (N, C_in, H, W), jnp.float32)
    params = init_params(kp, C_in, mid_ch, out_ch)

    # Exercise the stride=2 and dilation=2 paths too, with small tiles so the
    # partial-stats accumulation spans multiple grid steps.
    for stride, dilation in [(1, 1), (2, 1), (1, 2)]:
        fwd = jax.jit(functools.partial(
            bottleneck_psp_forward, stride=stride, dilation=dilation,
            m_tile=128, r_tile=8))
        y = jax.block_until_ready(fwd(x, params))
        y_ref = reference_forward(x, params, stride=stride, dilation=dilation)

        Ho = (H - 1) // stride + 1
        Wo = (W - 1) // stride + 1
        assert y.shape == (N, out_ch, Ho, Wo), (stride, dilation, y.shape)
        err = float(jnp.max(jnp.abs(y - y_ref)))
        # Reference mirrors the bf16-operand / bf16-intermediate policy, so
        # only accumulation-order noise remains.
        assert err < 5e-3, (stride, dilation, err)

    print("KERNEL_OK")
</pallas_src>

<mosaic_0001>
module attributes {stable_mosaic.version = 11 : i64} {
  func.func @_conv1x1_stats_kernel(%arg0: i32, %arg1: memref<128x4xbf16, #tpu.memory_space<vmem>>, %arg2: memref<4x4xbf16, #tpu.memory_space<vmem>>, %arg3: memref<128x4xbf16, #tpu.memory_space<vmem>>, %arg4: memref<1x8x4xf32, #tpu.memory_space<vmem>>) attributes {dimension_semantics = [#tpu.dimension_semantics<parallel>], iteration_bounds = array<i64: 4>, scalar_prefetch = 0 : i64, scratch_operands = 0 : i64, tpu.core_type = #tpu.core_type<tc>, window_params = [{transform_indices = @transform_0, window_bounds = array<i64: 128, 4>}, {pipeline_mode = #tpu.pipeline_mode<synchronous>, transform_indices = @transform_1, window_bounds = array<i64: 4, 4>}, {transform_indices = @transform_2, window_bounds = array<i64: 128, 4>}, {transform_indices = @transform_3, window_bounds = array<i64: 1, 8, 4>}]} {
    %c0 = arith.constant 0 : index
    %c0_0 = arith.constant 0 : index
    %0 = vector.load %arg1[%c0, %c0_0] : memref<128x4xbf16, #tpu.memory_space<vmem>>, vector<128x4xbf16>
    %c0_1 = arith.constant 0 : index
    %c0_2 = arith.constant 0 : index
    %1 = vector.load %arg2[%c0_1, %c0_2] : memref<4x4xbf16, #tpu.memory_space<vmem>>, vector<4x4xbf16>
    %cst = arith.constant dense<0.000000e+00> : vector<128x4xf32>
    %2 = tpu.matmul %0, %1, %cst {dimension_numbers = #tpu.dot_dimension_numbers<[1], [0], [0], [1], [0, 0, 1, 1], [], []>} : vector<128x4xbf16>, vector<4x4xbf16>, vector<128x4xf32> -> vector<128x4xf32>
    %3 = arith.truncf %2 : vector<128x4xf32> to vector<128x4xbf16>
    %c0_3 = arith.constant 0 : index
    %c0_4 = arith.constant 0 : index
    %4 = vector.load %arg3[%c0_3, %c0_4] : memref<128x4xbf16, #tpu.memory_space<vmem>>, vector<128x4xbf16>
    tpu.vector_store %arg3[%c0_3, %c0_4], %3 {strides = array<i32>} : memref<128x4xbf16, #tpu.memory_space<vmem>>, vector<128x4xbf16>,
    %cst_5 = arith.constant dense<0.000000e+00> : vector<4xf32>
    %5 = vector.multi_reduction <add>, %2, %cst_5 [0] : vector<128x4xf32> to vector<4xf32>
    %6 = vector.shape_cast %5 : vector<4xf32> to vector<1x4xf32>
    %7 = arith.mulf %2, %2 : vector<128x4xf32>
    %cst_6 = arith.constant dense<0.000000e+00> : vector<4xf32>
    %8 = vector.multi_reduction <add>, %7, %cst_6 [0] : vector<128x4xf32> to vector<4xf32>
    %9 = vector.shape_cast %8 : vector<4xf32> to vector<1x4xf32>
    %10 = tpu.iota {dimensions = array<i32: 0>} : vector<8x4xi32>
    %c0_i32 = arith.constant 0 : i32
    %11 = vector.broadcast %c0_i32 : i32 to vector<8x4xi32>
    %12 = arith.cmpi eq, %10, %11 : vector<8x4xi32>
    %c1_i32 = arith.constant 1 : i32
    %13 = vector.broadcast %c1_i32 : i32 to vector<8x4xi32>
    %14 = arith.cmpi eq, %10, %13 : vector<8x4xi32>
    %cst_7 = arith.constant 0.000000e+00 : f32
    %15 = vector.shape_cast %9 : vector<1x4xf32> to vector<1x4xf32>
    %16 = vector.broadcast %15 : vector<1x4xf32> to vector<8x4xf32>
    %17 = vector.broadcast %cst_7 : f32 to vector<8x4xf32>
    %18 = arith.select %14, %16, %17 : vector<8x4xi1>, vector<8x4xf32>
    %19 = vector.shape_cast %6 : vector<1x4xf32> to vector<1x4xf32>
    %20 = vector.broadcast %19 : vector<1x4xf32> to vector<8x4xf32>
    %21 = arith.select %12, %20, %18 : vector<8x4xi1>, vector<8x4xf32>
    %c0_8 = arith.constant 0 : index
    %c0_9 = arith.constant 0 : index
    %c0_10 = arith.constant 0 : index
    %22 = vector.load %arg4[%c0_8, %c0_9, %c0_10] : memref<1x8x4xf32, #tpu.memory_space<vmem>>, vector<1x8x4xf32>
    %23 = vector.shape_cast %22 : vector<1x8x4xf32> to vector<8x4xf32>
    %24 = vector.shape_cast %21 : vector<8x4xf32> to vector<1x8x4xf32>
    tpu.vector_store %arg4[%c0_8, %c0_9, %c0_10], %24 {strides = array<i32>} : memref<1x8x4xf32, #tpu.memory_space<vmem>>, vector<1x8x4xf32>,
    return
  }
  func.func @transform_0(%arg0: i32) -> (i32, i32) {
    %c0_i32 = arith.constant 0 : i32
    %c0_i32_0 = arith.constant 0 : i32
    return %arg0, %c0_i32 : i32, i32
  }
  func.func @transform_1(%arg0: i32) -> (i32, i32) {
    %c0_i32 = arith.constant 0 : i32
    %c0_i32_0 = arith.constant 0 : i32
    %c0_i32_1 = arith.constant 0 : i32
    return %c0_i32, %c0_i32_0 : i32, i32
  }
  func.func @transform_2(%arg0: i32) -> (i32, i32) {
    %c0_i32 = arith.constant 0 : i32
    %c0_i32_0 = arith.constant 0 : i32
    return %arg0, %c0_i32 : i32, i32
  }
  func.func @transform_3(%arg0: i32) -> (i32, i32, i32) {
    %c0_i32 = arith.constant 0 : i32
    %c0_i32_0 = arith.constant 0 : i32
    %c0_i32_1 = arith.constant 0 : i32
    return %arg0, %c0_i32, %c0_i32_0 : i32, i32, i32
  }
}

module attributes {stable_mosaic.version = 11 : i64} {
  func.func @_conv3x3_stats_kernel(%arg0: i32, %arg1: i32, %arg2: memref<1x16x16x4xbf16, #tpu.memory_space<vmem>>, %arg3: memref<9x4x4xbf16, #tpu.memory_space<vmem>>, %arg4: memref<1x4xf32, #tpu.memory_space<vmem>>, %arg5: memref<1x4xf32, #tpu.memory_space<vmem>>, %arg6: memref<1x8x16x4xbf16, #tpu.memory_space<vmem>>, %arg7: memref<1x8x4xf32, #tpu.memory_space<vmem>>, %arg8: memref<18x33x4xbf16, #tpu.memory_space<vmem>>) attributes {dimension_semantics = [#tpu.dimension_semantics<parallel>, #tpu.dimension_semantics<arbitrary>], iteration_bounds = array<i64: 2, 2>, scalar_prefetch = 0 : i64, scratch_operands = 1 : i64, tpu.core_type = #tpu.core_type<tc>, window_params = [{transform_indices = @transform_0, window_bounds = array<i64: 1, 16, 16, 4>}, {pipeline_mode = #tpu.pipeline_mode<synchronous>, transform_indices = @transform_1, window_bounds = array<i64: 9, 4, 4>}, {pipeline_mode = #tpu.pipeline_mode<synchronous>, transform_indices = @transform_2, window_bounds = array<i64: 1, 4>}, {pipeline_mode = #tpu.pipeline_mode<synchronous>, transform_indices = @transform_3, window_bounds = array<i64: 1, 4>}, {transform_indices = @transform_4, window_bounds = array<i64: 1, 8, 16, 4>}, {transform_indices = @transform_5, window_bounds = array<i64: 1, 8, 4>}]} {
    %c0_i32 = arith.constant 0 : i32
    %0 = arith.cmpi eq, %arg1, %c0_i32 : i32
    %1 = arith.extui %0 : i1 to i32
    %c0_i32_0 = arith.constant 0 : i32
    %2 = arith.cmpi ne, %1, %c0_i32_0 : i32
    scf.if %2 {
      %cst_61 = arith.constant 0.000000e+00 : bf16
      %100 = vector.broadcast %cst_61 : bf16 to vector<1x33x4xbf16>
      %c0_62 = arith.constant 0 : index
      %c0_63 = arith.constant 0 : index
      %c0_64 = arith.constant 0 : index
      %101 = vector.load %arg8[%c0_62, %c0_63, %c0_64] : memref<18x33x4xbf16, #tpu.memory_space<vmem>>, vector<1x33x4xbf16>
      tpu.vector_store %arg8[%c0_62, %c0_63, %c0_64], %100 {strides = array<i32>} : memref<18x33x4xbf16, #tpu.memory_space<vmem>>, vector<1x33x4xbf16>,
      %cst_65 = arith.constant 0.000000e+00 : bf16
      %102 = vector.broadcast %cst_65 : bf16 to vector<1x33x4xbf16>
      %c17_66 = arith.constant 17 : index
      %c0_67 = arith.constant 0 : index
      %c0_68 = arith.constant 0 : index
      %103 = vector.load %arg8[%c17_66, %c0_67, %c0_68] : memref<18x33x4xbf16, #tpu.memory_space<vmem>>, vector<1x33x4xbf16>
      tpu.vector_store %arg8[%c17_66, %c0_67, %c0_68], %102 {strides = array<i32>} : memref<18x33x4xbf16, #tpu.memory_space<vmem>>, vector<1x33x4xbf16>,
      %cst_69 = arith.constant 0.000000e+00 : bf16
      %104 = vector.broadcast %cst_69 : bf16 to vector<16x16x4xbf16>
      %c1_70 = arith.constant 1 : index
      %c0_71 = arith.constant 0 : index
      %c0_72 = arith.constant 0 : index
      %105 = vector.load %arg8[%c1_70, %c0_71, %c0_72] : memref<18x33x4xbf16, #tpu.memory_space<vmem>>, vector<16x16x4xbf16>
      tpu.vector_store %arg8[%c1_70, %c0_71, %c0_72], %104 {strides = array<i32>} : memref<18x33x4xbf16, #tpu.memory_space<vmem>>, vector<16x16x4xbf16>,
      %cst_73 = arith.constant 0.000000e+00 : bf16
      %106 = vector.broadcast %cst_73 : bf16 to vector<16x1x4xbf16>
      %c1_74 = arith.constant 1 : index
      %c32 = arith.constant 32 : index
      %c0_75 = arith.constant 0 : index
      %107 = vector.load %arg8[%c1_74, %c32, %c0_75] : memref<18x33x4xbf16, #tpu.memory_space<vmem>>, vector<16x1x4xbf16>
      tpu.vector_store %arg8[%c1_74, %c32, %c0_75], %106 {strides = array<i32>} : memref<18x33x4xbf16, #tpu.memory_space<vmem>>, vector<16x1x4xbf16>,
      %c0_76 = arith.constant 0 : index
      %c0_77 = arith.constant 0 : index
      %c0_78 = arith.constant 0 : index
      %c0_79 = arith.constant 0 : index
      %108 = vector.load %arg2[%c0_76, %c0_77, %c0_78, %c0_79] : memref<1x16x16x4xbf16, #tpu.memory_space<vmem>>, vector<1x16x16x4xbf16>
      %109 = vector.shape_cast %108 : vector<1x16x16x4xbf16> to vector<16x16x4xbf16>
      %c0_80 = arith.constant 0 : index
      %c0_81 = arith.constant 0 : index
      %110 = vector.load %arg4[%c0_80, %c0_81] : memref<1x4xf32, #tpu.memory_space<vmem>>, vector<1x4xf32>
      %111 = arith.extf %109 : vector<16x16x4xbf16> to vector<16x16x4xf32>
      %112 = vector.shape_cast %110 : vector<1x4xf32> to vector<1x1x4xf32>
      %113 = vector.broadcast %112 : vector<1x1x4xf32> to vector<16x16x4xf32>
      %114 = arith.mulf %111, %113 : vector<16x16x4xf32>
      %c0_82 = arith.constant 0 : index
      %c0_83 = arith.constant 0 : index
      %115 = vector.load %arg5[%c0_82, %c0_83] : memref<1x4xf32, #tpu.memory_space<vmem>>, vector<1x4xf32>
      %116 = vector.shape_cast %115 : vector<1x4xf32> to vector<1x1x4xf32>
      %117 = vector.broadcast %116 : vector<1x1x4xf32> to vector<16x16x4xf32>
      %118 = arith.addf %114, %117 : vector<16x16x4xf32>
      %cst_84 = arith.constant 0.000000e+00 : f32
      %119 = vector.broadcast %cst_84 : f32 to vector<16x16x4xf32>
      %120 = arith.maximumf %118, %119 : vector<16x16x4xf32>
      %121 = arith.truncf %120 : vector<16x16x4xf32> to vector<16x16x4xbf16>
      %c1_85 = arith.constant 1 : index
      %c16_86 = arith.constant 16 : index
      %c0_87 = arith.constant 0 : index
      %122 = vector.load %arg8[%c1_85, %c16_86, %c0_87] : memref<18x33x4xbf16, #tpu.memory_space<vmem>>, vector<16x16x4xbf16>
      tpu.vector_store %arg8[%c1_85, %c16_86, %c0_87], %121 {strides = array<i32>} : memref<18x33x4xbf16, #tpu.memory_space<vmem>>, vector<16x16x4xbf16>,
    } else {
    }
    %c8_i32 = arith.constant 8 : i32
    %3 = arith.muli %arg1, %c8_i32 : i32
    %c0_i32_1 = arith.constant 0 : i32
    %4 = arith.addi %3, %c0_i32_1 : i32
    %5 = arith.index_cast %4 : i32 to index
    %c15 = arith.constant 15 : index
    %c0 = arith.constant 0 : index
    %6 = vector.load %arg8[%5, %c15, %c0] : memref<18x33x4xbf16, #tpu.memory_space<vmem>>, vector<8x16x4xbf16>
    %7 = vector.shape_cast %6 : vector<8x16x4xbf16> to vector<128x4xbf16>
    %c0_2 = arith.constant 0 : index
    %c0_3 = arith.constant 0 : index
    %c0_4 = arith.constant 0 : index
    %8 = vector.load %arg3[%c0_2, %c0_3, %c0_4] : memref<9x4x4xbf16, #tpu.memory_space<vmem>>, vector<1x4x4xbf16>
    %9 = vector.shape_cast %8 : vector<1x4x4xbf16> to vector<4x4xbf16>
    %cst = arith.constant dense<0.000000e+00> : vector<128x4xf32>
    %10 = tpu.matmul %7, %9, %cst {dimension_numbers = #tpu.dot_dimension_numbers<[1], [0], [0], [1], [0, 0, 1, 1], [], []>} : vector<128x4xbf16>, vector<4x4xbf16>, vector<128x4xf32> -> vector<128x4xf32>
    %c0_i32_5 = arith.constant 0 : i32
    %11 = arith.addi %3, %c0_i32_5 : i32
    %12 = arith.index_cast %11 : i32 to index
    %c16 = arith.constant 16 : index
    %c0_6 = arith.constant 0 : index
    %13 = vector.load %arg8[%12, %c16, %c0_6] : memref<18x33x4xbf16, #tpu.memory_space<vmem>>, vector<8x16x4xbf16>
    %14 = vector.shape_cast %13 : vector<8x16x4xbf16> to vector<128x4xbf16>
    %c1 = arith.constant 1 : index
    %c0_7 = arith.constant 0 : index
    %c0_8 = arith.constant 0 : index
    %15 = vector.load %arg3[%c1, %c0_7, %c0_8] : memref<9x4x4xbf16, #tpu.memory_space<vmem>>, vector<1x4x4xbf16>
    %16 = vector.shape_cast %15 : vector<1x4x4xbf16> to vector<4x4xbf16>
    %cst_9 = arith.constant dense<0.000000e+00> : vector<128x4xf32>
    %17 = tpu.matmul %14, %16, %cst_9 {dimension_numbers = #tpu.dot_dimension_numbers<[1], [0], [0], [1], [0, 0, 1, 1], [], []>} : vector<128x4xbf16>, vector<4x4xbf16>, vector<128x4xf32> -> vector<128x4xf32>
    %18 = arith.addf %10, %17 : vector<128x4xf32>
    %c0_i32_10 = arith.constant 0 : i32
    %19 = arith.addi %3, %c0_i32_10 : i32
    %20 = arith.index_cast %19 : i32 to index
    %c17 = arith.constant 17 : index
    %c0_11 = arith.constant 0 : index
    %21 = vector.load %arg8[%20, %c17, %c0_11] : memref<18x33x4xbf16, #tpu.memory_space<vmem>>, vector<8x16x4xbf16>
    %22 = vector.shape_cast %21 : vector<8x16x4xbf16> to vector<128x4xbf16>
    %c2 = arith.constant 2 : index
    %c0_12 = arith.constant 0 : index
    %c0_13 = arith.constant 0 : index
    %23 = vector.load %arg3[%c2, %c0_12, %c0_13] : memref<9x4x4xbf16, #tpu.memory_space<vmem>>, vector<1x4x4xbf16>
    %24 = vector.shape_cast %23 : vector<1x4x4xbf16> to vector<4x4xbf16>
    %cst_14 = arith.constant dense<0.000000e+00> : vector<128x4xf32>
    %25 = tpu.matmul %22, %24, %cst_14 {dimension_numbers = #tpu.dot_dimension_numbers<[1], [0], [0], [1], [0, 0, 1, 1], [], []>} : vector<128x4xbf16>, vector<4x4xbf16>, vector<128x4xf32> -> vector<128x4xf32>
    %26 = arith.addf %18, %25 : vector<128x4xf32>
    %c1_i32 = arith.constant 1 : i32
    %27 = arith.addi %3, %c1_i32 : i32
    %28 = arith.index_cast %27 : i32 to index
    %c15_15 = arith.constant 15 : index
    %c0_16 = arith.constant 0 : index
    %29 = vector.load %arg8[%28, %c15_15, %c0_16] : memref<18x33x4xbf16, #tpu.memory_space<vmem>>, vector<8x16x4xbf16>
    %30 = vector.shape_cast %29 : vector<8x16x4xbf16> to vector<128x4xbf16>
    %c3 = arith.constant 3 : index
    %c0_17 = arith.constant 0 : index
    %c0_18 = arith.constant 0 : index
    %31 = vector.load %arg3[%c3, %c0_17, %c0_18] : memref<9x4x4xbf16, #tpu.memory_space<vmem>>, vector<1x4x4xbf16>
    %32 = vector.shape_cast %31 : vector<1x4x4xbf16> to vector<4x4xbf16>
    %cst_19 = arith.constant dense<0.000000e+00> : vector<128x4xf32>
    %33 = tpu.matmul %30, %32, %cst_19 {dimension_numbers = #tpu.dot_dimension_numbers<[1], [0], [0], [1], [0, 0, 1, 1], [], []>} : vector<128x4xbf16>, vector<4x4xbf16>, vector<128x4xf32> -> vector<128x4xf32>
    %34 = arith.addf %26, %33 : vector<128x4xf32>
    %c1_i32_20 = arith.constant 1 : i32
    %35 = arith.addi %3, %c1_i32_20 : i32
    %36 = arith.index_cast %35 : i32 to index
    %c16_21 = arith.constant 16 : index
    %c0_22 = arith.constant 0 : index
    %37 = vector.load %arg8[%36, %c16_21, %c0_22] : memref<18x33x4xbf16, #tpu.memory_space<vmem>>, vector<8x16x4xbf16>
    %38 = vector.shape_cast %37 : vector<8x16x4xbf16> to vector<128x4xbf16>
    %c4 = arith.constant 4 : index
    %c0_23 = arith.constant 0 : index
    %c0_24 = arith.constant 0 : index
    %39 = vector.load %arg3[%c4, %c0_23, %c0_24] : memref<9x4x4xbf16, #tpu.memory_space<vmem>>, vector<1x4x4xbf16>
    %40 = vector.shape_cast %39 : vector<1x4x4xbf16> to vector<4x4xbf16>
    %cst_25 = arith.constant dense<0.000000e+00> : vector<128x4xf32>
    %41 = tpu.matmul %38, %40, %cst_25 {dimension_numbers = #tpu.dot_dimension_numbers<[1], [0], [0], [1], [0, 0, 1, 1], [], []>} : vector<128x4xbf16>, vector<4x4xbf16>, vector<128x4xf32> -> vector<128x4xf32>
    %42 = arith.addf %34, %41 : vector<128x4xf32>
    %c1_i32_26 = arith.constant 1 : i32
    %43 = arith.addi %3, %c1_i32_26 : i32
    %44 = arith.index_cast %43 : i32 to index
    %c17_27 = arith.constant 17 : index
    %c0_28 = arith.constant 0 : index
    %45 = vector.load %arg8[%44, %c17_27, %c0_28] : memref<18x33x4xbf16, #tpu.memory_space<vmem>>, vector<8x16x4xbf16>
    %46 = vector.shape_cast %45 : vector<8x16x4xbf16> to vector<128x4xbf16>
    %c5 = arith.constant 5 : index
    %c0_29 = arith.constant 0 : index
    %c0_30 = arith.constant 0 : index
    %47 = vector.load %arg3[%c5, %c0_29, %c0_30] : memref<9x4x4xbf16, #tpu.memory_space<vmem>>, vector<1x4x4xbf16>
    %48 = vector.shape_cast %47 : vector<1x4x4xbf16> to vector<4x4xbf16>
    %cst_31 = arith.constant dense<0.000000e+00> : vector<128x4xf32>
    %49 = tpu.matmul %46, %48, %cst_31 {dimension_numbers = #tpu.dot_dimension_numbers<[1], [0], [0], [1], [0, 0, 1, 1], [], []>} : vector<128x4xbf16>, vector<4x4xbf16>, vector<128x4xf32> -> vector<128x4xf32>
    %50 = arith.addf %42, %49 : vector<128x4xf32>
    %c2_i32 = arith.constant 2 : i32
    %51 = arith.addi %3, %c2_i32 : i32
    %52 = arith.index_cast %51 : i32 to index
    %c15_32 = arith.constant 15 : index
    %c0_33 = arith.constant 0 : index
    %53 = vector.load %arg8[%52, %c15_32, %c0_33] : memref<18x33x4xbf16, #tpu.memory_space<vmem>>, vector<8x16x4xbf16>
    %54 = vector.shape_cast %53 : vector<8x16x4xbf16> to vector<128x4xbf16>
    %c6 = arith.constant 6 : index
    %c0_34 = arith.constant 0 : index
    %c0_35 = arith.constant 0 : index
    %55 = vector.load %arg3[%c6, %c0_34, %c0_35] : memref<9x4x4xbf16, #tpu.memory_space<vmem>>, vector<1x4x4xbf16>
    %56 = vector.shape_cast %55 : vector<1x4x4xbf16> to vector<4x4xbf16>
    %cst_36 = arith.constant dense<0.000000e+00> : vector<128x4xf32>
    %57 = tpu.matmul %54, %56, %cst_36 {dimension_numbers = #tpu.dot_dimension_numbers<[1], [0], [0], [1], [0, 0, 1, 1], [], []>} : vector<128x4xbf16>, vector<4x4xbf16>, vector<128x4xf32> -> vector<128x4xf32>
    %58 = arith.addf %50, %57 : vector<128x4xf32>
    %c2_i32_37 = arith.constant 2 : i32
    %59 = arith.addi %3, %c2_i32_37 : i32
    %60 = arith.index_cast %59 : i32 to index
    %c16_38 = arith.constant 16 : index
    %c0_39 = arith.constant 0 : index
    %61 = vector.load %arg8[%60, %c16_38, %c0_39] : memref<18x33x4xbf16, #tpu.memory_space<vmem>>, vector<8x16x4xbf16>
    %62 = vector.shape_cast %61 : vector<8x16x4xbf16> to vector<128x4xbf16>
    %c7 = arith.constant 7 : index
    %c0_40 = arith.constant 0 : index
    %c0_41 = arith.constant 0 : index
    %63 = vector.load %arg3[%c7, %c0_40, %c0_41] : memref<9x4x4xbf16, #tpu.memory_space<vmem>>, vector<1x4x4xbf16>
    %64 = vector.shape_cast %63 : vector<1x4x4xbf16> to vector<4x4xbf16>
    %cst_42 = arith.constant dense<0.000000e+00> : vector<128x4xf32>
    %65 = tpu.matmul %62, %64, %cst_42 {dimension_numbers = #tpu.dot_dimension_numbers<[1], [0], [0], [1], [0, 0, 1, 1], [], []>} : vector<128x4xbf16>, vector<4x4xbf16>, vector<128x4xf32> -> vector<128x4xf32>
    %66 = arith.addf %58, %65 : vector<128x4xf32>
    %c2_i32_43 = arith.constant 2 : i32
    %67 = arith.addi %3, %c2_i32_43 : i32
    %68 = arith.index_cast %67 : i32 to index
    %c17_44 = arith.constant 17 : index
    %c0_45 = arith.constant 0 : index
    %69 = vector.load %arg8[%68, %c17_44, %c0_45] : memref<18x33x4xbf16, #tpu.memory_space<vmem>>, vector<8x16x4xbf16>
    %70 = vector.shape_cast %69 : vector<8x16x4xbf16> to vector<128x4xbf16>
    %c8 = arith.constant 8 : index
    %c0_46 = arith.constant 0 : index
    %c0_47 = arith.constant 0 : index
    %71 = vector.load %arg3[%c8, %c0_46, %c0_47] : memref<9x4x4xbf16, #tpu.memory_space<vmem>>, vector<1x4x4xbf16>
    %72 = vector.shape_cast %71 : vector<1x4x4xbf16> to vector<4x4xbf16>
    %cst_48 = arith.constant dense<0.000000e+00> : vector<128x4xf32>
    %73 = tpu.matmul %70, %72, %cst_48 {dimension_numbers = #tpu.dot_dimension_numbers<[1], [0], [0], [1], [0, 0, 1, 1], [], []>} : vector<128x4xbf16>, vector<4x4xbf16>, vector<128x4xf32> -> vector<128x4xf32>
    %74 = arith.addf %66, %73 : vector<128x4xf32>
    %75 = vector.shape_cast %74 : vector<128x4xf32> to vector<8x16x4xf32>
    %76 = arith.truncf %75 : vector<8x16x4xf32> to vector<8x16x4xbf16>
    %c0_49 = arith.constant 0 : index
    %c0_50 = arith.constant 0 : index
    %c0_51 = arith.constant 0 : index
    %c0_52 = arith.constant 0 : index
    %77 = vector.load %arg6[%c0_49, %c0_50, %c0_51, %c0_52] : memref<1x8x16x4xbf16, #tpu.memory_space<vmem>>, vector<1x8x16x4xbf16>
    %78 = vector.shape_cast %77 : vector<1x8x16x4xbf16> to vector<8x16x4xbf16>
    %79 = vector.shape_cast %76 : vector<8x16x4xbf16> to vector<1x8x16x4xbf16>
    tpu.vector_store %arg6[%c0_49, %c0_50, %c0_51, %c0_52], %79 {strides = array<i32>} : memref<1x8x16x4xbf16, #tpu.memory_space<vmem>>, vector<1x8x16x4xbf16>,
    %cst_53 = arith.constant dense<0.000000e+00> : vector<4xf32>
    %80 = vector.multi_reduction <add>, %74, %cst_53 [0] : vector<128x4xf32> to vector<4xf32>
    %81 = vector.shape_cast %80 : vector<4xf32> to vector<1x4xf32>
    %82 = arith.mulf %74, %74 : vector<128x4xf32>
    %cst_54 = arith.constant dense<0.000000e+00> : vector<4xf32>
    %83 = vector.multi_reduction <add>, %82, %cst_54 [0] : vector<128x4xf32> to vector<4xf32>
    %84 = vector.shape_cast %83 : vector<4xf32> to vector<1x4xf32>
    %85 = tpu.iota {dimensions = array<i32: 0>} : vector<8x4xi32>
    %c0_i32_55 = arith.constant 0 : i32
    %86 = vector.broadcast %c0_i32_55 : i32 to vector<8x4xi32>
    %87 = arith.cmpi eq, %85, %86 : vector<8x4xi32>
    %c1_i32_56 = arith.constant 1 : i32
    %88 = vector.broadcast %c1_i32_56 : i32 to vector<8x4xi32>
    %89 = arith.cmpi eq, %85, %88 : vector<8x4xi32>
    %cst_57 = arith.constant 0.000000e+00 : f32
    %90 = vector.shape_cast %84 : vector<1x4xf32> to vector<1x4xf32>
    %91 = vector.broadcast %90 : vector<1x4xf32> to vector<8x4xf32>
    %92 = vector.broadcast %cst_57 : f32 to vector<8x4xf32>
    %93 = arith.select %89, %91, %92 : vector<8x4xi1>, vector<8x4xf32>
    %94 = vector.shape_cast %81 : vector<1x4xf32> to vector<1x4xf32>
    %95 = vector.broadcast %94 : vector<1x4xf32> to vector<8x4xf32>
    %96 = arith.select %87, %95, %93 : vector<8x4xi1>, vector<8x4xf32>
    %c0_58 = arith.constant 0 : index
    %c0_59 = arith.constant 0 : index
    %c0_60 = arith.constant 0 : index
    %97 = vector.load %arg7[%c0_58, %c0_59, %c0_60] : memref<1x8x4xf32, #tpu.memory_space<vmem>>, vector<1x8x4xf32>
    %98 = vector.shape_cast %97 : vector<1x8x4xf32> to vector<8x4xf32>
    %99 = vector.shape_cast %96 : vector<8x4xf32> to vector<1x8x4xf32>
    tpu.vector_store %arg7[%c0_58, %c0_59, %c0_60], %99 {strides = array<i32>} : memref<1x8x4xf32, #tpu.memory_space<vmem>>, vector<1x8x4xf32>,
    return
  }
  func.func @transform_0(%arg0: i32, %arg1: i32) -> (i32, i32, i32, i32) {
    %c0_i32 = arith.constant 0 : i32
    %c0_i32_0 = arith.constant 0 : i32
    %c0_i32_1 = arith.constant 0 : i32
    %c0_i32_2 = arith.constant 0 : i32
    return %arg0, %c0_i32, %c0_i32_0, %c0_i32_1 : i32, i32, i32, i32
  }
  func.func @transform_1(%arg0: i32, %arg1: i32) -> (i32, i32, i32) {
    %c0_i32 = arith.constant 0 : i32
    %c0_i32_0 = arith.constant 0 : i32
    %c0_i32_1 = arith.constant 0 : i32
    %c0_i32_2 = arith.constant 0 : i32
    return %c0_i32, %c0_i32_0, %c0_i32_1 : i32, i32, i32
  }
  func.func @transform_2(%arg0: i32, %arg1: i32) -> (i32, i32) {
    %c0_i32 = arith.constant 0 : i32
    %c0_i32_0 = arith.constant 0 : i32
    %c0_i32_1 = arith.constant 0 : i32
    return %c0_i32, %c0_i32_0 : i32, i32
  }
  func.func @transform_3(%arg0: i32, %arg1: i32) -> (i32, i32) {
    %c0_i32 = arith.constant 0 : i32
    %c0_i32_0 = arith.constant 0 : i32
    %c0_i32_1 = arith.constant 0 : i32
    return %c0_i32, %c0_i32_0 : i32, i32
  }
  func.func @transform_4(%arg0: i32, %arg1: i32) -> (i32, i32, i32, i32) {
    %c0_i32 = arith.constant 0 : i32
    %c0_i32_0 = arith.constant 0 : i32
    %c0_i32_1 = arith.constant 0 : i32
    return %arg0, %arg1, %c0_i32, %c0_i32_0 : i32, i32, i32, i32
  }
  func.func @transform_5(%arg0: i32, %arg1: i32) -> (i32, i32, i32) {
    %c2_i32 = arith.constant 2 : i32
    %0 = arith.muli %arg0, %c2_i32 : i32
    %1 = arith.addi %0, %arg1 : i32
    %c0_i32 = arith.constant 0 : i32
    %c0_i32_0 = arith.constant 0 : i32
    %c0_i32_1 = arith.constant 0 : i32
    return %1, %c0_i32, %c0_i32_0 : i32, i32, i32
  }
}

module attributes {stable_mosaic.version = 11 : i64} {
  func.func @_head_matmul_kernel(%arg0: i32, %arg1: i32, %arg2: memref<1x8x16x4xbf16, #tpu.memory_space<vmem>>, %arg3: memref<1x8x16x4xbf16, #tpu.memory_space<vmem>>, %arg4: memref<1x4xf32, #tpu.memory_space<vmem>>, %arg5: memref<1x4xf32, #tpu.memory_space<vmem>>, %arg6: memref<4x8xbf16, #tpu.memory_space<vmem>>, %arg7: memref<4x8xbf16, #tpu.memory_space<vmem>>, %arg8: memref<1x8x16x8xbf16, #tpu.memory_space<vmem>>, %arg9: memref<1x8x16x8xbf16, #tpu.memory_space<vmem>>, %arg10: memref<1x8x8xf32, #tpu.memory_space<vmem>>, %arg11: memref<1x8x8xf32, #tpu.memory_space<vmem>>) attributes {dimension_semantics = [#tpu.dimension_semantics<parallel>, #tpu.dimension_semantics<parallel>], iteration_bounds = array<i64: 2, 2>, scalar_prefetch = 0 : i64, scratch_operands = 0 : i64, tpu.core_type = #tpu.core_type<tc>, window_params = [{transform_indices = @transform_0, window_bounds = array<i64: 1, 8, 16, 4>}, {transform_indices = @transform_1, window_bounds = array<i64: 1, 8, 16, 4>}, {pipeline_mode = #tpu.pipeline_mode<synchronous>, transform_indices = @transform_2, window_bounds = array<i64: 1, 4>}, {pipeline_mode = #tpu.pipeline_mode<synchronous>, transform_indices = @transform_3, window_bounds = array<i64: 1, 4>}, {pipeline_mode = #tpu.pipeline_mode<synchronous>, transform_indices = @transform_4, window_bounds = array<i64: 4, 8>}, {pipeline_mode = #tpu.pipeline_mode<synchronous>, transform_indices = @transform_5, window_bounds = array<i64: 4, 8>}, {transform_indices = @transform_6, window_bounds = array<i64: 1, 8, 16, 8>}, {transform_indices = @transform_7, window_bounds = array<i64: 1, 8, 16, 8>}, {transform_indices = @transform_8, window_bounds = array<i64: 1, 8, 8>}, {transform_indices = @transform_9, window_bounds = array<i64: 1, 8, 8>}]} {
    %c0 = arith.constant 0 : index
    %c0_0 = arith.constant 0 : index
    %c0_1 = arith.constant 0 : index
    %c0_2 = arith.constant 0 : index
    %0 = vector.load %arg2[%c0, %c0_0, %c0_1, %c0_2] : memref<1x8x16x4xbf16, #tpu.memory_space<vmem>>, vector<1x8x16x4xbf16>
    %1 = vector.shape_cast %0 : vector<1x8x16x4xbf16> to vector<8x16x4xbf16>
    %c0_3 = arith.constant 0 : index
    %c0_4 = arith.constant 0 : index
    %2 = vector.load %arg4[%c0_3, %c0_4] : memref<1x4xf32, #tpu.memory_space<vmem>>, vector<1x4xf32>
    %3 = arith.extf %1 : vector<8x16x4xbf16> to vector<8x16x4xf32>
    %4 = vector.shape_cast %2 : vector<1x4xf32> to vector<1x1x4xf32>
    %5 = vector.broadcast %4 : vector<1x1x4xf32> to vector<8x16x4xf32>
    %6 = arith.mulf %3, %5 : vector<8x16x4xf32>
    %c0_5 = arith.constant 0 : index
    %c0_6 = arith.constant 0 : index
    %7 = vector.load %arg5[%c0_5, %c0_6] : memref<1x4xf32, #tpu.memory_space<vmem>>, vector<1x4xf32>
    %8 = vector.shape_cast %7 : vector<1x4xf32> to vector<1x1x4xf32>
    %9 = vector.broadcast %8 : vector<1x1x4xf32> to vector<8x16x4xf32>
    %10 = arith.addf %6, %9 : vector<8x16x4xf32>
    %cst = arith.constant 0.000000e+00 : f32
    %11 = vector.broadcast %cst : f32 to vector<8x16x4xf32>
    %12 = arith.maximumf %10, %11 : vector<8x16x4xf32>
    %13 = vector.shape_cast %12 : vector<8x16x4xf32> to vector<128x4xf32>
    %14 = arith.truncf %13 : vector<128x4xf32> to vector<128x4xbf16>
    %c0_7 = arith.constant 0 : index
    %c0_8 = arith.constant 0 : index
    %15 = vector.load %arg6[%c0_7, %c0_8] : memref<4x8xbf16, #tpu.memory_space<vmem>>, vector<4x8xbf16>
    %cst_9 = arith.constant dense<0.000000e+00> : vector<128x8xf32>
    %16 = tpu.matmul %14, %15, %cst_9 {dimension_numbers = #tpu.dot_dimension_numbers<[1], [0], [0], [1], [0, 0, 1, 1], [], []>} : vector<128x4xbf16>, vector<4x8xbf16>, vector<128x8xf32> -> vector<128x8xf32>
    %c0_10 = arith.constant 0 : index
    %c0_11 = arith.constant 0 : index
    %c0_12 = arith.constant 0 : index
    %c0_13 = arith.constant 0 : index
    %17 = vector.load %arg3[%c0_10, %c0_11, %c0_12, %c0_13] : memref<1x8x16x4xbf16, #tpu.memory_space<vmem>>, vector<1x8x16x4xbf16>
    %18 = vector.shape_cast %17 : vector<1x8x16x4xbf16> to vector<8x16x4xbf16>
    %19 = vector.shape_cast %18 : vector<8x16x4xbf16> to vector<128x4xbf16>
    %c0_14 = arith.constant 0 : index
    %c0_15 = arith.constant 0 : index
    %20 = vector.load %arg7[%c0_14, %c0_15] : memref<4x8xbf16, #tpu.memory_space<vmem>>, vector<4x8xbf16>
    %cst_16 = arith.constant dense<0.000000e+00> : vector<128x8xf32>
    %21 = tpu.matmul %19, %20, %cst_16 {dimension_numbers = #tpu.dot_dimension_numbers<[1], [0], [0], [1], [0, 0, 1, 1], [], []>} : vector<128x4xbf16>, vector<4x8xbf16>, vector<128x8xf32> -> vector<128x8xf32>
    %22 = vector.shape_cast %16 : vector<128x8xf32> to vector<8x16x8xf32>
    %23 = arith.truncf %22 : vector<8x16x8xf32> to vector<8x16x8xbf16>
    %c0_17 = arith.constant 0 : index
    %c0_18 = arith.constant 0 : index
    %c0_19 = arith.constant 0 : index
    %c0_20 = arith.constant 0 : index
    %24 = vector.load %arg8[%c0_17, %c0_18, %c0_19, %c0_20] : memref<1x8x16x8xbf16, #tpu.memory_space<vmem>>, vector<1x8x16x8xbf16>
    %25 = vector.shape_cast %24 : vector<1x8x16x8xbf16> to vector<8x16x8xbf16>
    %26 = vector.shape_cast %23 : vector<8x16x8xbf16> to vector<1x8x16x8xbf16>
    tpu.vector_store %arg8[%c0_17, %c0_18, %c0_19, %c0_20], %26 {strides = array<i32>} : memref<1x8x16x8xbf16, #tpu.memory_space<vmem>>, vector<1x8x16x8xbf16>,
    %27 = vector.shape_cast %21 : vector<128x8xf32> to vector<8x16x8xf32>
    %28 = arith.truncf %27 : vector<8x16x8xf32> to vector<8x16x8xbf16>
    %c0_21 = arith.constant 0 : index
    %c0_22 = arith.constant 0 : index
    %c0_23 = arith.constant 0 : index
    %c0_24 = arith.constant 0 : index
    %29 = vector.load %arg9[%c0_21, %c0_22, %c0_23, %c0_24] : memref<1x8x16x8xbf16, #tpu.memory_space<vmem>>, vector<1x8x16x8xbf16>
    %30 = vector.shape_cast %29 : vector<1x8x16x8xbf16> to vector<8x16x8xbf16>
    %31 = vector.shape_cast %28 : vector<8x16x8xbf16> to vector<1x8x16x8xbf16>
    tpu.vector_store %arg9[%c0_21, %c0_22, %c0_23, %c0_24], %31 {strides = array<i32>} : memref<1x8x16x8xbf16, #tpu.memory_space<vmem>>, vector<1x8x16x8xbf16>,
    %cst_25 = arith.constant dense<0.000000e+00> : vector<8xf32>
    %32 = vector.multi_reduction <add>, %16, %cst_25 [0] : vector<128x8xf32> to vector<8xf32>
    %33 = vector.shape_cast %32 : vector<8xf32> to vector<1x8xf32>
    %34 = arith.mulf %16, %16 : vector<128x8xf32>
    %cst_26 = arith.constant dense<0.000000e+00> : vector<8xf32>
    %35 = vector.multi_reduction <add>, %34, %cst_26 [0] : vector<128x8xf32> to vector<8xf32>
    %36 = vector.shape_cast %35 : vector<8xf32> to vector<1x8xf32>
    %37 = tpu.iota {dimensions = array<i32: 0>} : vector<8x8xi32>
    %c0_i32 = arith.constant 0 : i32
    %38 = vector.broadcast %c0_i32 : i32 to vector<8x8xi32>
    %39 = arith.cmpi eq, %37, %38 : vector<8x8xi32>
    %c1_i32 = arith.constant 1 : i32
    %40 = vector.broadcast %c1_i32 : i32 to vector<8x8xi32>
    %41 = arith.cmpi eq, %37, %40 : vector<8x8xi32>
    %cst_27 = arith.constant 0.000000e+00 : f32
    %42 = vector.shape_cast %36 : vector<1x8xf32> to vector<1x8xf32>
    %43 = vector.broadcast %42 : vector<1x8xf32> to vector<8x8xf32>
    %44 = vector.broadcast %cst_27 : f32 to vector<8x8xf32>
    %45 = arith.select %41, %43, %44 : vector<8x8xi1>, vector<8x8xf32>
    %46 = vector.shape_cast %33 : vector<1x8xf32> to vector<1x8xf32>
    %47 = vector.broadcast %46 : vector<1x8xf32> to vector<8x8xf32>
    %48 = arith.select %39, %47, %45 : vector<8x8xi1>, vector<8x8xf32>
    %c0_28 = arith.constant 0 : index
    %c0_29 = arith.constant 0 : index
    %c0_30 = arith.constant 0 : index
    %49 = vector.load %arg10[%c0_28, %c0_29, %c0_30] : memref<1x8x8xf32, #tpu.memory_space<vmem>>, vector<1x8x8xf32>
    %50 = vector.shape_cast %49 : vector<1x8x8xf32> to vector<8x8xf32>
    %51 = vector.shape_cast %48 : vector<8x8xf32> to vector<1x8x8xf32>
    tpu.vector_store %arg10[%c0_28, %c0_29, %c0_30], %51 {strides = array<i32>} : memref<1x8x8xf32, #tpu.memory_space<vmem>>, vector<1x8x8xf32>,
    %cst_31 = arith.constant dense<0.000000e+00> : vector<8xf32>
    %52 = vector.multi_reduction <add>, %21, %cst_31 [0] : vector<128x8xf32> to vector<8xf32>
    %53 = vector.shape_cast %52 : vector<8xf32> to vector<1x8xf32>
    %54 = arith.mulf %21, %21 : vector<128x8xf32>
    %cst_32 = arith.constant dense<0.000000e+00> : vector<8xf32>
    %55 = vector.multi_reduction <add>, %54, %cst_32 [0] : vector<128x8xf32> to vector<8xf32>
    %56 = vector.shape_cast %55 : vector<8xf32> to vector<1x8xf32>
    %57 = tpu.iota {dimensions = array<i32: 0>} : vector<8x8xi32>
    %c0_i32_33 = arith.constant 0 : i32
    %58 = vector.broadcast %c0_i32_33 : i32 to vector<8x8xi32>
    %59 = arith.cmpi eq, %57, %58 : vector<8x8xi32>
    %c1_i32_34 = arith.constant 1 : i32
    %60 = vector.broadcast %c1_i32_34 : i32 to vector<8x8xi32>
    %61 = arith.cmpi eq, %57, %60 : vector<8x8xi32>
    %cst_35 = arith.constant 0.000000e+00 : f32
    %62 = vector.shape_cast %56 : vector<1x8xf32> to vector<1x8xf32>
    %63 = vector.broadcast %62 : vector<1x8xf32> to vector<8x8xf32>
    %64 = vector.broadcast %cst_35 : f32 to vector<8x8xf32>
    %65 = arith.select %61, %63, %64 : vector<8x8xi1>, vector<8x8xf32>
    %66 = vector.shape_cast %53 : vector<1x8xf32> to vector<1x8xf32>
    %67 = vector.broadcast %66 : vector<1x8xf32> to vector<8x8xf32>
    %68 = arith.select %59, %67, %65 : vector<8x8xi1>, vector<8x8xf32>
    %c0_36 = arith.constant 0 : index
    %c0_37 = arith.constant 0 : index
    %c0_38 = arith.constant 0 : index
    %69 = vector.load %arg11[%c0_36, %c0_37, %c0_38] : memref<1x8x8xf32, #tpu.memory_space<vmem>>, vector<1x8x8xf32>
    %70 = vector.shape_cast %69 : vector<1x8x8xf32> to vector<8x8xf32>
    %71 = vector.shape_cast %68 : vector<8x8xf32> to vector<1x8x8xf32>
    tpu.vector_store %arg11[%c0_36, %c0_37, %c0_38], %71 {strides = array<i32>} : memref<1x8x8xf32, #tpu.memory_space<vmem>>, vector<1x8x8xf32>,
    return
  }
  func.func @transform_0(%arg0: i32, %arg1: i32) -> (i32, i32, i32, i32) {
    %c0_i32 = arith.constant 0 : i32
    %c0_i32_0 = arith.constant 0 : i32
    %c0_i32_1 = arith.constant 0 : i32
    return %arg0, %arg1, %c0_i32, %c0_i32_0 : i32, i32, i32, i32
  }
  func.func @transform_1(%arg0: i32, %arg1: i32) -> (i32, i32, i32, i32) {
    %c0_i32 = arith.constant 0 : i32
    %c0_i32_0 = arith.constant 0 : i32
    %c0_i32_1 = arith.constant 0 : i32
    return %arg0, %arg1, %c0_i32, %c0_i32_0 : i32, i32, i32, i32
  }
  func.func @transform_2(%arg0: i32, %arg1: i32) -> (i32, i32) {
    %c0_i32 = arith.constant 0 : i32
    %c0_i32_0 = arith.constant 0 : i32
    %c0_i32_1 = arith.constant 0 : i32
    return %c0_i32, %c0_i32_0 : i32, i32
  }
  func.func @transform_3(%arg0: i32, %arg1: i32) -> (i32, i32) {
    %c0_i32 = arith.constant 0 : i32
    %c0_i32_0 = arith.constant 0 : i32
    %c0_i32_1 = arith.constant 0 : i32
    return %c0_i32, %c0_i32_0 : i32, i32
  }
  func.func @transform_4(%arg0: i32, %arg1: i32) -> (i32, i32) {
    %c0_i32 = arith.constant 0 : i32
    %c0_i32_0 = arith.constant 0 : i32
    %c0_i32_1 = arith.constant 0 : i32
    return %c0_i32, %c0_i32_0 : i32, i32
  }
  func.func @transform_5(%arg0: i32, %arg1: i32) -> (i32, i32) {
    %c0_i32 = arith.constant 0 : i32
    %c0_i32_0 = arith.constant 0 : i32
    %c0_i32_1 = arith.constant 0 : i32
    return %c0_i32, %c0_i32_0 : i32, i32
  }
  func.func @transform_6(%arg0: i32, %arg1: i32) -> (i32, i32, i32, i32) {
    %c0_i32 = arith.constant 0 : i32
    %c0_i32_0 = arith.constant 0 : i32
    %c0_i32_1 = arith.constant 0 : i32
    return %arg0, %arg1, %c0_i32, %c0_i32_0 : i32, i32, i32, i32
  }
  func.func @transform_7(%arg0: i32, %arg1: i32) -> (i32, i32, i32, i32) {
    %c0_i32 = arith.constant 0 : i32
    %c0_i32_0 = arith.constant 0 : i32
    %c0_i32_1 = arith.constant 0 : i32
    return %arg0, %arg1, %c0_i32, %c0_i32_0 : i32, i32, i32, i32
  }
  func.func @transform_8(%arg0: i32, %arg1: i32) -> (i32, i32, i32) {
    %c2_i32 = arith.constant 2 : i32
    %0 = arith.muli %arg0, %c2_i32 : i32
    %1 = arith.addi %0, %arg1 : i32
    %c0_i32 = arith.constant 0 : i32
    %c0_i32_0 = arith.constant 0 : i32
    %c0_i32_1 = arith.constant 0 : i32
    return %1, %c0_i32, %c0_i32_0 : i32, i32, i32
  }
  func.func @transform_9(%arg0: i32, %arg1: i32) -> (i32, i32, i32) {
    %c2_i32 = arith.constant 2 : i32
    %0 = arith.muli %arg0, %c2_i32 : i32
    %1 = arith.addi %0, %arg1 : i32
    %c0_i32 = arith.constant 0 : i32
    %c0_i32_0 = arith.constant 0 : i32
    %c0_i32_1 = arith.constant 0 : i32
    return %1, %c0_i32, %c0_i32_0 : i32, i32, i32
  }
}

module attributes {stable_mosaic.version = 11 : i64} {
  func.func @_finalize_kernel(%arg0: i32, %arg1: i32, %arg2: memref<1x8x16x8xbf16, #tpu.memory_space<vmem>>, %arg3: memref<1x8x16x8xbf16, #tpu.memory_space<vmem>>, %arg4: memref<1x8xf32, #tpu.memory_space<vmem>>, %arg5: memref<1x8xf32, #tpu.memory_space<vmem>>, %arg6: memref<1x8xf32, #tpu.memory_space<vmem>>, %arg7: memref<1x8xf32, #tpu.memory_space<vmem>>, %arg8: memref<1x8x16x8xf32, #tpu.memory_space<vmem>>) attributes {dimension_semantics = [#tpu.dimension_semantics<parallel>, #tpu.dimension_semantics<parallel>], iteration_bounds = array<i64: 2, 2>, scalar_prefetch = 0 : i64, scratch_operands = 0 : i64, tpu.core_type = #tpu.core_type<tc>, window_params = [{transform_indices = @transform_0, window_bounds = array<i64: 1, 8, 16, 8>}, {transform_indices = @transform_1, window_bounds = array<i64: 1, 8, 16, 8>}, {pipeline_mode = #tpu.pipeline_mode<synchronous>, transform_indices = @transform_2, window_bounds = array<i64: 1, 8>}, {pipeline_mode = #tpu.pipeline_mode<synchronous>, transform_indices = @transform_3, window_bounds = array<i64: 1, 8>}, {pipeline_mode = #tpu.pipeline_mode<synchronous>, transform_indices = @transform_4, window_bounds = array<i64: 1, 8>}, {pipeline_mode = #tpu.pipeline_mode<synchronous>, transform_indices = @transform_5, window_bounds = array<i64: 1, 8>}, {transform_indices = @transform_6, window_bounds = array<i64: 1, 8, 16, 8>}]} {
    %c0 = arith.constant 0 : index
    %c0_0 = arith.constant 0 : index
    %c0_1 = arith.constant 0 : index
    %c0_2 = arith.constant 0 : index
    %0 = vector.load %arg2[%c0, %c0_0, %c0_1, %c0_2] : memref<1x8x16x8xbf16, #tpu.memory_space<vmem>>, vector<1x8x16x8xbf16>
    %1 = vector.shape_cast %0 : vector<1x8x16x8xbf16> to vector<8x16x8xbf16>
    %c0_3 = arith.constant 0 : index
    %c0_4 = arith.constant 0 : index
    %2 = vector.load %arg4[%c0_3, %c0_4] : memref<1x8xf32, #tpu.memory_space<vmem>>, vector<1x8xf32>
    %3 = arith.extf %1 : vector<8x16x8xbf16> to vector<8x16x8xf32>
    %4 = vector.shape_cast %2 : vector<1x8xf32> to vector<1x1x8xf32>
    %5 = vector.broadcast %4 : vector<1x1x8xf32> to vector<8x16x8xf32>
    %6 = arith.mulf %3, %5 : vector<8x16x8xf32>
    %c0_5 = arith.constant 0 : index
    %c0_6 = arith.constant 0 : index
    %7 = vector.load %arg5[%c0_5, %c0_6] : memref<1x8xf32, #tpu.memory_space<vmem>>, vector<1x8xf32>
    %8 = vector.shape_cast %7 : vector<1x8xf32> to vector<1x1x8xf32>
    %9 = vector.broadcast %8 : vector<1x1x8xf32> to vector<8x16x8xf32>
    %10 = arith.addf %6, %9 : vector<8x16x8xf32>
    %c0_7 = arith.constant 0 : index
    %c0_8 = arith.constant 0 : index
    %c0_9 = arith.constant 0 : index
    %c0_10 = arith.constant 0 : index
    %11 = vector.load %arg3[%c0_7, %c0_8, %c0_9, %c0_10] : memref<1x8x16x8xbf16, #tpu.memory_space<vmem>>, vector<1x8x16x8xbf16>
    %12 = vector.shape_cast %11 : vector<1x8x16x8xbf16> to vector<8x16x8xbf16>
    %c0_11 = arith.constant 0 : index
    %c0_12 = arith.constant 0 : index
    %13 = vector.load %arg6[%c0_11, %c0_12] : memref<1x8xf32, #tpu.memory_space<vmem>>, vector<1x8xf32>
    %14 = arith.extf %12 : vector<8x16x8xbf16> to vector<8x16x8xf32>
    %15 = vector.shape_cast %13 : vector<1x8xf32> to vector<1x1x8xf32>
    %16 = vector.broadcast %15 : vector<1x1x8xf32> to vector<8x16x8xf32>
    %17 = arith.mulf %14, %16 : vector<8x16x8xf32>
    %18 = arith.addf %10, %17 : vector<8x16x8xf32>
    %c0_13 = arith.constant 0 : index
    %c0_14 = arith.constant 0 : index
    %19 = vector.load %arg7[%c0_13, %c0_14] : memref<1x8xf32, #tpu.memory_space<vmem>>, vector<1x8xf32>
    %20 = vector.shape_cast %19 : vector<1x8xf32> to vector<1x1x8xf32>
    %21 = vector.broadcast %20 : vector<1x1x8xf32> to vector<8x16x8xf32>
    %22 = arith.addf %18, %21 : vector<8x16x8xf32>
    %cst = arith.constant 0.000000e+00 : f32
    %23 = vector.broadcast %cst : f32 to vector<8x16x8xf32>
    %24 = arith.maximumf %22, %23 : vector<8x16x8xf32>
    %c0_15 = arith.constant 0 : index
    %c0_16 = arith.constant 0 : index
    %c0_17 = arith.constant 0 : index
    %c0_18 = arith.constant 0 : index
    %25 = vector.load %arg8[%c0_15, %c0_16, %c0_17, %c0_18] : memref<1x8x16x8xf32, #tpu.memory_space<vmem>>, vector<1x8x16x8xf32>
    %26 = vector.shape_cast %25 : vector<1x8x16x8xf32> to vector<8x16x8xf32>
    %27 = vector.shape_cast %24 : vector<8x16x8xf32> to vector<1x8x16x8xf32>
    tpu.vector_store %arg8[%c0_15, %c0_16, %c0_17, %c0_18], %27 {strides = array<i32>} : memref<1x8x16x8xf32, #tpu.memory_space<vmem>>, vector<1x8x16x8xf32>,
    return
  }
  func.func @transform_0(%arg0: i32, %arg1: i32) -> (i32, i32, i32, i32) {
    %c0_i32 = arith.constant 0 : i32
    %c0_i32_0 = arith.constant 0 : i32
    %c0_i32_1 = arith.constant 0 : i32
    return %arg0, %arg1, %c0_i32, %c0_i32_0 : i32, i32, i32, i32
  }
  func.func @transform_1(%arg0: i32, %arg1: i32) -> (i32, i32, i32, i32) {
    %c0_i32 = arith.constant 0 : i32
    %c0_i32_0 = arith.constant 0 : i32
    %c0_i32_1 = arith.constant 0 : i32
    return %arg0, %arg1, %c0_i32, %c0_i32_0 : i32, i32, i32, i32
  }
  func.func @transform_2(%arg0: i32, %arg1: i32) -> (i32, i32) {
    %c0_i32 = arith.constant 0 : i32
    %c0_i32_0 = arith.constant 0 : i32
    %c0_i32_1 = arith.constant 0 : i32
    return %c0_i32, %c0_i32_0 : i32, i32
  }
  func.func @transform_3(%arg0: i32, %arg1: i32) -> (i32, i32) {
    %c0_i32 = arith.constant 0 : i32
    %c0_i32_0 = arith.constant 0 : i32
    %c0_i32_1 = arith.constant 0 : i32
    return %c0_i32, %c0_i32_0 : i32, i32
  }
  func.func @transform_4(%arg0: i32, %arg1: i32) -> (i32, i32) {
    %c0_i32 = arith.constant 0 : i32
    %c0_i32_0 = arith.constant 0 : i32
    %c0_i32_1 = arith.constant 0 : i32
    return %c0_i32, %c0_i32_0 : i32, i32
  }
  func.func @transform_5(%arg0: i32, %arg1: i32) -> (i32, i32) {
    %c0_i32 = arith.constant 0 : i32
    %c0_i32_0 = arith.constant 0 : i32
    %c0_i32_1 = arith.constant 0 : i32
    return %c0_i32, %c0_i32_0 : i32, i32
  }
  func.func @transform_6(%arg0: i32, %arg1: i32) -> (i32, i32, i32, i32) {
    %c0_i32 = arith.constant 0 : i32
    %c0_i32_0 = arith.constant 0 : i32
    %c0_i32_1 = arith.constant 0 : i32
    return %arg0, %arg1, %c0_i32, %c0_i32_0 : i32, i32, i32, i32
  }
}

</mosaic_0001>

<llo_original>
// kernel: bottleneck_psp_forward.4
$region0: #{bottleneck_psp_forward.4}
  #allocation0 [shape = 'u32[]', space=smem, size = 0x4, offset = 0x4, fixed_abs, tag = 'smem constant byte address 0x4 - core index']
  #allocation1 [shape = 'u32[72,128]{1,0:T(1,128)}', space=vmem, size = 0x9000, scoped, tag = 'internal scratch']
  %s0 = inlined_call_operand.vmem [shape: bf16[512,4], index: 0, kind: input, shape index: {}]
  %s1 = inlined_call_operand.vmem [shape: bf16[4,4], index: 1, kind: input, shape index: {}]
  %s2 = inlined_call_operand.vmem [shape: bf16[512,4], index: 2, kind: output, shape index: {0}]
  %s3 = inlined_call_operand.vmem [shape: f32[4,8,4], index: 3, kind: output, shape index: {1}]
  %4 = xla_tuple %s2, %s3
  %s5 = sld [smem:[#allocation0]]
  $region49: #{bottleneck_psp_forward.4} parent=0
    _
  %s7 = ssub.s32 1, %s5
  %s8 = scalar_select 0, %s7, %s5
  loop: start=0, step=1, limit=6
  $region2: #{bottleneck_psp_forward.4} parent=0 // loop_pre_header
    _
  $region3: #{bottleneck_psp_forward.4} parent=0 // loop_header
    %s10 = sphi 0, %s14
    %p11 = scmp.ge.s32.totalorder %s10, 6
    %s20 = sphi 0, %s22
    %s23 = sphi 0, %s20
    %s24 = sphi 0, %s23
    %s40 = sphi 0, %s24
    %s44 = sphi 0, %s44
    %s46 = sphi 0, %s44
    %s47 = sphi 0, %s46
    %s61 = sphi 0, %s47
    %s67 = sphi 0, %s69
    %s70 = sphi 0, %s67
    %s71 = sphi 0, %s70
    %s87 = sphi 0, %s71
    %s93 = sphi 0, %s95
    %s96 = sphi 0, %s93
    %s97 = sphi 0, %s96
    %s113 = sphi 0, %s97
  $region4: #{bottleneck_psp_forward.4} parent=0 // loop_header_branch
    %13 = sbr.rel (%p11) target = $region8
  $region5: #{bottleneck_psp_forward.4} parent=0 // loop_body
    %s15 = ssub.s32 %s10, 1
    %s16 = ssub.s32 %s10, 2
    %s17 = sadd.s32 %s10, 1
    %s18 = ssub.s32 %s10, %s17
    %p19 = scmp.eq.s32.totalorder %s18, 0
    %s21 = sadd.s32 %s20, 1
    %s22 = scalar_select %p19, %s20, %s21
    %p25 = pneg %p19
    %p26 = scmp.eq.s32.totalorder %s10, 3
    %p27 = por %p25, %p26
    %p28 = scmp.ne.s32.totalorder %s20, %s23
    %p29 = scmp.eq.s32.totalorder %s10, 0
    %p30 = por %p28, %p29
    %p31 = scmp.ne.s32.totalorder %s20, %s23
    %p32 = scmp.eq.s32.totalorder %s15, 3
    %p33 = por %p31, %p32
    %p34 = scmp.ne.s32.totalorder %s23, %s24
    %p35 = scmp.eq.s32.totalorder %s15, 0
    %p36 = por %p34, %p35
    %p37 = scmp.ne.s32.totalorder %s23, %s24
    %p38 = scmp.eq.s32.totalorder %s16, 3
    %p39 = por %p37, %p38
    %p41 = scmp.ne.s32.totalorder %s24, %s40
    %p42 = scmp.eq.s32.totalorder %s16, 0
    %p43 = por %p41, %p42
    %s45 = sadd.s32 %s44, 1
    %p48 = scmp.eq.s32.totalorder %s10, 3
    %p49 = scmp.ne.s32.totalorder %s44, %s46
    %p50 = scmp.eq.s32.totalorder %s10, 0
    %p51 = por %p49, %p50
    %p52 = scmp.ne.s32.totalorder %s44, %s46
    %p53 = scmp.eq.s32.totalorder %s15, 3
    %p54 = por %p52, %p53
    %p55 = scmp.ne.s32.totalorder %s46, %s47
    %p56 = scmp.eq.s32.totalorder %s15, 0
    %p57 = por %p55, %p56
    %p58 = scmp.ne.s32.totalorder %s46, %s47
    %p59 = scmp.eq.s32.totalorder %s16, 3
    %p60 = por %p58, %p59
    %p62 = scmp.ne.s32.totalorder %s47, %s61
    %p63 = scmp.eq.s32.totalorder %s16, 0
    %p64 = por %p62, %p63
    %s65 = ssub.s32 %s10, %s17
    %p66 = scmp.eq.s32.totalorder %s65, 0
    %s68 = sadd.s32 %s67, 1
    %s69 = scalar_select %p66, %s67, %s68
    %p72 = pneg %p66
    %p73 = scmp.eq.s32.totalorder %s10, 3
    %p74 = por %p72, %p73
    %p75 = scmp.ne.s32.totalorder %s67, %s70
    %p76 = scmp.eq.s32.totalorder %s10, 0
    %p77 = por %p75, %p76
    %p78 = scmp.ne.s32.totalorder %s67, %s70
    %p79 = scmp.eq.s32.totalorder %s15, 3
    %p80 = por %p78, %p79
    %p81 = scmp.ne.s32.totalorder %s70, %s71
    %p82 = scmp.eq.s32.totalorder %s15, 0
    %p83 = por %p81, %p82
    %p84 = scmp.ne.s32.totalorder %s70, %s71
    %p85 = scmp.eq.s32.totalorder %s16, 3
    %p86 = por %p84, %p85
    %p88 = scmp.ne.s32.totalorder %s71, %s87
    %p89 = scmp.eq.s32.totalorder %s16, 0
    %p90 = por %p88, %p89
    %s91 = ssub.s32 %s10, %s17
    %p92 = scmp.eq.s32.totalorder %s91, 0
    %s94 = sadd.s32 %s93, 1
    %s95 = scalar_select %p92, %s93, %s94
    %p98 = pneg %p92
    %p99 = scmp.eq.s32.totalorder %s10, 3
    %p100 = por %p98, %p99
    %p101 = scmp.ne.s32.totalorder %s93, %s96
    %p102 = scmp.eq.s32.totalorder %s10, 0
    %p103 = por %p101, %p102
    %p104 = scmp.ne.s32.totalorder %s93, %s96
    %p105 = scmp.eq.s32.totalorder %s15, 3
    %p106 = por %p104, %p105
    %p107 = scmp.ne.s32.totalorder %s96, %s97
    %p108 = scmp.eq.s32.totalorder %s15, 0
    %p109 = por %p107, %p108
    %p110 = scmp.ne.s32.totalorder %s96, %s97
    %p111 = scmp.eq.s32.totalorder %s16, 3
    %p112 = por %p110, %p111
    %p114 = scmp.ne.s32.totalorder %s97, %s113
    %p115 = scmp.eq.s32.totalorder %s16, 0
    %p116 = por %p114, %p115
    %p117 = scmp.le.s32.totalorder 1, %s10
    %p118 = scmp.lt.s32.totalorder %s10, 5
    %p119 = pnand %p117, %p118
    %p120 = pneg %p119
    // Predicated region
    $region9: #{bottleneck_psp_forward.4} parent=5 // pred_check
      _
    $region10: #{bottleneck_psp_forward.4} parent=5 // pred_check_branch
      %122 = sbr.rel (%p119) target = $region12
    $region11: #{bottleneck_psp_forward.4} parent=5 // pred_region
      %s123 = ssub.s32 %s10, 1
      // Predicated region
      $region13: #{bottleneck_psp_forward.4} parent=11 // pred_check
        %p124 = pneg %p57
      $region14: #{bottleneck_psp_forward.4} parent=11 // pred_check_branch
        %126 = sbr.rel (%p124) target = $region16
      $region15: #{bottleneck_psp_forward.4} parent=11 // pred_region
        _
      $region16: #{bottleneck_psp_forward.4} parent=11 // pred_fallthru
        _
    $region12: #{bottleneck_psp_forward.4} parent=5 // pred_fallthru
      _
    %p127 = scmp.lt.s32.totalorder %s10, 4
    // Predicated region
    $region17: #{bottleneck_psp_forward.4} parent=5 // pred_check
      %p128 = pneg %p127
    $region18: #{bottleneck_psp_forward.4} parent=5 // pred_check_branch
      %130 = sbr.rel (%p128) target = $region20
    $region19: #{bottleneck_psp_forward.4} parent=5 // pred_region
      // Predicated region
      $region21: #{bottleneck_psp_forward.4} parent=19 // pred_check
        %p131 = pneg %p30
      $region22: #{bottleneck_psp_forward.4} parent=19 // pred_check_branch
        %133 = sbr.rel (%p131) target = $region24
      $region23: #{bottleneck_psp_forward.4} parent=19 // pred_region
        %s134 = smul.u32 16, %s10
        %p135 = scmp.lt.s32.totalorder %s134, 63
        %s136 = scalar_select %p135, %s134, 63
        %s137 = smul.addr %s136, 4
        %s138 = scalar_lea.vmem %s0, %s137
        %s139 = smul.u32 16, %s10
      $region24: #{bottleneck_psp_forward.4} parent=19 // pred_fallthru
        _
    $region20: #{bottleneck_psp_forward.4} parent=5 // pred_fallthru
      _
    %p140 = scmp.le.s32.totalorder 1, %s10
    %p141 = scmp.lt.s32.totalorder %s10, 5
    %p142 = pnand %p140, %p141
    %p143 = pneg %p142
    // Predicated region
    $region25: #{bottleneck_psp_forward.4} parent=5 // pred_check
      _
    $region26: #{bottleneck_psp_forward.4} parent=5 // pred_check_branch
      %145 = sbr.rel (%p142) target = $region28
    $region27: #{bottleneck_psp_forward.4} parent=5 // pred_region
      %s146 = ssub.s32 %s10, 1
      %s147 = smul.u32 16, %s15
      %p148 = scmp.lt.s32.totalorder %s147, 63
      %s149 = scalar_select %p148, %s147, 63
      %s150 = smul.addr %s149, 4
      %s151 = scalar_lea.vmem %s0, %s150
      %p152 = pneg %p36
      %p153 = pneg %p33
      %p154 = pneg %p57
      %p155 = pneg %p54
      %p156 = pneg %p83
      %p157 = pneg %p80
      %s158 = smul.u32 16, %s15
      %p159 = scmp.lt.s32.totalorder %s158, 63
      %s160 = scalar_select %p159, %s158, 63
      %s161 = smul.addr %s160, 4
      %s162 = scalar_lea.vmem %s2, %s161
      %p163 = pneg %p109
      %p164 = pneg %p106
      %p165 = scmp.lt.s32.totalorder %s15, 3
      %s166 = scalar_select %p165, %s15, 3
      %s167 = smul.addr %s166, 8
      %s168 = scalar_lea.vmem %s3, %s167
      %s169 = smul.u32 16, %s15
      %p170 = scmp.lt.s32.totalorder %s169, 63
      %s171 = scalar_select %p170, %s169, 63
      %s172 = smul.addr %s171, 4
      %s173 = scalar_lea.vmem %s0, %s172
      %s174 = smul.u32 16, %s15
      %s175 = smul.u32 16, %s15
      %p176 = scmp.lt.s32.totalorder %s175, 63
      %s177 = scalar_select %p176, %s175, 63
      %s178 = smul.addr %s177, 4
      %s179 = scalar_lea.vmem %s2, %s178
      %s180 = smul.u32 16, %s15
      %p181 = scmp.lt.s32.totalorder %s15, 3
      %s182 = scalar_select %p181, %s15, 3
      %s183 = smul.addr %s182, 8
      %s184 = scalar_lea.vmem %s3, %s183
      %v186 = vld [vmem:[%s173] sm:$0xf]
      %v187 = vld [vmem:[%s173 + $0x4] sm:$0xf]
      %v188 = vld [vmem:[%s173 + $0x8] sm:$0xf]
      %v189 = vld [vmem:[%s173 + $0xc] sm:$0xf]
      %v190 = vld [vmem:[%s173 + $0x10] sm:$0xf]
      %v191 = vld [vmem:[%s173 + $0x14] sm:$0xf]
      %v192 = vld [vmem:[%s173 + $0x18] sm:$0xf]
      %v193 = vld [vmem:[%s173 + $0x1c] sm:$0xf]
      %v194 = vld [vmem:[%s173 + $0x20] sm:$0xf]
      %v195 = vld [vmem:[%s173 + $0x24] sm:$0xf]
      %v196 = vld [vmem:[%s173 + $0x28] sm:$0xf]
      %v197 = vld [vmem:[%s173 + $0x2c] sm:$0xf]
      %v198 = vld [vmem:[%s173 + $0x30] sm:$0xf]
      %v199 = vld [vmem:[%s173 + $0x34] sm:$0xf]
      %v200 = vld [vmem:[%s173 + $0x38] sm:$0xf]
      %v201 = vld [vmem:[%s173 + $0x3c] sm:$0xf]
      %v202 = vld [vmem:[%s1] sm:$0x3]
      %v219 = vunpack.c.l.b16 %v186
      %v220 = vunpack.c.l.b16 %v187
      %v221 = vunpack.c.l.b16 %v188
      %v222 = vunpack.c.l.b16 %v189
      %v223 = vunpack.c.l.b16 %v190
      %v224 = vunpack.c.l.b16 %v191
      %v225 = vunpack.c.l.b16 %v192
      %v226 = vunpack.c.l.b16 %v193
      %v227 = vunpack.c.l.b16 %v194
      %v228 = vunpack.c.l.b16 %v195
      %v229 = vunpack.c.l.b16 %v196
      %v230 = vunpack.c.l.b16 %v197
      %v231 = vunpack.c.l.b16 %v198
      %v232 = vunpack.c.l.b16 %v199
      %v233 = vunpack.c.l.b16 %v200
      %v234 = vunpack.c.l.b16 %v201
      %v235 = vpack.c.b16 %v220, %v219
      %v236 = vpack.c.b16 %v222, %v221
      %v237 = vpack.c.b16 %v224, %v223
      %v238 = vpack.c.b16 %v226, %v225
      %v239 = vpack.c.b16 %v228, %v227
      %v240 = vpack.c.b16 %v230, %v229
      %v241 = vpack.c.b16 %v232, %v231
      %v242 = vpack.c.b16 %v234, %v233
      %vm243 = vcmask 31744
      %v245 = vsel %vm243, %v235, 0
      %v248 = vsel %vm243, %v236, 0
      %v251 = vsel %vm243, %v237, 0
      %v254 = vsel %vm243, %v238, 0
      %v257 = vsel %vm243, %v239, 0
      %v260 = vsel %vm243, %v240, 0
      %v263 = vsel %vm243, %v241, 0
      %v266 = vsel %vm243, %v242, 0
      %vm268 = vcmask 1041408
      %v270 = vsel %vm268, %v202, 0
      %272 = vmatpush.bf16.msra.mxu0 0
      %273 = vmatpush.bf16.msra.mxu0 0
      %274 = vmatpush.bf16.msra.mxu0 0
      %275 = vmatpush.bf16.msra.mxu0 0
      %276 = vmatpush.bf16.msra.mxu0 0
      %277 = vmatpush.bf16.msra.mxu0 0
      %278 = vmatpush.bf16.msra.mxu0 0
      %279 = vmatpush.bf16.msra.mxu0 %v270
      %280 = vmatmul.bf16.gmra.mxu0 %v245
      %v281 = vpop.f32.mrf.mxu0
      %v282 = vadd.f32 0.0, %v281
      %v283 = vpop.f32.mrf.mxu0
      %v284 = vadd.f32 0.0, %v283
      %285 = vmatmul.bf16.gmra.mxu0 %v248
      %v286 = vpop.f32.mrf.mxu0
      %v287 = vadd.f32 0.0, %v286
      %v288 = vpop.f32.mrf.mxu0
      %v289 = vadd.f32 0.0, %v288
      %290 = vmatmul.bf16.gmra.mxu0 %v251
      %v291 = vpop.f32.mrf.mxu0
      %v292 = vadd.f32 0.0, %v291
      %v293 = vpop.f32.mrf.mxu0
      %v294 = vadd.f32 0.0, %v293
      %295 = vmatmul.bf16.gmra.mxu0 %v254
      %v296 = vpop.f32.mrf.mxu0
      %v297 = vadd.f32 0.0, %v296
      %v298 = vpop.f32.mrf.mxu0
      %v299 = vadd.f32 0.0, %v298
      %300 = vmatmul.bf16.gmra.mxu0 %v257
      %v301 = vpop.f32.mrf.mxu0
      %v302 = vadd.f32 0.0, %v301
      %v303 = vpop.f32.mrf.mxu0
      %v304 = vadd.f32 0.0, %v303
      %305 = vmatmul.bf16.gmra.mxu0 %v260
      %v306 = vpop.f32.mrf.mxu0
      %v307 = vadd.f32 0.0, %v306
      %v308 = vpop.f32.mrf.mxu0
      %v309 = vadd.f32 0.0, %v308
      %310 = vmatmul.bf16.gmra.mxu0 %v263
      %v311 = vpop.f32.mrf.mxu0
      %v312 = vadd.f32 0.0, %v311
      %v313 = vpop.f32.mrf.mxu0
      %v314 = vadd.f32 0.0, %v313
      %315 = vmatmul.bf16.gmra.mxu0 %v266
      %v316 = vpop.f32.mrf.mxu0
      %v317 = vadd.f32 0.0, %v316
      %v318 = vpop.f32.mrf.mxu0
      %v319 = vadd.f32 0.0, %v318
      %320 = vdwg.mxu0
      %v321 = vpack.c.bf16 %v282, %v282
      %v322 = vpack.c.bf16 %v284, %v284
      %v323 = vpack.c.bf16 %v287, %v287
      %v324 = vpack.c.bf16 %v289, %v289
      %v325 = vpack.c.bf16 %v292, %v292
      %v326 = vpack.c.bf16 %v294, %v294
      %v327 = vpack.c.bf16 %v297, %v297
      %v328 = vpack.c.bf16 %v299, %v299
      %v329 = vpack.c.bf16 %v302, %v302
      %v330 = vpack.c.bf16 %v304, %v304
      %v331 = vpack.c.bf16 %v307, %v307
      %v332 = vpack.c.bf16 %v309, %v309
      %v333 = vpack.c.bf16 %v312, %v312
      %v334 = vpack.c.bf16 %v314, %v314
      %v335 = vpack.c.bf16 %v317, %v317
      %v336 = vpack.c.bf16 %v319, %v319
      %vm337 = vcmask 27648
      %338 = vst.msk [vmem:[%s179] sm:$0xf] %vm337, %v321
      %339 = vst.msk [vmem:[%s179 + $0x4] sm:$0xf] %vm337, %v322
      %340 = vst.msk [vmem:[%s179 + $0x8] sm:$0xf] %vm337, %v323
      %341 = vst.msk [vmem:[%s179 + $0xc] sm:$0xf] %vm337, %v324
      %342 = vst.msk [vmem:[%s179 + $0x10] sm:$0xf] %vm337, %v325
      %343 = vst.msk [vmem:[%s179 + $0x14] sm:$0xf] %vm337, %v326
      %344 = vst.msk [vmem:[%s179 + $0x18] sm:$0xf] %vm337, %v327
      %345 = vst.msk [vmem:[%s179 + $0x1c] sm:$0xf] %vm337, %v328
      %346 = vst.msk [vmem:[%s179 + $0x20] sm:$0xf] %vm337, %v329
      %347 = vst.msk [vmem:[%s179 + $0x24] sm:$0xf] %vm337, %v330
      %348 = vst.msk [vmem:[%s179 + $0x28] sm:$0xf] %vm337, %v331
      %349 = vst.msk [vmem:[%s179 + $0x2c] sm:$0xf] %vm337, %v332
      %350 = vst.msk [vmem:[%s179 + $0x30] sm:$0xf] %vm337, %v333
      %351 = vst.msk [vmem:[%s179 + $0x34] sm:$0xf] %vm337, %v334
      %352 = vst.msk [vmem:[%s179 + $0x38] sm:$0xf] %vm337, %v335
      %353 = vst.msk [vmem:[%s179 + $0x3c] sm:$0xf] %vm337, %v336
      %v354 = vsel %vm243, %v282, 0.0
      %v355 = vsel %vm243, %v284, 0.0
      %v356 = vadd.f32 %v354, %v355
      %v357 = vsel %vm243, %v287, 0.0
      %v358 = vadd.f32 %v356, %v357
      %v359 = vsel %vm243, %v289, 0.0
      %v360 = vadd.f32 %v358, %v359
      %v361 = vsel %vm243, %v292, 0.0
      %v362 = vadd.f32 %v360, %v361
      %v363 = vsel %vm243, %v294, 0.0
      %v364 = vadd.f32 %v362, %v363
      %v365 = vsel %vm243, %v297, 0.0
      %v366 = vadd.f32 %v364, %v365
      %v367 = vsel %vm243, %v299, 0.0
      %v368 = vadd.f32 %v366, %v367
      %v369 = vsel %vm243, %v302, 0.0
      %v370 = vadd.f32 %v368, %v369
      %v371 = vsel %vm243, %v304, 0.0
      %v372 = vadd.f32 %v370, %v371
      %v373 = vsel %vm243, %v307, 0.0
      %v374 = vadd.f32 %v372, %v373
      %v375 = vsel %vm243, %v309, 0.0
      %v376 = vadd.f32 %v374, %v375
      %v377 = vsel %vm243, %v312, 0.0
      %v378 = vadd.f32 %v376, %v377
      %v379 = vsel %vm243, %v314, 0.0
      %v380 = vadd.f32 %v378, %v379
      %v381 = vsel %vm243, %v317, 0.0
      %v382 = vadd.f32 %v380, %v381
      %v383 = vsel %vm243, %v319, 0.0
      %v384 = vadd.f32 %v382, %v383
      %v385 = vrot.slane %v384, 4
      %v386 = vadd.f32 %v384, %v385
      %v387 = vrot.slane %v386, 2
      %v388 = vadd.f32 %v386, %v387
      %v389 = vrot.slane %v388, 1
      %v390 = vadd.f32 %v388, %v389
      %v391 = vmul.f32 %v282, %v282
      %v392 = vmul.f32 %v284, %v284
      %v393 = vmul.f32 %v287, %v287
      %v394 = vmul.f32 %v289, %v289
      %v395 = vmul.f32 %v292, %v292
      %v396 = vmul.f32 %v294, %v294
      %v397 = vmul.f32 %v297, %v297
      %v398 = vmul.f32 %v299, %v299
      %v399 = vmul.f32 %v302, %v302
      %v400 = vmul.f32 %v304, %v304
      %v401 = vmul.f32 %v307, %v307
      %v402 = vmul.f32 %v309, %v309
      %v403 = vmul.f32 %v312, %v312
      %v404 = vmul.f32 %v314, %v314
      %v405 = vmul.f32 %v317, %v317
      %v406 = vmul.f32 %v319, %v319
      %v407 = vsel %vm243, %v391, 0.0
      %v408 = vsel %vm243, %v392, 0.0
      %v409 = vadd.f32 %v407, %v408
      %v410 = vsel %vm243, %v393, 0.0
      %v411 = vadd.f32 %v409, %v410
      %v412 = vsel %vm243, %v394, 0.0
      %v413 = vadd.f32 %v411, %v412
      %v414 = vsel %vm243, %v395, 0.0
      %v415 = vadd.f32 %v413, %v414
      %v416 = vsel %vm243, %v396, 0.0
      %v417 = vadd.f32 %v415, %v416
      %v418 = vsel %vm243, %v397, 0.0
      %v419 = vadd.f32 %v417, %v418
      %v420 = vsel %vm243, %v398, 0.0
      %v421 = vadd.f32 %v419, %v420
      %v422 = vsel %vm243, %v399, 0.0
      %v423 = vadd.f32 %v421, %v422
      %v424 = vsel %vm243, %v400, 0.0
      %v425 = vadd.f32 %v423, %v424
      %v426 = vsel %vm243, %v401, 0.0
      %v427 = vadd.f32 %v425, %v426
      %v428 = vsel %vm243, %v402, 0.0
      %v429 = vadd.f32 %v427, %v428
      %v430 = vsel %vm243, %v403, 0.0
      %v431 = vadd.f32 %v429, %v430
      %v432 = vsel %vm243, %v404, 0.0
      %v433 = vadd.f32 %v431, %v432
      %v434 = vsel %vm243, %v405, 0.0
      %v435 = vadd.f32 %v433, %v434
      %v436 = vsel %vm243, %v406, 0.0
      %v437 = vadd.f32 %v435, %v436
      %v438 = vrot.slane %v437, 4
      %v439 = vadd.f32 %v437, %v438
      %v440 = vrot.slane %v439, 2
      %v441 = vadd.f32 %v439, %v440
      %v442 = vrot.slane %v441, 1
      %v443 = vadd.f32 %v441, %v442
      %v444 = vlaneseq
      %v445 = vshrl.u32 %v444, 7
      %vm446 = vcmp.eq.s32.totalorder %v445, 0
      %vm447 = vcmp.eq.s32.totalorder %v445, 1
      %v448 = vsel %vm447, %v443, 0.0
      %v449 = vsel %vm446, %v390, %v448
      %450 = vst.msk [vmem:[%s184] sm:$0xff] %vm243, %v449
      %s451 = smul.u32 16, %s15
      %p452 = scmp.lt.s32.totalorder %s451, 63
      %s453 = scalar_select %p452, %s451, 63
      %s454 = smul.addr %s453, 4
      %s455 = scalar_lea.vmem %s2, %s454
      %p456 = scmp.lt.s32.totalorder %s15, 3
      %s457 = scalar_select %p456, %s15, 3
      %s458 = smul.addr %s457, 8
      %s459 = scalar_lea.vmem %s3, %s458
      // Predicated region
      $region29: #{bottleneck_psp_forward.4} parent=27 // pred_check
        %p460 = pneg %p80
      $region30: #{bottleneck_psp_forward.4} parent=27 // pred_check_branch
        %462 = sbr.rel (%p460) target = $region32
      $region31: #{bottleneck_psp_forward.4} parent=27 // pred_region
        %s463 = smul.u32 16, %s15
      $region32: #{bottleneck_psp_forward.4} parent=27 // pred_fallthru
        _
      // Predicated region
      $region33: #{bottleneck_psp_forward.4} parent=27 // pred_check
        %p464 = pneg %p106
      $region34: #{bottleneck_psp_forward.4} parent=27 // pred_check_branch
        %466 = sbr.rel (%p464) target = $region36
      $region35: #{bottleneck_psp_forward.4} parent=27 // pred_region
        _
      $region36: #{bottleneck_psp_forward.4} parent=27 // pred_fallthru
        _
    $region28: #{bottleneck_psp_forward.4} parent=5 // pred_fallthru
      _
    %p467 = scmp.le.s32.totalorder 2, %s10
    // Predicated region
    $region37: #{bottleneck_psp_forward.4} parent=5 // pred_check
      %p468 = pneg %p467
    $region38: #{bottleneck_psp_forward.4} parent=5 // pred_check_branch
      %470 = sbr.rel (%p468) target = $region40
    $region39: #{bottleneck_psp_forward.4} parent=5 // pred_region
      %s471 = ssub.s32 %s10, 2
      // Predicated region
      $region41: #{bottleneck_psp_forward.4} parent=39 // pred_check
        %p472 = pneg %p86
      $region42: #{bottleneck_psp_forward.4} parent=39 // pred_check_branch
        %474 = sbr.rel (%p472) target = $region44
      $region43: #{bottleneck_psp_forward.4} parent=39 // pred_region
        %s475 = smul.u32 16, %s16
        %p476 = scmp.lt.s32.totalorder %s475, 63
        %s477 = scalar_select %p476, %s475, 63
        %s478 = smul.addr %s477, 4
        %s479 = scalar_lea.vmem %s2, %s478
      $region44: #{bottleneck_psp_forward.4} parent=39 // pred_fallthru
        _
      // Predicated region
      $region45: #{bottleneck_psp_forward.4} parent=39 // pred_check
        %p480 = pneg %p112
      $region46: #{bottleneck_psp_forward.4} parent=39 // pred_check_branch
        %482 = sbr.rel (%p480) target = $region48
      $region47: #{bottleneck_psp_forward.4} parent=39 // pred_region
        %p483 = scmp.lt.s32.totalorder %s16, 3
        %s484 = scalar_select %p483, %s16, 3
        %s485 = smul.addr %s484, 8
        %s486 = scalar_lea.vmem %s3, %s485
      $region48: #{bottleneck_psp_forward.4} parent=39 // pred_fallthru
        _
    $region40: #{bottleneck_psp_forward.4} parent=5 // pred_fallthru
      _
  $region6: #{bottleneck_psp_forward.4} parent=0 // loop_footer
    %s14 = sadd.s32 1, %s10
  $region7: #{bottleneck_psp_forward.4} parent=0 // loop_footer_branch
    %9 = sbr.rel target = $region3
  $region8: #{bottleneck_psp_forward.4} parent=0 // loop_exit
    _

// kernel: bottleneck_psp_forward.6
$region0: #{bottleneck_psp_forward.6}
  #allocation0 [shape = 'u32[]', space=smem, size = 0x4, offset = 0x4, fixed_abs, tag = 'smem constant byte address 0x4 - core index']
  #allocation1 [shape = 'u32[72,128]{1,0:T(1,128)}', space=vmem, size = 0x9000, scoped, tag = 'internal scratch']
  %s0 = inlined_call_operand.vmem [shape: bf16[2,16,16,4], index: 0, kind: input, shape index: {}]
  %s1 = inlined_call_operand.vmem [shape: bf16[2,16,16,4], index: 1, kind: input, shape index: {}]
  %s2 = inlined_call_operand.vmem [shape: f32[1,4], index: 2, kind: input, shape index: {}]
  %s3 = inlined_call_operand.vmem [shape: f32[1,4], index: 3, kind: input, shape index: {}]
  %s4 = inlined_call_operand.vmem [shape: bf16[4,8], index: 4, kind: input, shape index: {}]
  %s5 = inlined_call_operand.vmem [shape: bf16[4,8], index: 5, kind: input, shape index: {}]
  %s6 = inlined_call_operand.vmem [shape: bf16[2,16,16,8], index: 6, kind: output, shape index: {0}]
  %s7 = inlined_call_operand.vmem [shape: bf16[2,16,16,8], index: 7, kind: output, shape index: {1}]
  %s8 = inlined_call_operand.vmem [shape: f32[4,8,8], index: 8, kind: output, shape index: {2}]
  %s9 = inlined_call_operand.vmem [shape: f32[4,8,8], index: 9, kind: output, shape index: {3}]
  %10 = xla_tuple %s6, %s7, %s8, %s9
  %s11 = sld [smem:[#allocation0]]
  $region81: #{bottleneck_psp_forward.6} parent=0
    _
  %s13 = ssub.s32 1, %s11
  %s14 = scalar_select 0, %s13, %s11
  loop: start=0, step=1, limit=6
  $region2: #{bottleneck_psp_forward.6} parent=0 // loop_pre_header
    _
  $region3: #{bottleneck_psp_forward.6} parent=0 // loop_header
    %s16 = sphi 0, %s20
    %p17 = scmp.ge.s32.totalorder %s16, 6
    %s23 = sphi 0, %s35
    %s24 = sphi 0, %s31
    %s25 = sphi 0, %s23
    %s26 = sphi 0, %s24
    %s27 = sphi 0, %s25
    %s28 = sphi 0, %s26
    %s40 = sphi 0, %s42
    %s43 = sphi 0, %s40
    %s44 = sphi 0, %s43
    %s60 = sphi 0, %s44
    %s68 = sphi 0, %s70
    %s71 = sphi 0, %s68
    %s72 = sphi 0, %s71
    %s88 = sphi 0, %s72
    %s92 = sphi 0, %s92
    %s94 = sphi 0, %s92
    %s95 = sphi 0, %s94
    %s109 = sphi 0, %s95
    %s113 = sphi 0, %s113
    %s115 = sphi 0, %s113
    %s116 = sphi 0, %s115
    %s130 = sphi 0, %s116
    %s134 = sphi 0, %s134
    %s136 = sphi 0, %s134
    %s137 = sphi 0, %s136
    %s151 = sphi 0, %s137
    %s155 = sphi 0, %s155
    %s157 = sphi 0, %s155
    %s158 = sphi 0, %s157
    %s172 = sphi 0, %s158
    %s180 = sphi 0, %s182
    %s183 = sphi 0, %s180
    %s184 = sphi 0, %s183
    %s200 = sphi 0, %s184
    %s208 = sphi 0, %s210
    %s211 = sphi 0, %s208
    %s212 = sphi 0, %s211
    %s228 = sphi 0, %s212
    %s238 = sphi 0, %s240
    %s241 = sphi 0, %s238
    %s242 = sphi 0, %s241
    %s258 = sphi 0, %s242
    %s268 = sphi 0, %s270
    %s271 = sphi 0, %s268
    %s272 = sphi 0, %s271
    %s288 = sphi 0, %s272
  $region4: #{bottleneck_psp_forward.6} parent=0 // loop_header_branch
    %19 = sbr.rel (%p17) target = $region8
  $region5: #{bottleneck_psp_forward.6} parent=0 // loop_body
    %s21 = ssub.s32 %s16, 1
    %s22 = ssub.s32 %s16, 2
    %s29 = sadd.s32 1, %s24
    %p30 = scmp.ge.s32.totalorder %s29, 2
    %s31 = scalar_select %p30, 0, %s29
    %s32 = sadd.s32 1, %s23
    %s33 = scalar_select %p30, %s32, %s23
    %p34 = scmp.ge.s32.totalorder %s33, 2
    %s35 = scalar_select %p34, 0, %s33
    %s36 = ssub.s32 %s23, %s35
    %s37 = ssub.s32 %s24, %s31
    %s38 = sor.u32 %s36, %s37
    %p39 = scmp.eq.s32.totalorder %s38, 0
    %s41 = sadd.s32 %s40, 1
    %s42 = scalar_select %p39, %s40, %s41
    %p45 = pneg %p39
    %p46 = scmp.eq.s32.totalorder %s16, 3
    %p47 = por %p45, %p46
    %p48 = scmp.ne.s32.totalorder %s40, %s43
    %p49 = scmp.eq.s32.totalorder %s16, 0
    %p50 = por %p48, %p49
    %p51 = scmp.ne.s32.totalorder %s40, %s43
    %p52 = scmp.eq.s32.totalorder %s21, 3
    %p53 = por %p51, %p52
    %p54 = scmp.ne.s32.totalorder %s43, %s44
    %p55 = scmp.eq.s32.totalorder %s21, 0
    %p56 = por %p54, %p55
    %p57 = scmp.ne.s32.totalorder %s43, %s44
    %p58 = scmp.eq.s32.totalorder %s22, 3
    %p59 = por %p57, %p58
    %p61 = scmp.ne.s32.totalorder %s44, %s60
    %p62 = scmp.eq.s32.totalorder %s22, 0
    %p63 = por %p61, %p62
    %s64 = ssub.s32 %s23, %s35
    %s65 = ssub.s32 %s24, %s31
    %s66 = sor.u32 %s64, %s65
    %p67 = scmp.eq.s32.totalorder %s66, 0
    %s69 = sadd.s32 %s68, 1
    %s70 = scalar_select %p67, %s68, %s69
    %p73 = pneg %p67
    %p74 = scmp.eq.s32.totalorder %s16, 3
    %p75 = por %p73, %p74
    %p76 = scmp.ne.s32.totalorder %s68, %s71
    %p77 = scmp.eq.s32.totalorder %s16, 0
    %p78 = por %p76, %p77
    %p79 = scmp.ne.s32.totalorder %s68, %s71
    %p80 = scmp.eq.s32.totalorder %s21, 3
    %p81 = por %p79, %p80
    %p82 = scmp.ne.s32.totalorder %s71, %s72
    %p83 = scmp.eq.s32.totalorder %s21, 0
    %p84 = por %p82, %p83
    %p85 = scmp.ne.s32.totalorder %s71, %s72
    %p86 = scmp.eq.s32.totalorder %s22, 3
    %p87 = por %p85, %p86
    %p89 = scmp.ne.s32.totalorder %s72, %s88
    %p90 = scmp.eq.s32.totalorder %s22, 0
    %p91 = por %p89, %p90
    %s93 = sadd.s32 %s92, 1
    %p96 = scmp.eq.s32.totalorder %s16, 3
    %p97 = scmp.ne.s32.totalorder %s92, %s94
    %p98 = scmp.eq.s32.totalorder %s16, 0
    %p99 = por %p97, %p98
    %p100 = scmp.ne.s32.totalorder %s92, %s94
    %p101 = scmp.eq.s32.totalorder %s21, 3
    %p102 = por %p100, %p101
    %p103 = scmp.ne.s32.totalorder %s94, %s95
    %p104 = scmp.eq.s32.totalorder %s21, 0
    %p105 = por %p103, %p104
    %p106 = scmp.ne.s32.totalorder %s94, %s95
    %p107 = scmp.eq.s32.totalorder %s22, 3
    %p108 = por %p106, %p107
    %p110 = scmp.ne.s32.totalorder %s95, %s109
    %p111 = scmp.eq.s32.totalorder %s22, 0
    %p112 = por %p110, %p111
    %s114 = sadd.s32 %s113, 1
    %p117 = scmp.eq.s32.totalorder %s16, 3
    %p118 = scmp.ne.s32.totalorder %s113, %s115
    %p119 = scmp.eq.s32.totalorder %s16, 0
    %p120 = por %p118, %p119
    %p121 = scmp.ne.s32.totalorder %s113, %s115
    %p122 = scmp.eq.s32.totalorder %s21, 3
    %p123 = por %p121, %p122
    %p124 = scmp.ne.s32.totalorder %s115, %s116
    %p125 = scmp.eq.s32.totalorder %s21, 0
    %p126 = por %p124, %p125
    %p127 = scmp.ne.s32.totalorder %s115, %s116
    %p128 = scmp.eq.s32.totalorder %s22, 3
    %p129 = por %p127, %p128
    %p131 = scmp.ne.s32.totalorder %s116, %s130
    %p132 = scmp.eq.s32.totalorder %s22, 0
    %p133 = por %p131, %p132
    %s135 = sadd.s32 %s134, 1
    %p138 = scmp.eq.s32.totalorder %s16, 3
    %p139 = scmp.ne.s32.totalorder %s134, %s136
    %p140 = scmp.eq.s32.totalorder %s16, 0
    %p141 = por %p139, %p140
    %p142 = scmp.ne.s32.totalorder %s134, %s136
    %p143 = scmp.eq.s32.totalorder %s21, 3
    %p144 = por %p142, %p143
    %p145 = scmp.ne.s32.totalorder %s136, %s137
    %p146 = scmp.eq.s32.totalorder %s21, 0
    %p147 = por %p145, %p146
    %p148 = scmp.ne.s32.totalorder %s136, %s137
    %p149 = scmp.eq.s32.totalorder %s22, 3
    %p150 = por %p148, %p149
    %p152 = scmp.ne.s32.totalorder %s137, %s151
    %p153 = scmp.eq.s32.totalorder %s22, 0
    %p154 = por %p152, %p153
    %s156 = sadd.s32 %s155, 1
    %p159 = scmp.eq.s32.totalorder %s16, 3
    %p160 = scmp.ne.s32.totalorder %s155, %s157
    %p161 = scmp.eq.s32.totalorder %s16, 0
    %p162 = por %p160, %p161
    %p163 = scmp.ne.s32.totalorder %s155, %s157
    %p164 = scmp.eq.s32.totalorder %s21, 3
    %p165 = por %p163, %p164
    %p166 = scmp.ne.s32.totalorder %s157, %s158
    %p167 = scmp.eq.s32.totalorder %s21, 0
    %p168 = por %p166, %p167
    %p169 = scmp.ne.s32.totalorder %s157, %s158
    %p170 = scmp.eq.s32.totalorder %s22, 3
    %p171 = por %p169, %p170
    %p173 = scmp.ne.s32.totalorder %s158, %s172
    %p174 = scmp.eq.s32.totalorder %s22, 0
    %p175 = por %p173, %p174
    %s176 = ssub.s32 %s23, %s35
    %s177 = ssub.s32 %s24, %s31
    %s178 = sor.u32 %s176, %s177
    %p179 = scmp.eq.s32.totalorder %s178, 0
    %s181 = sadd.s32 %s180, 1
    %s182 = scalar_select %p179, %s180, %s181
    %p185 = pneg %p179
    %p186 = scmp.eq.s32.totalorder %s16, 3
    %p187 = por %p185, %p186
    %p188 = scmp.ne.s32.totalorder %s180, %s183
    %p189 = scmp.eq.s32.totalorder %s16, 0
    %p190 = por %p188, %p189
    %p191 = scmp.ne.s32.totalorder %s180, %s183
    %p192 = scmp.eq.s32.totalorder %s21, 3
    %p193 = por %p191, %p192
    %p194 = scmp.ne.s32.totalorder %s183, %s184
    %p195 = scmp.eq.s32.totalorder %s21, 0
    %p196 = por %p194, %p195
    %p197 = scmp.ne.s32.totalorder %s183, %s184
    %p198 = scmp.eq.s32.totalorder %s22, 3
    %p199 = por %p197, %p198
    %p201 = scmp.ne.s32.totalorder %s184, %s200
    %p202 = scmp.eq.s32.totalorder %s22, 0
    %p203 = por %p201, %p202
    %s204 = ssub.s32 %s23, %s35
    %s205 = ssub.s32 %s24, %s31
    %s206 = sor.u32 %s204, %s205
    %p207 = scmp.eq.s32.totalorder %s206, 0
    %s209 = sadd.s32 %s208, 1
    %s210 = scalar_select %p207, %s208, %s209
    %p213 = pneg %p207
    %p214 = scmp.eq.s32.totalorder %s16, 3
    %p215 = por %p213, %p214
    %p216 = scmp.ne.s32.totalorder %s208, %s211
    %p217 = scmp.eq.s32.totalorder %s16, 0
    %p218 = por %p216, %p217
    %p219 = scmp.ne.s32.totalorder %s208, %s211
    %p220 = scmp.eq.s32.totalorder %s21, 3
    %p221 = por %p219, %p220
    %p222 = scmp.ne.s32.totalorder %s211, %s212
    %p223 = scmp.eq.s32.totalorder %s21, 0
    %p224 = por %p222, %p223
    %p225 = scmp.ne.s32.totalorder %s211, %s212
    %p226 = scmp.eq.s32.totalorder %s22, 3
    %p227 = por %p225, %p226
    %p229 = scmp.ne.s32.totalorder %s212, %s228
    %p230 = scmp.eq.s32.totalorder %s22, 0
    %p231 = por %p229, %p230
    %s232 = smul.u32 %s23, 2
    %s233 = sadd.s32 %s232, %s24
    %s234 = smul.u32 %s35, 2
    %s235 = sadd.s32 %s234, %s31
    %s236 = ssub.s32 %s233, %s235
    %p237 = scmp.eq.s32.totalorder %s236, 0
    %s239 = sadd.s32 %s238, 1
    %s240 = scalar_select %p237, %s238, %s239
    %p243 = pneg %p237
    %p244 = scmp.eq.s32.totalorder %s16, 3
    %p245 = por %p243, %p244
    %p246 = scmp.ne.s32.totalorder %s238, %s241
    %p247 = scmp.eq.s32.totalorder %s16, 0
    %p248 = por %p246, %p247
    %p249 = scmp.ne.s32.totalorder %s238, %s241
    %p250 = scmp.eq.s32.totalorder %s21, 3
    %p251 = por %p249, %p250
    %p252 = scmp.ne.s32.totalorder %s241, %s242
    %p253 = scmp.eq.s32.totalorder %s21, 0
    %p254 = por %p252, %p253
    %p255 = scmp.ne.s32.totalorder %s241, %s242
    %p256 = scmp.eq.s32.totalorder %s22, 3
    %p257 = por %p255, %p256
    %p259 = scmp.ne.s32.totalorder %s242, %s258
    %p260 = scmp.eq.s32.totalorder %s22, 0
    %p261 = por %p259, %p260
    %s262 = smul.u32 %s23, 2
    %s263 = sadd.s32 %s262, %s24
    %s264 = smul.u32 %s35, 2
    %s265 = sadd.s32 %s264, %s31
    %s266 = ssub.s32 %s263, %s265
    %p267 = scmp.eq.s32.totalorder %s266, 0
    %s269 = sadd.s32 %s268, 1
    %s270 = scalar_select %p267, %s268, %s269
    %p273 = pneg %p267
    %p274 = scmp.eq.s32.totalorder %s16, 3
    %p275 = por %p273, %p274
    %p276 = scmp.ne.s32.totalorder %s268, %s271
    %p277 = scmp.eq.s32.totalorder %s16, 0
    %p278 = por %p276, %p277
    %p279 = scmp.ne.s32.totalorder %s268, %s271
    %p280 = scmp.eq.s32.totalorder %s21, 3
    %p281 = por %p279, %p280
    %p282 = scmp.ne.s32.totalorder %s271, %s272
    %p283 = scmp.eq.s32.totalorder %s21, 0
    %p284 = por %p282, %p283
    %p285 = scmp.ne.s32.totalorder %s271, %s272
    %p286 = scmp.eq.s32.totalorder %s22, 3
    %p287 = por %p285, %p286
    %p289 = scmp.ne.s32.totalorder %s272, %s288
    %p290 = scmp.eq.s32.totalorder %s22, 0
    %p291 = por %p289, %p290
    %p292 = scmp.le.s32.totalorder 1, %s16
    %p293 = scmp.lt.s32.totalorder %s16, 5
    %p294 = pnand %p292, %p293
    %p295 = pneg %p294
    // Predicated region
    $region9: #{bottleneck_psp_forward.6} parent=5 // pred_check
      _
    $region10: #{bottleneck_psp_forward.6} parent=5 // pred_check_branch
      %297 = sbr.rel (%p294) target = $region12
    $region11: #{bottleneck_psp_forward.6} parent=5 // pred_region
      %s298 = ssub.s32 %s16, 1
      // Predicated region
      $region13: #{bottleneck_psp_forward.6} parent=11 // pred_check
        %p299 = pneg %p105
      $region14: #{bottleneck_psp_forward.6} parent=11 // pred_check_branch
        %301 = sbr.rel (%p299) target = $region16
      $region15: #{bottleneck_psp_forward.6} parent=11 // pred_region
        _
      $region16: #{bottleneck_psp_forward.6} parent=11 // pred_fallthru
        _
      // Predicated region
      $region17: #{bottleneck_psp_forward.6} parent=11 // pred_check
        %p302 = pneg %p126
      $region18: #{bottleneck_psp_forward.6} parent=11 // pred_check_branch
        %304 = sbr.rel (%p302) target = $region20
      $region19: #{bottleneck_psp_forward.6} parent=11 // pred_region
        _
      $region20: #{bottleneck_psp_forward.6} parent=11 // pred_fallthru
        _
      // Predicated region
      $region21: #{bottleneck_psp_forward.6} parent=11 // pred_check
        %p305 = pneg %p147
      $region22: #{bottleneck_psp_forward.6} parent=11 // pred_check_branch
        %307 = sbr.rel (%p305) target = $region24
      $region23: #{bottleneck_psp_forward.6} parent=11 // pred_region
        _
      $region24: #{bottleneck_psp_forward.6} parent=11 // pred_fallthru
        _
      // Predicated region
      $region25: #{bottleneck_psp_forward.6} parent=11 // pred_check
        %p308 = pneg %p168
      $region26: #{bottleneck_psp_forward.6} parent=11 // pred_check_branch
        %310 = sbr.rel (%p308) target = $region28
      $region27: #{bottleneck_psp_forward.6} parent=11 // pred_region
        _
      $region28: #{bottleneck_psp_forward.6} parent=11 // pred_fallthru
        _
    $region12: #{bottleneck_psp_forward.6} parent=5 // pred_fallthru
      _
    %p311 = scmp.lt.s32.totalorder %s16, 4
    // Predicated region
    $region29: #{bottleneck_psp_forward.6} parent=5 // pred_check
      %p312 = pneg %p311
    $region30: #{bottleneck_psp_forward.6} parent=5 // pred_check_branch
      %314 = sbr.rel (%p312) target = $region32
    $region31: #{bottleneck_psp_forward.6} parent=5 // pred_region
      // Predicated region
      $region33: #{bottleneck_psp_forward.6} parent=31 // pred_check
        %p315 = pneg %p50
      $region34: #{bottleneck_psp_forward.6} parent=31 // pred_check_branch
        %317 = sbr.rel (%p315) target = $region36
      $region35: #{bottleneck_psp_forward.6} parent=31 // pred_region
        %s318 = smul.u32 8, %s24
        %p319 = scmp.lt.s32.totalorder %s23, 1
        %s320 = scalar_select %p319, %s23, 1
        %p321 = scmp.lt.s32.totalorder %s318, 15
        %s322 = scalar_select %p321, %s318, 15
        %s323 = smul.addr %s322, 2
        %s324 = smul.addr %s320, 32
        %s325 = sadd.s32 %s323, %s324
        %s326 = smul.addr %s325, 4
        %s327 = scalar_lea.vmem %s0, %s326
        %s328 = smul.u32 8, %s24
      $region36: #{bottleneck_psp_forward.6} parent=31 // pred_fallthru
        _
      // Predicated region
      $region37: #{bottleneck_psp_forward.6} parent=31 // pred_check
        %p329 = pneg %p78
      $region38: #{bottleneck_psp_forward.6} parent=31 // pred_check_branch
        %331 = sbr.rel (%p329) target = $region40
      $region39: #{bottleneck_psp_forward.6} parent=31 // pred_region
        %s332 = smul.u32 8, %s24
        %p333 = scmp.lt.s32.totalorder %s23, 1
        %s334 = scalar_select %p333, %s23, 1
        %p335 = scmp.lt.s32.totalorder %s332, 15
        %s336 = scalar_select %p335, %s332, 15
        %s337 = smul.addr %s336, 2
        %s338 = smul.addr %s334, 32
        %s339 = sadd.s32 %s337, %s338
        %s340 = smul.addr %s339, 4
        %s341 = scalar_lea.vmem %s1, %s340
        %s342 = smul.u32 8, %s24
      $region40: #{bottleneck_psp_forward.6} parent=31 // pred_fallthru
        _
    $region32: #{bottleneck_psp_forward.6} parent=5 // pred_fallthru
      _
    %p343 = scmp.le.s32.totalorder 1, %s16
    %p344 = scmp.lt.s32.totalorder %s16, 5
    %p345 = pnand %p343, %p344
    %p346 = pneg %p345
    // Predicated region
    $region41: #{bottleneck_psp_forward.6} parent=5 // pred_check
      _
    $region42: #{bottleneck_psp_forward.6} parent=5 // pred_check_branch
      %348 = sbr.rel (%p345) target = $region44
    $region43: #{bottleneck_psp_forward.6} parent=5 // pred_region
      %s349 = ssub.s32 %s16, 1
      %s350 = smul.u32 8, %s26
      %p351 = scmp.lt.s32.totalorder %s25, 1
      %s352 = scalar_select %p351, %s25, 1
      %p353 = scmp.lt.s32.totalorder %s350, 15
      %s354 = scalar_select %p353, %s350, 15
      %s355 = smul.addr %s354, 2
      %s356 = smul.addr %s352, 32
      %s357 = sadd.s32 %s355, %s356
      %s358 = smul.addr %s357, 4
      %s359 = scalar_lea.vmem %s0, %s358
      %p360 = pneg %p56
      %p361 = pneg %p53
      %s362 = smul.u32 8, %s26
      %p363 = scmp.lt.s32.totalorder %s25, 1
      %s364 = scalar_select %p363, %s25, 1
      %p365 = scmp.lt.s32.totalorder %s362, 15
      %s366 = scalar_select %p365, %s362, 15
      %s367 = smul.addr %s366, 2
      %s368 = smul.addr %s364, 32
      %s369 = sadd.s32 %s367, %s368
      %s370 = smul.addr %s369, 4
      %s371 = scalar_lea.vmem %s1, %s370
      %p372 = pneg %p84
      %p373 = pneg %p81
      %p374 = pneg %p105
      %p375 = pneg %p102
      %p376 = pneg %p126
      %p377 = pneg %p123
      %p378 = pneg %p147
      %p379 = pneg %p144
      %p380 = pneg %p168
      %p381 = pneg %p165
      %p382 = pneg %p196
      %p383 = pneg %p193
      %s384 = smul.u32 8, %s26
      %p385 = scmp.lt.s32.totalorder %s25, 1
      %s386 = scalar_select %p385, %s25, 1
      %p387 = scmp.lt.s32.totalorder %s384, 15
      %s388 = scalar_select %p387, %s384, 15
      %s389 = smul.addr %s388, 2
      %s390 = smul.addr %s386, 32
      %s391 = sadd.s32 %s389, %s390
      %s392 = smul.addr %s391, 4
      %s393 = scalar_lea.vmem %s6, %s392
      %p394 = pneg %p224
      %p395 = pneg %p221
      %s396 = smul.u32 8, %s26
      %p397 = scmp.lt.s32.totalorder %s25, 1
      %s398 = scalar_select %p397, %s25, 1
      %p399 = scmp.lt.s32.totalorder %s396, 15
      %s400 = scalar_select %p399, %s396, 15
      %s401 = smul.addr %s400, 2
      %s402 = smul.addr %s398, 32
      %s403 = sadd.s32 %s401, %s402
      %s404 = smul.addr %s403, 4
      %s405 = scalar_lea.vmem %s7, %s404
      %p406 = pneg %p254
      %p407 = pneg %p251
      %s408 = smul.u32 %s25, 2
      %s409 = sadd.s32 %s408, %s26
      %p410 = scmp.lt.s32.totalorder %s409, 3
      %s411 = scalar_select %p410, %s409, 3
      %s412 = smul.addr %s411, 8
      %s413 = scalar_lea.vmem %s8, %s412
      %p414 = pneg %p284
      %p415 = pneg %p281
      %s416 = smul.u32 %s25, 2
      %s417 = sadd.s32 %s416, %s26
      %p418 = scmp.lt.s32.totalorder %s417, 3
      %s419 = scalar_select %p418, %s417, 3
      %s420 = smul.addr %s419, 8
      %s421 = scalar_lea.vmem %s9, %s420
      %s422 = smul.u32 8, %s26
      %p423 = scmp.lt.s32.totalorder %s25, 1
      %s424 = scalar_select %p423, %s25, 1
      %p425 = scmp.lt.s32.totalorder %s422, 15
      %s426 = scalar_select %p425, %s422, 15
      %s427 = smul.addr %s426, 2
      %s428 = smul.addr %s424, 32
      %s429 = sadd.s32 %s427, %s428
      %s430 = smul.addr %s429, 4
      %s431 = scalar_lea.vmem %s0, %s430
      %s432 = smul.u32 8, %s26
      %s433 = smul.u32 8, %s26
      %p434 = scmp.lt.s32.totalorder %s25, 1
      %s435 = scalar_select %p434, %s25, 1
      %p436 = scmp.lt.s32.totalorder %s433, 15
      %s437 = scalar_select %p436, %s433, 15
      %s438 = smul.addr %s437, 2
      %s439 = smul.addr %s435, 32
      %s440 = sadd.s32 %s438, %s439
      %s441 = smul.addr %s440, 4
      %s442 = scalar_lea.vmem %s1, %s441
      %s443 = smul.u32 8, %s26
      %s444 = smul.u32 8, %s26
      %p445 = scmp.lt.s32.totalorder %s25, 1
      %s446 = scalar_select %p445, %s25, 1
      %p447 = scmp.lt.s32.totalorder %s444, 15
      %s448 = scalar_select %p447, %s444, 15
      %s449 = smul.addr %s448, 2
      %s450 = smul.addr %s446, 32
      %s451 = sadd.s32 %s449, %s450
      %s452 = smul.addr %s451, 4
      %s453 = scalar_lea.vmem %s6, %s452
      %s454 = smul.u32 8, %s26
      %s455 = smul.u32 8, %s26
      %p456 = scmp.lt.s32.totalorder %s25, 1
      %s457 = scalar_select %p456, %s25, 1
      %p458 = scmp.lt.s32.totalorder %s455, 15
      %s459 = scalar_select %p458, %s455, 15
      %s460 = smul.addr %s459, 2
      %s461 = smul.addr %s457, 32
      %s462 = sadd.s32 %s460, %s461
      %s463 = smul.addr %s462, 4
      %s464 = scalar_lea.vmem %s7, %s463
      %s465 = smul.u32 8, %s26
      %s466 = smul.u32 %s25, 2
      %s467 = sadd.s32 %s466, %s26
      %p468 = scmp.lt.s32.totalorder %s467, 3
      %s469 = scalar_select %p468, %s467, 3
      %s470 = smul.addr %s469, 8
      %s471 = scalar_lea.vmem %s8, %s470
      %s472 = smul.u32 %s25, 2
      %s473 = sadd.s32 %s472, %s26
      %s474 = smul.u32 %s25, 2
      %s475 = sadd.s32 %s474, %s26
      %p476 = scmp.lt.s32.totalorder %s475, 3
      %s477 = scalar_select %p476, %s475, 3
      %s478 = smul.addr %s477, 8
      %s479 = scalar_lea.vmem %s9, %s478
      %s480 = smul.u32 %s25, 2
      %s481 = sadd.s32 %s480, %s26
      %v483 = vld [vmem:[%s431] sm:$0xf]
      %v484 = vld [vmem:[%s431 + $0x4] sm:$0xf]
      %v485 = vld [vmem:[%s431 + $0x8] sm:$0xf]
      %v486 = vld [vmem:[%s431 + $0xc] sm:$0xf]
      %v487 = vld [vmem:[%s431 + $0x10] sm:$0xf]
      %v488 = vld [vmem:[%s431 + $0x14] sm:$0xf]
      %v489 = vld [vmem:[%s431 + $0x18] sm:$0xf]
      %v490 = vld [vmem:[%s431 + $0x1c] sm:$0xf]
      %v491 = vld [vmem:[%s431 + $0x20] sm:$0xf]
      %v492 = vld [vmem:[%s431 + $0x24] sm:$0xf]
      %v493 = vld [vmem:[%s431 + $0x28] sm:$0xf]
      %v494 = vld [vmem:[%s431 + $0x2c] sm:$0xf]
      %v495 = vld [vmem:[%s431 + $0x30] sm:$0xf]
      %v496 = vld [vmem:[%s431 + $0x34] sm:$0xf]
      %v497 = vld [vmem:[%s431 + $0x38] sm:$0xf]
      %v498 = vld [vmem:[%s431 + $0x3c] sm:$0xf]
      %v499 = vld [vmem:[%s2] sm:$0x1]
      %v500 = vunpack.c.l.bf16 %v483
      %v501 = vunpack.c.l.bf16 %v484
      %v502 = vunpack.c.l.bf16 %v485
      %v503 = vunpack.c.l.bf16 %v486
      %v504 = vunpack.c.l.bf16 %v487
      %v505 = vunpack.c.l.bf16 %v488
      %v506 = vunpack.c.l.bf16 %v489
      %v507 = vunpack.c.l.bf16 %v490
      %v508 = vunpack.c.l.bf16 %v491
      %v509 = vunpack.c.l.bf16 %v492
      %v510 = vunpack.c.l.bf16 %v493
      %v511 = vunpack.c.l.bf16 %v494
      %v512 = vunpack.c.l.bf16 %v495
      %v513 = vunpack.c.l.bf16 %v496
      %v514 = vunpack.c.l.bf16 %v497
      %v515 = vunpack.c.l.bf16 %v498
      %v517 = vperm.slane %v499, 0
      %v519 = vmul.f32 %v500, %v517
      %v520 = vmul.f32 %v501, %v517
      %v521 = vmul.f32 %v502, %v517
      %v522 = vmul.f32 %v503, %v517
      %v523 = vmul.f32 %v504, %v517
      %v524 = vmul.f32 %v505, %v517
      %v525 = vmul.f32 %v506, %v517
      %v526 = vmul.f32 %v507, %v517
      %v527 = vmul.f32 %v508, %v517
      %v528 = vmul.f32 %v509, %v517
      %v529 = vmul.f32 %v510, %v517
      %v530 = vmul.f32 %v511, %v517
      %v531 = vmul.f32 %v512, %v517
      %v532 = vmul.f32 %v513, %v517
      %v533 = vmul.f32 %v514, %v517
      %v534 = vmul.f32 %v515, %v517
      %v535 = vld [vmem:[%s3] sm:$0x1]
      %v537 = vperm.slane %v535, 0
      %v539 = vadd.f32 %v519, %v537
      %v540 = vadd.f32 %v520, %v537
      %v541 = vadd.f32 %v521, %v537
      %v542 = vadd.f32 %v522, %v537
      %v543 = vadd.f32 %v523, %v537
      %v544 = vadd.f32 %v524, %v537
      %v545 = vadd.f32 %v525, %v537
      %v546 = vadd.f32 %v526, %v537
      %v547 = vadd.f32 %v527, %v537
      %v548 = vadd.f32 %v528, %v537
      %v549 = vadd.f32 %v529, %v537
      %v550 = vadd.f32 %v530, %v537
      %v551 = vadd.f32 %v531, %v537
      %v552 = vadd.f32 %v532, %v537
      %v553 = vadd.f32 %v533, %v537
      %v554 = vadd.f32 %v534, %v537
      %v555 = vmax.f32 %v539, 0.0
      %v556 = vmax.f32 %v540, 0.0
      %v557 = vmax.f32 %v541, 0.0
      %v558 = vmax.f32 %v542, 0.0
      %v559 = vmax.f32 %v543, 0.0
      %v560 = vmax.f32 %v544, 0.0
      %v561 = vmax.f32 %v545, 0.0
      %v562 = vmax.f32 %v546, 0.0
      %v563 = vmax.f32 %v547, 0.0
      %v564 = vmax.f32 %v548, 0.0
      %v565 = vmax.f32 %v549, 0.0
      %v566 = vmax.f32 %v550, 0.0
      %v567 = vmax.f32 %v551, 0.0
      %v568 = vmax.f32 %v552, 0.0
      %v569 = vmax.f32 %v553, 0.0
      %v570 = vmax.f32 %v554, 0.0
      %v571 = vpack.c.bf16 %v556, %v555
      %v572 = vpack.c.bf16 %v558, %v557
      %v573 = vpack.c.bf16 %v560, %v559
      %v574 = vpack.c.bf16 %v562, %v561
      %v575 = vpack.c.bf16 %v564, %v563
      %v576 = vpack.c.bf16 %v566, %v565
      %v577 = vpack.c.bf16 %v568, %v567
      %v578 = vpack.c.bf16 %v570, %v569
      %v579 = vld [vmem:[%s4] sm:$0x3]
      %vm580 = vcmask 31744
      %v582 = vsel %vm580, %v571, 0
      %v585 = vsel %vm580, %v572, 0
      %v588 = vsel %vm580, %v573, 0
      %v591 = vsel %vm580, %v574, 0
      %v594 = vsel %vm580, %v575, 0
      %v597 = vsel %vm580, %v576, 0
      %v600 = vsel %vm580, %v577, 0
      %v603 = vsel %vm580, %v578, 0
      %vm605 = vcmask 1041408
      %v607 = vsel %vm605, %v579, 0
      %609 = vmatpush.bf16.msra.mxu0 0
      %610 = vmatpush.bf16.msra.mxu0 0
      %611 = vmatpush.bf16.msra.mxu0 0
      %612 = vmatpush.bf16.msra.mxu0 0
      %613 = vmatpush.bf16.msra.mxu0 0
      %614 = vmatpush.bf16.msra.mxu0 0
      %615 = vmatpush.bf16.msra.mxu0 0
      %616 = vmatpush.bf16.msra.mxu0 %v607
      %617 = vmatmul.bf16.gmra.mxu0 %v582
      %v618 = vpop.f32.mrf.mxu0
      %v619 = vadd.f32 0.0, %v618
      %v620 = vpop.f32.mrf.mxu0
      %v621 = vadd.f32 0.0, %v620
      %622 = vmatmul.bf16.gmra.mxu0 %v585
      %v623 = vpop.f32.mrf.mxu0
      %v624 = vadd.f32 0.0, %v623
      %v625 = vpop.f32.mrf.mxu0
      %v626 = vadd.f32 0.0, %v625
      %627 = vmatmul.bf16.gmra.mxu0 %v588
      %v628 = vpop.f32.mrf.mxu0
      %v629 = vadd.f32 0.0, %v628
      %v630 = vpop.f32.mrf.mxu0
      %v631 = vadd.f32 0.0, %v630
      %632 = vmatmul.bf16.gmra.mxu0 %v591
      %v633 = vpop.f32.mrf.mxu0
      %v634 = vadd.f32 0.0, %v633
      %v635 = vpop.f32.mrf.mxu0
      %v636 = vadd.f32 0.0, %v635
      %637 = vmatmul.bf16.gmra.mxu0 %v594
      %v638 = vpop.f32.mrf.mxu0
      %v639 = vadd.f32 0.0, %v638
      %v640 = vpop.f32.mrf.mxu0
      %v641 = vadd.f32 0.0, %v640
      %642 = vmatmul.bf16.gmra.mxu0 %v597
      %v643 = vpop.f32.mrf.mxu0
      %v644 = vadd.f32 0.0, %v643
      %v645 = vpop.f32.mrf.mxu0
      %v646 = vadd.f32 0.0, %v645
      %647 = vmatmul.bf16.gmra.mxu0 %v600
      %v648 = vpop.f32.mrf.mxu0
      %v649 = vadd.f32 0.0, %v648
      %v650 = vpop.f32.mrf.mxu0
      %v651 = vadd.f32 0.0, %v650
      %652 = vmatmul.bf16.gmra.mxu0 %v603
      %v653 = vpop.f32.mrf.mxu0
      %v654 = vadd.f32 0.0, %v653
      %v655 = vpop.f32.mrf.mxu0
      %v656 = vadd.f32 0.0, %v655
      %657 = vdwg.mxu0
      %v658 = vld [vmem:[%s442] sm:$0xf]
      %v659 = vld [vmem:[%s442 + $0x4] sm:$0xf]
      %v660 = vld [vmem:[%s442 + $0x8] sm:$0xf]
      %v661 = vld [vmem:[%s442 + $0xc] sm:$0xf]
      %v662 = vld [vmem:[%s442 + $0x10] sm:$0xf]
      %v663 = vld [vmem:[%s442 + $0x14] sm:$0xf]
      %v664 = vld [vmem:[%s442 + $0x18] sm:$0xf]
      %v665 = vld [vmem:[%s442 + $0x1c] sm:$0xf]
      %v666 = vld [vmem:[%s442 + $0x20] sm:$0xf]
      %v667 = vld [vmem:[%s442 + $0x24] sm:$0xf]
      %v668 = vld [vmem:[%s442 + $0x28] sm:$0xf]
      %v669 = vld [vmem:[%s442 + $0x2c] sm:$0xf]
      %v670 = vld [vmem:[%s442 + $0x30] sm:$0xf]
      %v671 = vld [vmem:[%s442 + $0x34] sm:$0xf]
      %v672 = vld [vmem:[%s442 + $0x38] sm:$0xf]
      %v673 = vld [vmem:[%s442 + $0x3c] sm:$0xf]
      %v674 = vld [vmem:[%s5] sm:$0x3]
      %v691 = vunpack.c.l.b16 %v658
      %v692 = vunpack.c.l.b16 %v659
      %v693 = vunpack.c.l.b16 %v660
      %v694 = vunpack.c.l.b16 %v661
      %v695 = vunpack.c.l.b16 %v662
      %v696 = vunpack.c.l.b16 %v663
      %v697 = vunpack.c.l.b16 %v664
      %v698 = vunpack.c.l.b16 %v665
      %v699 = vunpack.c.l.b16 %v666
      %v700 = vunpack.c.l.b16 %v667
      %v701 = vunpack.c.l.b16 %v668
      %v702 = vunpack.c.l.b16 %v669
      %v703 = vunpack.c.l.b16 %v670
      %v704 = vunpack.c.l.b16 %v671
      %v705 = vunpack.c.l.b16 %v672
      %v706 = vunpack.c.l.b16 %v673
      %v707 = vpack.c.b16 %v692, %v691
      %v708 = vpack.c.b16 %v694, %v693
      %v709 = vpack.c.b16 %v696, %v695
      %v710 = vpack.c.b16 %v698, %v697
      %v711 = vpack.c.b16 %v700, %v699
      %v712 = vpack.c.b16 %v702, %v701
      %v713 = vpack.c.b16 %v704, %v703
      %v714 = vpack.c.b16 %v706, %v705
      %v716 = vsel %vm580, %v707, 0
      %v719 = vsel %vm580, %v708, 0
      %v722 = vsel %vm580, %v709, 0
      %v725 = vsel %vm580, %v710, 0
      %v728 = vsel %vm580, %v711, 0
      %v731 = vsel %vm580, %v712, 0
      %v734 = vsel %vm580, %v713, 0
      %v737 = vsel %vm580, %v714, 0
      %v740 = vsel %vm605, %v674, 0
      %742 = vmatpush.bf16.msra.mxu0 0
      %743 = vmatpush.bf16.msra.mxu0 0
      %744 = vmatpush.bf16.msra.mxu0 0
      %745 = vmatpush.bf16.msra.mxu0 0
      %746 = vmatpush.bf16.msra.mxu0 0
      %747 = vmatpush.bf16.msra.mxu0 0
      %748 = vmatpush.bf16.msra.mxu0 0
      %749 = vmatpush.bf16.msra.mxu0 %v740
      %750 = vmatmul.bf16.gmra.mxu0 %v716
      %v751 = vpop.f32.mrf.mxu0
      %v752 = vadd.f32 0.0, %v751
      %v753 = vpop.f32.mrf.mxu0
      %v754 = vadd.f32 0.0, %v753
      %755 = vmatmul.bf16.gmra.mxu0 %v719
      %v756 = vpop.f32.mrf.mxu0
      %v757 = vadd.f32 0.0, %v756
      %v758 = vpop.f32.mrf.mxu0
      %v759 = vadd.f32 0.0, %v758
      %760 = vmatmul.bf16.gmra.mxu0 %v722
      %v761 = vpop.f32.mrf.mxu0
      %v762 = vadd.f32 0.0, %v761
      %v763 = vpop.f32.mrf.mxu0
      %v764 = vadd.f32 0.0, %v763
      %765 = vmatmul.bf16.gmra.mxu0 %v725
      %v766 = vpop.f32.mrf.mxu0
      %v767 = vadd.f32 0.0, %v766
      %v768 = vpop.f32.mrf.mxu0
      %v769 = vadd.f32 0.0, %v768
      %770 = vmatmul.bf16.gmra.mxu0 %v728
      %v771 = vpop.f32.mrf.mxu0
      %v772 = vadd.f32 0.0, %v771
      %v773 = vpop.f32.mrf.mxu0
      %v774 = vadd.f32 0.0, %v773
      %775 = vmatmul.bf16.gmra.mxu0 %v731
      %v776 = vpop.f32.mrf.mxu0
      %v777 = vadd.f32 0.0, %v776
      %v778 = vpop.f32.mrf.mxu0
      %v779 = vadd.f32 0.0, %v778
      %780 = vmatmul.bf16.gmra.mxu0 %v734
      %v781 = vpop.f32.mrf.mxu0
      %v782 = vadd.f32 0.0, %v781
      %v783 = vpop.f32.mrf.mxu0
      %v784 = vadd.f32 0.0, %v783
      %785 = vmatmul.bf16.gmra.mxu0 %v737
      %v786 = vpop.f32.mrf.mxu0
      %v787 = vadd.f32 0.0, %v786
      %v788 = vpop.f32.mrf.mxu0
      %v789 = vadd.f32 0.0, %v788
      %790 = vdwg.mxu0
      %v791 = vpack.c.bf16 %v619, %v619
      %v792 = vpack.c.bf16 %v621, %v621
      %v793 = vpack.c.bf16 %v624, %v624
      %v794 = vpack.c.bf16 %v626, %v626
      %v795 = vpack.c.bf16 %v629, %v629
      %v796 = vpack.c.bf16 %v631, %v631
      %v797 = vpack.c.bf16 %v634, %v634
      %v798 = vpack.c.bf16 %v636, %v636
      %v799 = vpack.c.bf16 %v639, %v639
      %v800 = vpack.c.bf16 %v641, %v641
      %v801 = vpack.c.bf16 %v644, %v644
      %v802 = vpack.c.bf16 %v646, %v646
      %v803 = vpack.c.bf16 %v649, %v649
      %v804 = vpack.c.bf16 %v651, %v651
      %v805 = vpack.c.bf16 %v654, %v654
      %v806 = vpack.c.bf16 %v656, %v656
      %vm807 = vcmask 60416
      %808 = vst.msk [vmem:[%s453] sm:$0xf] %vm807, %v791
      %809 = vst.msk [vmem:[%s453 + $0x4] sm:$0xf] %vm807, %v792
      %810 = vst.msk [vmem:[%s453 + $0x8] sm:$0xf] %vm807, %v793
      %811 = vst.msk [vmem:[%s453 + $0xc] sm:$0xf] %vm807, %v794
      %812 = vst.msk [vmem:[%s453 + $0x10] sm:$0xf] %vm807, %v795
      %813 = vst.msk [vmem:[%s453 + $0x14] sm:$0xf] %vm807, %v796
      %814 = vst.msk [vmem:[%s453 + $0x18] sm:$0xf] %vm807, %v797
      %815 = vst.msk [vmem:[%s453 + $0x1c] sm:$0xf] %vm807, %v798
      %816 = vst.msk [vmem:[%s453 + $0x20] sm:$0xf] %vm807, %v799
      %817 = vst.msk [vmem:[%s453 + $0x24] sm:$0xf] %vm807, %v800
      %818 = vst.msk [vmem:[%s453 + $0x28] sm:$0xf] %vm807, %v801
      %819 = vst.msk [vmem:[%s453 + $0x2c] sm:$0xf] %vm807, %v802
      %820 = vst.msk [vmem:[%s453 + $0x30] sm:$0xf] %vm807, %v803
      %821 = vst.msk [vmem:[%s453 + $0x34] sm:$0xf] %vm807, %v804
      %822 = vst.msk [vmem:[%s453 + $0x38] sm:$0xf] %vm807, %v805
      %823 = vst.msk [vmem:[%s453 + $0x3c] sm:$0xf] %vm807, %v806
      %v824 = vpack.c.bf16 %v752, %v752
      %v825 = vpack.c.bf16 %v754, %v754
      %v826 = vpack.c.bf16 %v757, %v757
      %v827 = vpack.c.bf16 %v759, %v759
      %v828 = vpack.c.bf16 %v762, %v762
      %v829 = vpack.c.bf16 %v764, %v764
      %v830 = vpack.c.bf16 %v767, %v767
      %v831 = vpack.c.bf16 %v769, %v769
      %v832 = vpack.c.bf16 %v772, %v772
      %v833 = vpack.c.bf16 %v774, %v774
      %v834 = vpack.c.bf16 %v777, %v777
      %v835 = vpack.c.bf16 %v779, %v779
      %v836 = vpack.c.bf16 %v782, %v782
      %v837 = vpack.c.bf16 %v784, %v784
      %v838 = vpack.c.bf16 %v787, %v787
      %v839 = vpack.c.bf16 %v789, %v789
      %840 = vst.msk [vmem:[%s464] sm:$0xf] %vm807, %v824
      %841 = vst.msk [vmem:[%s464 + $0x4] sm:$0xf] %vm807, %v825
      %842 = vst.msk [vmem:[%s464 + $0x8] sm:$0xf] %vm807, %v826
      %843 = vst.msk [vmem:[%s464 + $0xc] sm:$0xf] %vm807, %v827
      %844 = vst.msk [vmem:[%s464 + $0x10] sm:$0xf] %vm807, %v828
      %845 = vst.msk [vmem:[%s464 + $0x14] sm:$0xf] %vm807, %v829
      %846 = vst.msk [vmem:[%s464 + $0x18] sm:$0xf] %vm807, %v830
      %847 = vst.msk [vmem:[%s464 + $0x1c] sm:$0xf] %vm807, %v831
      %848 = vst.msk [vmem:[%s464 + $0x20] sm:$0xf] %vm807, %v832
      %849 = vst.msk [vmem:[%s464 + $0x24] sm:$0xf] %vm807, %v833
      %850 = vst.msk [vmem:[%s464 + $0x28] sm:$0xf] %vm807, %v834
      %851 = vst.msk [vmem:[%s464 + $0x2c] sm:$0xf] %vm807, %v835
      %852 = vst.msk [vmem:[%s464 + $0x30] sm:$0xf] %vm807, %v836
      %853 = vst.msk [vmem:[%s464 + $0x34] sm:$0xf] %vm807, %v837
      %854 = vst.msk [vmem:[%s464 + $0x38] sm:$0xf] %vm807, %v838
      %855 = vst.msk [vmem:[%s464 + $0x3c] sm:$0xf] %vm807, %v839
      %vm856 = vcmask 64512
      %v857 = vsel %vm856, %v619, 0.0
      %v858 = vsel %vm856, %v621, 0.0
      %v859 = vadd.f32 %v857, %v858
      %v860 = vsel %vm856, %v624, 0.0
      %v861 = vadd.f32 %v859, %v860
      %v862 = vsel %vm856, %v626, 0.0
      %v863 = vadd.f32 %v861, %v862
      %v864 = vsel %vm856, %v629, 0.0
      %v865 = vadd.f32 %v863, %v864
      %v866 = vsel %vm856, %v631, 0.0
      %v867 = vadd.f32 %v865, %v866
      %v868 = vsel %vm856, %v634, 0.0
      %v869 = vadd.f32 %v867, %v868
      %v870 = vsel %vm856, %v636, 0.0
      %v871 = vadd.f32 %v869, %v870
      %v872 = vsel %vm856, %v639, 0.0
      %v873 = vadd.f32 %v871, %v872
      %v874 = vsel %vm856, %v641, 0.0
      %v875 = vadd.f32 %v873, %v874
      %v876 = vsel %vm856, %v644, 0.0
      %v877 = vadd.f32 %v875, %v876
      %v878 = vsel %vm856, %v646, 0.0
      %v879 = vadd.f32 %v877, %v878
      %v880 = vsel %vm856, %v649, 0.0
      %v881 = vadd.f32 %v879, %v880
      %v882 = vsel %vm856, %v651, 0.0
      %v883 = vadd.f32 %v881, %v882
      %v884 = vsel %vm856, %v654, 0.0
      %v885 = vadd.f32 %v883, %v884
      %v886 = vsel %vm856, %v656, 0.0
      %v887 = vadd.f32 %v885, %v886
      %v888 = vrot.slane %v887, 4
      %v889 = vadd.f32 %v887, %v888
      %v890 = vrot.slane %v889, 2
      %v891 = vadd.f32 %v889, %v890
      %v892 = vrot.slane %v891, 1
      %v893 = vadd.f32 %v891, %v892
      %v894 = vmul.f32 %v619, %v619
      %v895 = vmul.f32 %v621, %v621
      %v896 = vmul.f32 %v624, %v624
      %v897 = vmul.f32 %v626, %v626
      %v898 = vmul.f32 %v629, %v629
      %v899 = vmul.f32 %v631, %v631
      %v900 = vmul.f32 %v634, %v634
      %v901 = vmul.f32 %v636, %v636
      %v902 = vmul.f32 %v639, %v639
      %v903 = vmul.f32 %v641, %v641
      %v904 = vmul.f32 %v644, %v644
      %v905 = vmul.f32 %v646, %v646
      %v906 = vmul.f32 %v649, %v649
      %v907 = vmul.f32 %v651, %v651
      %v908 = vmul.f32 %v654, %v654
      %v909 = vmul.f32 %v656, %v656
      %v910 = vsel %vm856, %v894, 0.0
      %v911 = vsel %vm856, %v895, 0.0
      %v912 = vadd.f32 %v910, %v911
      %v913 = vsel %vm856, %v896, 0.0
      %v914 = vadd.f32 %v912, %v913
      %v915 = vsel %vm856, %v897, 0.0
      %v916 = vadd.f32 %v914, %v915
      %v917 = vsel %vm856, %v898, 0.0
      %v918 = vadd.f32 %v916, %v917
      %v919 = vsel %vm856, %v899, 0.0
      %v920 = vadd.f32 %v918, %v919
      %v921 = vsel %vm856, %v900, 0.0
      %v922 = vadd.f32 %v920, %v921
      %v923 = vsel %vm856, %v901, 0.0
      %v924 = vadd.f32 %v922, %v923
      %v925 = vsel %vm856, %v902, 0.0
      %v926 = vadd.f32 %v924, %v925
      %v927 = vsel %vm856, %v903, 0.0
      %v928 = vadd.f32 %v926, %v927
      %v929 = vsel %vm856, %v904, 0.0
      %v930 = vadd.f32 %v928, %v929
      %v931 = vsel %vm856, %v905, 0.0
      %v932 = vadd.f32 %v930, %v931
      %v933 = vsel %vm856, %v906, 0.0
      %v934 = vadd.f32 %v932, %v933
      %v935 = vsel %vm856, %v907, 0.0
      %v936 = vadd.f32 %v934, %v935
      %v937 = vsel %vm856, %v908, 0.0
      %v938 = vadd.f32 %v936, %v937
      %v939 = vsel %vm856, %v909, 0.0
      %v940 = vadd.f32 %v938, %v939
      %v941 = vrot.slane %v940, 4
      %v942 = vadd.f32 %v940, %v941
      %v943 = vrot.slane %v942, 2
      %v944 = vadd.f32 %v942, %v943
      %v945 = vrot.slane %v944, 1
      %v946 = vadd.f32 %v944, %v945
      %v947 = vlaneseq
      %v948 = vshrl.u32 %v947, 7
      %vm949 = vcmp.eq.s32.totalorder %v948, 0
      %vm950 = vcmp.eq.s32.totalorder %v948, 1
      %v951 = vsel %vm950, %v946, 0.0
      %v952 = vsel %vm949, %v893, %v951
      %953 = vst.msk [vmem:[%s471] sm:$0xff] %vm856, %v952
      %v954 = vsel %vm856, %v752, 0.0
      %v955 = vsel %vm856, %v754, 0.0
      %v956 = vadd.f32 %v954, %v955
      %v957 = vsel %vm856, %v757, 0.0
      %v958 = vadd.f32 %v956, %v957
      %v959 = vsel %vm856, %v759, 0.0
      %v960 = vadd.f32 %v958, %v959
      %v961 = vsel %vm856, %v762, 0.0
      %v962 = vadd.f32 %v960, %v961
      %v963 = vsel %vm856, %v764, 0.0
      %v964 = vadd.f32 %v962, %v963
      %v965 = vsel %vm856, %v767, 0.0
      %v966 = vadd.f32 %v964, %v965
      %v967 = vsel %vm856, %v769, 0.0
      %v968 = vadd.f32 %v966, %v967
      %v969 = vsel %vm856, %v772, 0.0
      %v970 = vadd.f32 %v968, %v969
      %v971 = vsel %vm856, %v774, 0.0
      %v972 = vadd.f32 %v970, %v971
      %v973 = vsel %vm856, %v777, 0.0
      %v974 = vadd.f32 %v972, %v973
      %v975 = vsel %vm856, %v779, 0.0
      %v976 = vadd.f32 %v974, %v975
      %v977 = vsel %vm856, %v782, 0.0
      %v978 = vadd.f32 %v976, %v977
      %v979 = vsel %vm856, %v784, 0.0
      %v980 = vadd.f32 %v978, %v979
      %v981 = vsel %vm856, %v787, 0.0
      %v982 = vadd.f32 %v980, %v981
      %v983 = vsel %vm856, %v789, 0.0
      %v984 = vadd.f32 %v982, %v983
      %v985 = vrot.slane %v984, 4
      %v986 = vadd.f32 %v984, %v985
      %v987 = vrot.slane %v986, 2
      %v988 = vadd.f32 %v986, %v987
      %v989 = vrot.slane %v988, 1
      %v990 = vadd.f32 %v988, %v989
      %v991 = vmul.f32 %v752, %v752
      %v992 = vmul.f32 %v754, %v754
      %v993 = vmul.f32 %v757, %v757
      %v994 = vmul.f32 %v759, %v759
      %v995 = vmul.f32 %v762, %v762
      %v996 = vmul.f32 %v764, %v764
      %v997 = vmul.f32 %v767, %v767
      %v998 = vmul.f32 %v769, %v769
      %v999 = vmul.f32 %v772, %v772
      %v1000 = vmul.f32 %v774, %v774
      %v1001 = vmul.f32 %v777, %v777
      %v1002 = vmul.f32 %v779, %v779
      %v1003 = vmul.f32 %v782, %v782
      %v1004 = vmul.f32 %v784, %v784
      %v1005 = vmul.f32 %v787, %v787
      %v1006 = vmul.f32 %v789, %v789
      %v1007 = vsel %vm856, %v991, 0.0
      %v1008 = vsel %vm856, %v992, 0.0
      %v1009 = vadd.f32 %v1007, %v1008
      %v1010 = vsel %vm856, %v993, 0.0
      %v1011 = vadd.f32 %v1009, %v1010
      %v1012 = vsel %vm856, %v994, 0.0
      %v1013 = vadd.f32 %v1011, %v1012
      %v1014 = vsel %vm856, %v995, 0.0
      %v1015 = vadd.f32 %v1013, %v1014
      %v1016 = vsel %vm856, %v996, 0.0
      %v1017 = vadd.f32 %v1015, %v1016
      %v1018 = vsel %vm856, %v997, 0.0
      %v1019 = vadd.f32 %v1017, %v1018
      %v1020 = vsel %vm856, %v998, 0.0
      %v1021 = vadd.f32 %v1019, %v1020
      %v1022 = vsel %vm856, %v999, 0.0
      %v1023 = vadd.f32 %v1021, %v1022
      %v1024 = vsel %vm856, %v1000, 0.0
      %v1025 = vadd.f32 %v1023, %v1024
      %v1026 = vsel %vm856, %v1001, 0.0
      %v1027 = vadd.f32 %v1025, %v1026
      %v1028 = vsel %vm856, %v1002, 0.0
      %v1029 = vadd.f32 %v1027, %v1028
      %v1030 = vsel %vm856, %v1003, 0.0
      %v1031 = vadd.f32 %v1029, %v1030
      %v1032 = vsel %vm856, %v1004, 0.0
      %v1033 = vadd.f32 %v1031, %v1032
      %v1034 = vsel %vm856, %v1005, 0.0
      %v1035 = vadd.f32 %v1033, %v1034
      %v1036 = vsel %vm856, %v1006, 0.0
      %v1037 = vadd.f32 %v1035, %v1036
      %v1038 = vrot.slane %v1037, 4
      %v1039 = vadd.f32 %v1037, %v1038
      %v1040 = vrot.slane %v1039, 2
      %v1041 = vadd.f32 %v1039, %v1040
      %v1042 = vrot.slane %v1041, 1
      %v1043 = vadd.f32 %v1041, %v1042
      %v1044 = vsel %vm950, %v1043, 0.0
      %v1045 = vsel %vm949, %v990, %v1044
      %1046 = vst.msk [vmem:[%s479] sm:$0xff] %vm856, %v1045
      %s1047 = smul.u32 8, %s26
      %p1048 = scmp.lt.s32.totalorder %s25, 1
      %s1049 = scalar_select %p1048, %s25, 1
      %p1050 = scmp.lt.s32.totalorder %s1047, 15
      %s1051 = scalar_select %p1050, %s1047, 15
      %s1052 = smul.addr %s1051, 2
      %s1053 = smul.addr %s1049, 32
      %s1054 = sadd.s32 %s1052, %s1053
      %s1055 = smul.addr %s1054, 4
      %s1056 = scalar_lea.vmem %s6, %s1055
      %s1057 = smul.u32 8, %s26
      %p1058 = scmp.lt.s32.totalorder %s25, 1
      %s1059 = scalar_select %p1058, %s25, 1
      %p1060 = scmp.lt.s32.totalorder %s1057, 15
      %s1061 = scalar_select %p1060, %s1057, 15
      %s1062 = smul.addr %s1061, 2
      %s1063 = smul.addr %s1059, 32
      %s1064 = sadd.s32 %s1062, %s1063
      %s1065 = smul.addr %s1064, 4
      %s1066 = scalar_lea.vmem %s7, %s1065
      %s1067 = smul.u32 %s25, 2
      %s1068 = sadd.s32 %s1067, %s26
      %p1069 = scmp.lt.s32.totalorder %s1068, 3
      %s1070 = scalar_select %p1069, %s1068, 3
      %s1071 = smul.addr %s1070, 8
      %s1072 = scalar_lea.vmem %s8, %s1071
      %s1073 = smul.u32 %s25, 2
      %s1074 = sadd.s32 %s1073, %s26
      %p1075 = scmp.lt.s32.totalorder %s1074, 3
      %s1076 = scalar_select %p1075, %s1074, 3
      %s1077 = smul.addr %s1076, 8
      %s1078 = scalar_lea.vmem %s9, %s1077
      // Predicated region
      $region45: #{bottleneck_psp_forward.6} parent=43 // pred_check
        %p1079 = pneg %p193
      $region46: #{bottleneck_psp_forward.6} parent=43 // pred_check_branch
        %1081 = sbr.rel (%p1079) target = $region48
      $region47: #{bottleneck_psp_forward.6} parent=43 // pred_region
        %s1082 = smul.u32 8, %s26
      $region48: #{bottleneck_psp_forward.6} parent=43 // pred_fallthru
        _
      // Predicated region
      $region49: #{bottleneck_psp_forward.6} parent=43 // pred_check
        %p1083 = pneg %p221
      $region50: #{bottleneck_psp_forward.6} parent=43 // pred_check_branch
        %1085 = sbr.rel (%p1083) target = $region52
      $region51: #{bottleneck_psp_forward.6} parent=43 // pred_region
        %s1086 = smul.u32 8, %s26
      $region52: #{bottleneck_psp_forward.6} parent=43 // pred_fallthru
        _
      // Predicated region
      $region53: #{bottleneck_psp_forward.6} parent=43 // pred_check
        %p1087 = pneg %p251
      $region54: #{bottleneck_psp_forward.6} parent=43 // pred_check_branch
        %1089 = sbr.rel (%p1087) target = $region56
      $region55: #{bottleneck_psp_forward.6} parent=43 // pred_region
        %s1090 = smul.u32 %s25, 2
        %s1091 = sadd.s32 %s1090, %s26
      $region56: #{bottleneck_psp_forward.6} parent=43 // pred_fallthru
        _
      // Predicated region
      $region57: #{bottleneck_psp_forward.6} parent=43 // pred_check
        %p1092 = pneg %p281
      $region58: #{bottleneck_psp_forward.6} parent=43 // pred_check_branch
        %1094 = sbr.rel (%p1092) target = $region60
      $region59: #{bottleneck_psp_forward.6} parent=43 // pred_region
        %s1095 = smul.u32 %s25, 2
        %s1096 = sadd.s32 %s1095, %s26
      $region60: #{bottleneck_psp_forward.6} parent=43 // pred_fallthru
        _
    $region44: #{bottleneck_psp_forward.6} parent=5 // pred_fallthru
      _
    %p1097 = scmp.le.s32.totalorder 2, %s16
    // Predicated region
    $region61: #{bottleneck_psp_forward.6} parent=5 // pred_check
      %p1098 = pneg %p1097
    $region62: #{bottleneck_psp_forward.6} parent=5 // pred_check_branch
      %1100 = sbr.rel (%p1098) target = $region64
    $region63: #{bottleneck_psp_forward.6} parent=5 // pred_region
      %s1101 = ssub.s32 %s16, 2
      // Predicated region
      $region65: #{bottleneck_psp_forward.6} parent=63 // pred_check
        %p1102 = pneg %p199
      $region66: #{bottleneck_psp_forward.6} parent=63 // pred_check_branch
        %1104 = sbr.rel (%p1102) target = $region68
      $region67: #{bottleneck_psp_forward.6} parent=63 // pred_region
        %s1105 = smul.u32 8, %s28
        %p1106 = scmp.lt.s32.totalorder %s27, 1
        %s1107 = scalar_select %p1106, %s27, 1
        %p1108 = scmp.lt.s32.totalorder %s1105, 15
        %s1109 = scalar_select %p1108, %s1105, 15
        %s1110 = smul.addr %s1109, 2
        %s1111 = smul.addr %s1107, 32
        %s1112 = sadd.s32 %s1110, %s1111
        %s1113 = smul.addr %s1112, 4
        %s1114 = scalar_lea.vmem %s6, %s1113
      $region68: #{bottleneck_psp_forward.6} parent=63 // pred_fallthru
        _
      // Predicated region
      $region69: #{bottleneck_psp_forward.6} parent=63 // pred_check
        %p1115 = pneg %p227
      $region70: #{bottleneck_psp_forward.6} parent=63 // pred_check_branch
        %1117 = sbr.rel (%p1115) target = $region72
      $region71: #{bottleneck_psp_forward.6} parent=63 // pred_region
        %s1118 = smul.u32 8, %s28
        %p1119 = scmp.lt.s32.totalorder %s27, 1
        %s1120 = scalar_select %p1119, %s27, 1
        %p1121 = scmp.lt.s32.totalorder %s1118, 15
        %s1122 = scalar_select %p1121, %s1118, 15
        %s1123 = smul.addr %s1122, 2
        %s1124 = smul.addr %s1120, 32
        %s1125 = sadd.s32 %s1123, %s1124
        %s1126 = smul.addr %s1125, 4
        %s1127 = scalar_lea.vmem %s7, %s1126
      $region72: #{bottleneck_psp_forward.6} parent=63 // pred_fallthru
        _
      // Predicated region
      $region73: #{bottleneck_psp_forward.6} parent=63 // pred_check
        %p1128 = pneg %p257
      $region74: #{bottleneck_psp_forward.6} parent=63 // pred_check_branch
        %1130 = sbr.rel (%p1128) target = $region76
      $region75: #{bottleneck_psp_forward.6} parent=63 // pred_region
        %s1131 = smul.u32 %s27, 2
        %s1132 = sadd.s32 %s1131, %s28
        %p1133 = scmp.lt.s32.totalorder %s1132, 3
        %s1134 = scalar_select %p1133, %s1132, 3
        %s1135 = smul.addr %s1134, 8
        %s1136 = scalar_lea.vmem %s8, %s1135
      $region76: #{bottleneck_psp_forward.6} parent=63 // pred_fallthru
        _
      // Predicated region
      $region77: #{bottleneck_psp_forward.6} parent=63 // pred_check
        %p1137 = pneg %p287
      $region78: #{bottleneck_psp_forward.6} parent=63 // pred_check_branch
        %1139 = sbr.rel (%p1137) target = $region80
      $region79: #{bottleneck_psp_forward.6} parent=63 // pred_region
        %s1140 = smul.u32 %s27, 2
        %s1141 = sadd.s32 %s1140, %s28
        %p1142 = scmp.lt.s32.totalorder %s1141, 3
        %s1143 = scalar_select %p1142, %s1141, 3
        %s1144 = smul.addr %s1143, 8
        %s1145 = scalar_lea.vmem %s9, %s1144
      $region80: #{bottleneck_psp_forward.6} parent=63 // pred_fallthru
        _
    $region64: #{bottleneck_psp_forward.6} parent=5 // pred_fallthru
      _
  $region6: #{bottleneck_psp_forward.6} parent=0 // loop_footer
    %s20 = sadd.s32 1, %s16
  $region7: #{bottleneck_psp_forward.6} parent=0 // loop_footer_branch
    %15 = sbr.rel target = $region3
  $region8: #{bottleneck_psp_forward.6} parent=0 // loop_exit
    _

// kernel: bottleneck_psp_forward.7
$region0: #{bottleneck_psp_forward.7}
  #allocation0 [shape = 'u32[]', space=smem, size = 0x4, offset = 0x4, fixed_abs, tag = 'smem constant byte address 0x4 - core index']
  #allocation1 [shape = 'u32[72,128]{1,0:T(1,128)}', space=vmem, size = 0x9000, scoped, tag = 'internal scratch']
  %s0 = inlined_call_operand.vmem [shape: bf16[2,16,16,8], index: 0, kind: input, shape index: {}]
  %s1 = inlined_call_operand.vmem [shape: bf16[2,16,16,8], index: 1, kind: input, shape index: {}]
  %s2 = inlined_call_operand.vmem [shape: f32[1,8], index: 2, kind: input, shape index: {}]
  %s3 = inlined_call_operand.vmem [shape: f32[1,8], index: 3, kind: input, shape index: {}]
  %s4 = inlined_call_operand.vmem [shape: f32[1,8], index: 4, kind: input, shape index: {}]
  %s5 = inlined_call_operand.vmem [shape: f32[1,8], index: 5, kind: input, shape index: {}]
  %s6 = inlined_call_operand.vmem [shape: f32[2,16,16,8], index: 6, kind: output, shape index: {}]
  %s7 = sld [smem:[#allocation0]]
  $region57: #{bottleneck_psp_forward.7} parent=0
    _
  %s9 = ssub.s32 1, %s7
  %s10 = scalar_select 0, %s9, %s7
  loop: start=0, step=1, limit=6
  $region2: #{bottleneck_psp_forward.7} parent=0 // loop_pre_header
    _
  $region3: #{bottleneck_psp_forward.7} parent=0 // loop_header
    %s12 = sphi 0, %s16
    %p13 = scmp.ge.s32.totalorder %s12, 6
    %s19 = sphi 0, %s31
    %s20 = sphi 0, %s27
    %s21 = sphi 0, %s19
    %s22 = sphi 0, %s20
    %s23 = sphi 0, %s21
    %s24 = sphi 0, %s22
    %s36 = sphi 0, %s38
    %s39 = sphi 0, %s36
    %s40 = sphi 0, %s39
    %s56 = sphi 0, %s40
    %s64 = sphi 0, %s66
    %s67 = sphi 0, %s64
    %s68 = sphi 0, %s67
    %s84 = sphi 0, %s68
    %s88 = sphi 0, %s88
    %s90 = sphi 0, %s88
    %s91 = sphi 0, %s90
    %s105 = sphi 0, %s91
    %s109 = sphi 0, %s109
    %s111 = sphi 0, %s109
    %s112 = sphi 0, %s111
    %s126 = sphi 0, %s112
    %s130 = sphi 0, %s130
    %s132 = sphi 0, %s130
    %s133 = sphi 0, %s132
    %s147 = sphi 0, %s133
    %s151 = sphi 0, %s151
    %s153 = sphi 0, %s151
    %s154 = sphi 0, %s153
    %s168 = sphi 0, %s154
    %s176 = sphi 0, %s178
    %s179 = sphi 0, %s176
    %s180 = sphi 0, %s179
    %s196 = sphi 0, %s180
  $region4: #{bottleneck_psp_forward.7} parent=0 // loop_header_branch
    %15 = sbr.rel (%p13) target = $region8
  $region5: #{bottleneck_psp_forward.7} parent=0 // loop_body
    %s17 = ssub.s32 %s12, 1
    %s18 = ssub.s32 %s12, 2
    %s25 = sadd.s32 1, %s20
    %p26 = scmp.ge.s32.totalorder %s25, 2
    %s27 = scalar_select %p26, 0, %s25
    %s28 = sadd.s32 1, %s19
    %s29 = scalar_select %p26, %s28, %s19
    %p30 = scmp.ge.s32.totalorder %s29, 2
    %s31 = scalar_select %p30, 0, %s29
    %s32 = ssub.s32 %s19, %s31
    %s33 = ssub.s32 %s20, %s27
    %s34 = sor.u32 %s32, %s33
    %p35 = scmp.eq.s32.totalorder %s34, 0
    %s37 = sadd.s32 %s36, 1
    %s38 = scalar_select %p35, %s36, %s37
    %p41 = pneg %p35
    %p42 = scmp.eq.s32.totalorder %s12, 3
    %p43 = por %p41, %p42
    %p44 = scmp.ne.s32.totalorder %s36, %s39
    %p45 = scmp.eq.s32.totalorder %s12, 0
    %p46 = por %p44, %p45
    %p47 = scmp.ne.s32.totalorder %s36, %s39
    %p48 = scmp.eq.s32.totalorder %s17, 3
    %p49 = por %p47, %p48
    %p50 = scmp.ne.s32.totalorder %s39, %s40
    %p51 = scmp.eq.s32.totalorder %s17, 0
    %p52 = por %p50, %p51
    %p53 = scmp.ne.s32.totalorder %s39, %s40
    %p54 = scmp.eq.s32.totalorder %s18, 3
    %p55 = por %p53, %p54
    %p57 = scmp.ne.s32.totalorder %s40, %s56
    %p58 = scmp.eq.s32.totalorder %s18, 0
    %p59 = por %p57, %p58
    %s60 = ssub.s32 %s19, %s31
    %s61 = ssub.s32 %s20, %s27
    %s62 = sor.u32 %s60, %s61
    %p63 = scmp.eq.s32.totalorder %s62, 0
    %s65 = sadd.s32 %s64, 1
    %s66 = scalar_select %p63, %s64, %s65
    %p69 = pneg %p63
    %p70 = scmp.eq.s32.totalorder %s12, 3
    %p71 = por %p69, %p70
    %p72 = scmp.ne.s32.totalorder %s64, %s67
    %p73 = scmp.eq.s32.totalorder %s12, 0
    %p74 = por %p72, %p73
    %p75 = scmp.ne.s32.totalorder %s64, %s67
    %p76 = scmp.eq.s32.totalorder %s17, 3
    %p77 = por %p75, %p76
    %p78 = scmp.ne.s32.totalorder %s67, %s68
    %p79 = scmp.eq.s32.totalorder %s17, 0
    %p80 = por %p78, %p79
    %p81 = scmp.ne.s32.totalorder %s67, %s68
    %p82 = scmp.eq.s32.totalorder %s18, 3
    %p83 = por %p81, %p82
    %p85 = scmp.ne.s32.totalorder %s68, %s84
    %p86 = scmp.eq.s32.totalorder %s18, 0
    %p87 = por %p85, %p86
    %s89 = sadd.s32 %s88, 1
    %p92 = scmp.eq.s32.totalorder %s12, 3
    %p93 = scmp.ne.s32.totalorder %s88, %s90
    %p94 = scmp.eq.s32.totalorder %s12, 0
    %p95 = por %p93, %p94
    %p96 = scmp.ne.s32.totalorder %s88, %s90
    %p97 = scmp.eq.s32.totalorder %s17, 3
    %p98 = por %p96, %p97
    %p99 = scmp.ne.s32.totalorder %s90, %s91
    %p100 = scmp.eq.s32.totalorder %s17, 0
    %p101 = por %p99, %p100
    %p102 = scmp.ne.s32.totalorder %s90, %s91
    %p103 = scmp.eq.s32.totalorder %s18, 3
    %p104 = por %p102, %p103
    %p106 = scmp.ne.s32.totalorder %s91, %s105
    %p107 = scmp.eq.s32.totalorder %s18, 0
    %p108 = por %p106, %p107
    %s110 = sadd.s32 %s109, 1
    %p113 = scmp.eq.s32.totalorder %s12, 3
    %p114 = scmp.ne.s32.totalorder %s109, %s111
    %p115 = scmp.eq.s32.totalorder %s12, 0
    %p116 = por %p114, %p115
    %p117 = scmp.ne.s32.totalorder %s109, %s111
    %p118 = scmp.eq.s32.totalorder %s17, 3
    %p119 = por %p117, %p118
    %p120 = scmp.ne.s32.totalorder %s111, %s112
    %p121 = scmp.eq.s32.totalorder %s17, 0
    %p122 = por %p120, %p121
    %p123 = scmp.ne.s32.totalorder %s111, %s112
    %p124 = scmp.eq.s32.totalorder %s18, 3
    %p125 = por %p123, %p124
    %p127 = scmp.ne.s32.totalorder %s112, %s126
    %p128 = scmp.eq.s32.totalorder %s18, 0
    %p129 = por %p127, %p128
    %s131 = sadd.s32 %s130, 1
    %p134 = scmp.eq.s32.totalorder %s12, 3
    %p135 = scmp.ne.s32.totalorder %s130, %s132
    %p136 = scmp.eq.s32.totalorder %s12, 0
    %p137 = por %p135, %p136
    %p138 = scmp.ne.s32.totalorder %s130, %s132
    %p139 = scmp.eq.s32.totalorder %s17, 3
    %p140 = por %p138, %p139
    %p141 = scmp.ne.s32.totalorder %s132, %s133
    %p142 = scmp.eq.s32.totalorder %s17, 0
    %p143 = por %p141, %p142
    %p144 = scmp.ne.s32.totalorder %s132, %s133
    %p145 = scmp.eq.s32.totalorder %s18, 3
    %p146 = por %p144, %p145
    %p148 = scmp.ne.s32.totalorder %s133, %s147
    %p149 = scmp.eq.s32.totalorder %s18, 0
    %p150 = por %p148, %p149
    %s152 = sadd.s32 %s151, 1
    %p155 = scmp.eq.s32.totalorder %s12, 3
    %p156 = scmp.ne.s32.totalorder %s151, %s153
    %p157 = scmp.eq.s32.totalorder %s12, 0
    %p158 = por %p156, %p157
    %p159 = scmp.ne.s32.totalorder %s151, %s153
    %p160 = scmp.eq.s32.totalorder %s17, 3
    %p161 = por %p159, %p160
    %p162 = scmp.ne.s32.totalorder %s153, %s154
    %p163 = scmp.eq.s32.totalorder %s17, 0
    %p164 = por %p162, %p163
    %p165 = scmp.ne.s32.totalorder %s153, %s154
    %p166 = scmp.eq.s32.totalorder %s18, 3
    %p167 = por %p165, %p166
    %p169 = scmp.ne.s32.totalorder %s154, %s168
    %p170 = scmp.eq.s32.totalorder %s18, 0
    %p171 = por %p169, %p170
    %s172 = ssub.s32 %s19, %s31
    %s173 = ssub.s32 %s20, %s27
    %s174 = sor.u32 %s172, %s173
    %p175 = scmp.eq.s32.totalorder %s174, 0
    %s177 = sadd.s32 %s176, 1
    %s178 = scalar_select %p175, %s176, %s177
    %p181 = pneg %p175
    %p182 = scmp.eq.s32.totalorder %s12, 3
    %p183 = por %p181, %p182
    %p184 = scmp.ne.s32.totalorder %s176, %s179
    %p185 = scmp.eq.s32.totalorder %s12, 0
    %p186 = por %p184, %p185
    %p187 = scmp.ne.s32.totalorder %s176, %s179
    %p188 = scmp.eq.s32.totalorder %s17, 3
    %p189 = por %p187, %p188
    %p190 = scmp.ne.s32.totalorder %s179, %s180
    %p191 = scmp.eq.s32.totalorder %s17, 0
    %p192 = por %p190, %p191
    %p193 = scmp.ne.s32.totalorder %s179, %s180
    %p194 = scmp.eq.s32.totalorder %s18, 3
    %p195 = por %p193, %p194
    %p197 = scmp.ne.s32.totalorder %s180, %s196
    %p198 = scmp.eq.s32.totalorder %s18, 0
    %p199 = por %p197, %p198
    %p200 = scmp.le.s32.totalorder 1, %s12
    %p201 = scmp.lt.s32.totalorder %s12, 5
    %p202 = pnand %p200, %p201
    %p203 = pneg %p202
    // Predicated region
    $region9: #{bottleneck_psp_forward.7} parent=5 // pred_check
      _
    $region10: #{bottleneck_psp_forward.7} parent=5 // pred_check_branch
      %205 = sbr.rel (%p202) target = $region12
    $region11: #{bottleneck_psp_forward.7} parent=5 // pred_region
      %s206 = ssub.s32 %s12, 1
      // Predicated region
      $region13: #{bottleneck_psp_forward.7} parent=11 // pred_check
        %p207 = pneg %p101
      $region14: #{bottleneck_psp_forward.7} parent=11 // pred_check_branch
        %209 = sbr.rel (%p207) target = $region16
      $region15: #{bottleneck_psp_forward.7} parent=11 // pred_region
        _
      $region16: #{bottleneck_psp_forward.7} parent=11 // pred_fallthru
        _
      // Predicated region
      $region17: #{bottleneck_psp_forward.7} parent=11 // pred_check
        %p210 = pneg %p122
      $region18: #{bottleneck_psp_forward.7} parent=11 // pred_check_branch
        %212 = sbr.rel (%p210) target = $region20
      $region19: #{bottleneck_psp_forward.7} parent=11 // pred_region
        _
      $region20: #{bottleneck_psp_forward.7} parent=11 // pred_fallthru
        _
      // Predicated region
      $region21: #{bottleneck_psp_forward.7} parent=11 // pred_check
        %p213 = pneg %p143
      $region22: #{bottleneck_psp_forward.7} parent=11 // pred_check_branch
        %215 = sbr.rel (%p213) target = $region24
      $region23: #{bottleneck_psp_forward.7} parent=11 // pred_region
        _
      $region24: #{bottleneck_psp_forward.7} parent=11 // pred_fallthru
        _
      // Predicated region
      $region25: #{bottleneck_psp_forward.7} parent=11 // pred_check
        %p216 = pneg %p164
      $region26: #{bottleneck_psp_forward.7} parent=11 // pred_check_branch
        %218 = sbr.rel (%p216) target = $region28
      $region27: #{bottleneck_psp_forward.7} parent=11 // pred_region
        _
      $region28: #{bottleneck_psp_forward.7} parent=11 // pred_fallthru
        _
    $region12: #{bottleneck_psp_forward.7} parent=5 // pred_fallthru
      _
    %p219 = scmp.lt.s32.totalorder %s12, 4
    // Predicated region
    $region29: #{bottleneck_psp_forward.7} parent=5 // pred_check
      %p220 = pneg %p219
    $region30: #{bottleneck_psp_forward.7} parent=5 // pred_check_branch
      %222 = sbr.rel (%p220) target = $region32
    $region31: #{bottleneck_psp_forward.7} parent=5 // pred_region
      // Predicated region
      $region33: #{bottleneck_psp_forward.7} parent=31 // pred_check
        %p223 = pneg %p46
      $region34: #{bottleneck_psp_forward.7} parent=31 // pred_check_branch
        %225 = sbr.rel (%p223) target = $region36
      $region35: #{bottleneck_psp_forward.7} parent=31 // pred_region
        %s226 = smul.u32 8, %s20
        %p227 = scmp.lt.s32.totalorder %s19, 1
        %s228 = scalar_select %p227, %s19, 1
        %p229 = scmp.lt.s32.totalorder %s226, 15
        %s230 = scalar_select %p229, %s226, 15
        %s231 = smul.addr %s230, 2
        %s232 = smul.addr %s228, 32
        %s233 = sadd.s32 %s231, %s232
        %s234 = smul.addr %s233, 4
        %s235 = scalar_lea.vmem %s0, %s234
        %s236 = smul.u32 8, %s20
      $region36: #{bottleneck_psp_forward.7} parent=31 // pred_fallthru
        _
      // Predicated region
      $region37: #{bottleneck_psp_forward.7} parent=31 // pred_check
        %p237 = pneg %p74
      $region38: #{bottleneck_psp_forward.7} parent=31 // pred_check_branch
        %239 = sbr.rel (%p237) target = $region40
      $region39: #{bottleneck_psp_forward.7} parent=31 // pred_region
        %s240 = smul.u32 8, %s20
        %p241 = scmp.lt.s32.totalorder %s19, 1
        %s242 = scalar_select %p241, %s19, 1
        %p243 = scmp.lt.s32.totalorder %s240, 15
        %s244 = scalar_select %p243, %s240, 15
        %s245 = smul.addr %s244, 2
        %s246 = smul.addr %s242, 32
        %s247 = sadd.s32 %s245, %s246
        %s248 = smul.addr %s247, 4
        %s249 = scalar_lea.vmem %s1, %s248
        %s250 = smul.u32 8, %s20
      $region40: #{bottleneck_psp_forward.7} parent=31 // pred_fallthru
        _
    $region32: #{bottleneck_psp_forward.7} parent=5 // pred_fallthru
      _
    %p251 = scmp.le.s32.totalorder 1, %s12
    %p252 = scmp.lt.s32.totalorder %s12, 5
    %p253 = pnand %p251, %p252
    %p254 = pneg %p253
    // Predicated region
    $region41: #{bottleneck_psp_forward.7} parent=5 // pred_check
      _
    $region42: #{bottleneck_psp_forward.7} parent=5 // pred_check_branch
      %256 = sbr.rel (%p253) target = $region44
    $region43: #{bottleneck_psp_forward.7} parent=5 // pred_region
      %s257 = ssub.s32 %s12, 1
      %s258 = smul.u32 8, %s22
      %p259 = scmp.lt.s32.totalorder %s21, 1
      %s260 = scalar_select %p259, %s21, 1
      %p261 = scmp.lt.s32.totalorder %s258, 15
      %s262 = scalar_select %p261, %s258, 15
      %s263 = smul.addr %s262, 2
      %s264 = smul.addr %s260, 32
      %s265 = sadd.s32 %s263, %s264
      %s266 = smul.addr %s265, 4
      %s267 = scalar_lea.vmem %s0, %s266
      %p268 = pneg %p52
      %p269 = pneg %p49
      %s270 = smul.u32 8, %s22
      %p271 = scmp.lt.s32.totalorder %s21, 1
      %s272 = scalar_select %p271, %s21, 1
      %p273 = scmp.lt.s32.totalorder %s270, 15
      %s274 = scalar_select %p273, %s270, 15
      %s275 = smul.addr %s274, 2
      %s276 = smul.addr %s272, 32
      %s277 = sadd.s32 %s275, %s276
      %s278 = smul.addr %s277, 4
      %s279 = scalar_lea.vmem %s1, %s278
      %p280 = pneg %p80
      %p281 = pneg %p77
      %p282 = pneg %p101
      %p283 = pneg %p98
      %p284 = pneg %p122
      %p285 = pneg %p119
      %p286 = pneg %p143
      %p287 = pneg %p140
      %p288 = pneg %p164
      %p289 = pneg %p161
      %p290 = pneg %p192
      %p291 = pneg %p189
      %s292 = smul.u32 8, %s22
      %p293 = scmp.lt.s32.totalorder %s21, 1
      %s294 = scalar_select %p293, %s21, 1
      %p295 = scmp.lt.s32.totalorder %s292, 15
      %s296 = scalar_select %p295, %s292, 15
      %s297 = smul.addr %s296, 2
      %s298 = smul.addr %s294, 32
      %s299 = sadd.s32 %s297, %s298
      %s300 = smul.addr %s299, 8
      %s301 = scalar_lea.vmem %s6, %s300
      %s302 = smul.u32 8, %s22
      %p303 = scmp.lt.s32.totalorder %s21, 1
      %s304 = scalar_select %p303, %s21, 1
      %p305 = scmp.lt.s32.totalorder %s302, 15
      %s306 = scalar_select %p305, %s302, 15
      %s307 = smul.addr %s306, 2
      %s308 = smul.addr %s304, 32
      %s309 = sadd.s32 %s307, %s308
      %s310 = smul.addr %s309, 4
      %s311 = scalar_lea.vmem %s0, %s310
      %s312 = smul.u32 8, %s22
      %s313 = smul.u32 8, %s22
      %p314 = scmp.lt.s32.totalorder %s21, 1
      %s315 = scalar_select %p314, %s21, 1
      %p316 = scmp.lt.s32.totalorder %s313, 15
      %s317 = scalar_select %p316, %s313, 15
      %s318 = smul.addr %s317, 2
      %s319 = smul.addr %s315, 32
      %s320 = sadd.s32 %s318, %s319
      %s321 = smul.addr %s320, 4
      %s322 = scalar_lea.vmem %s1, %s321
      %s323 = smul.u32 8, %s22
      %s324 = smul.u32 8, %s22
      %p325 = scmp.lt.s32.totalorder %s21, 1
      %s326 = scalar_select %p325, %s21, 1
      %p327 = scmp.lt.s32.totalorder %s324, 15
      %s328 = scalar_select %p327, %s324, 15
      %s329 = smul.addr %s328, 2
      %s330 = smul.addr %s326, 32
      %s331 = sadd.s32 %s329, %s330
      %s332 = smul.addr %s331, 8
      %s333 = scalar_lea.vmem %s6, %s332
      %s334 = smul.u32 8, %s22
      %v335 = vld [vmem:[%s311] sm:$0xf]
      %v336 = vld [vmem:[%s311 + $0x4] sm:$0xf]
      %v337 = vld [vmem:[%s311 + $0x8] sm:$0xf]
      %v338 = vld [vmem:[%s311 + $0xc] sm:$0xf]
      %v339 = vld [vmem:[%s311 + $0x10] sm:$0xf]
      %v340 = vld [vmem:[%s311 + $0x14] sm:$0xf]
      %v341 = vld [vmem:[%s311 + $0x18] sm:$0xf]
      %v342 = vld [vmem:[%s311 + $0x1c] sm:$0xf]
      %v343 = vld [vmem:[%s311 + $0x20] sm:$0xf]
      %v344 = vld [vmem:[%s311 + $0x24] sm:$0xf]
      %v345 = vld [vmem:[%s311 + $0x28] sm:$0xf]
      %v346 = vld [vmem:[%s311 + $0x2c] sm:$0xf]
      %v347 = vld [vmem:[%s311 + $0x30] sm:$0xf]
      %v348 = vld [vmem:[%s311 + $0x34] sm:$0xf]
      %v349 = vld [vmem:[%s311 + $0x38] sm:$0xf]
      %v350 = vld [vmem:[%s311 + $0x3c] sm:$0xf]
      %v351 = vld [vmem:[%s2] sm:$0x1]
      %v352 = vunpack.c.l.bf16 %v335
      %v353 = vunpack.c.l.bf16 %v336
      %v354 = vunpack.c.l.bf16 %v337
      %v355 = vunpack.c.l.bf16 %v338
      %v356 = vunpack.c.l.bf16 %v339
      %v357 = vunpack.c.l.bf16 %v340
      %v358 = vunpack.c.l.bf16 %v341
      %v359 = vunpack.c.l.bf16 %v342
      %v360 = vunpack.c.l.bf16 %v343
      %v361 = vunpack.c.l.bf16 %v344
      %v362 = vunpack.c.l.bf16 %v345
      %v363 = vunpack.c.l.bf16 %v346
      %v364 = vunpack.c.l.bf16 %v347
      %v365 = vunpack.c.l.bf16 %v348
      %v366 = vunpack.c.l.bf16 %v349
      %v367 = vunpack.c.l.bf16 %v350
      %v369 = vperm.slane %v351, 0
      %v371 = vmul.f32 %v352, %v369
      %v372 = vmul.f32 %v353, %v369
      %v373 = vmul.f32 %v354, %v369
      %v374 = vmul.f32 %v355, %v369
      %v375 = vmul.f32 %v356, %v369
      %v376 = vmul.f32 %v357, %v369
      %v377 = vmul.f32 %v358, %v369
      %v378 = vmul.f32 %v359, %v369
      %v379 = vmul.f32 %v360, %v369
      %v380 = vmul.f32 %v361, %v369
      %v381 = vmul.f32 %v362, %v369
      %v382 = vmul.f32 %v363, %v369
      %v383 = vmul.f32 %v364, %v369
      %v384 = vmul.f32 %v365, %v369
      %v385 = vmul.f32 %v366, %v369
      %v386 = vmul.f32 %v367, %v369
      %v387 = vld [vmem:[%s3] sm:$0x1]
      %v389 = vperm.slane %v387, 0
      %v391 = vadd.f32 %v371, %v389
      %v392 = vadd.f32 %v372, %v389
      %v393 = vadd.f32 %v373, %v389
      %v394 = vadd.f32 %v374, %v389
      %v395 = vadd.f32 %v375, %v389
      %v396 = vadd.f32 %v376, %v389
      %v397 = vadd.f32 %v377, %v389
      %v398 = vadd.f32 %v378, %v389
      %v399 = vadd.f32 %v379, %v389
      %v400 = vadd.f32 %v380, %v389
      %v401 = vadd.f32 %v381, %v389
      %v402 = vadd.f32 %v382, %v389
      %v403 = vadd.f32 %v383, %v389
      %v404 = vadd.f32 %v384, %v389
      %v405 = vadd.f32 %v385, %v389
      %v406 = vadd.f32 %v386, %v389
      %v407 = vld [vmem:[%s322] sm:$0xf]
      %v408 = vld [vmem:[%s322 + $0x4] sm:$0xf]
      %v409 = vld [vmem:[%s322 + $0x8] sm:$0xf]
      %v410 = vld [vmem:[%s322 + $0xc] sm:$0xf]
      %v411 = vld [vmem:[%s322 + $0x10] sm:$0xf]
      %v412 = vld [vmem:[%s322 + $0x14] sm:$0xf]
      %v413 = vld [vmem:[%s322 + $0x18] sm:$0xf]
      %v414 = vld [vmem:[%s322 + $0x1c] sm:$0xf]
      %v415 = vld [vmem:[%s322 + $0x20] sm:$0xf]
      %v416 = vld [vmem:[%s322 + $0x24] sm:$0xf]
      %v417 = vld [vmem:[%s322 + $0x28] sm:$0xf]
      %v418 = vld [vmem:[%s322 + $0x2c] sm:$0xf]
      %v419 = vld [vmem:[%s322 + $0x30] sm:$0xf]
      %v420 = vld [vmem:[%s322 + $0x34] sm:$0xf]
      %v421 = vld [vmem:[%s322 + $0x38] sm:$0xf]
      %v422 = vld [vmem:[%s322 + $0x3c] sm:$0xf]
      %v423 = vld [vmem:[%s4] sm:$0x1]
      %v424 = vunpack.c.l.bf16 %v407
      %v425 = vunpack.c.l.bf16 %v408
      %v426 = vunpack.c.l.bf16 %v409
      %v427 = vunpack.c.l.bf16 %v410
      %v428 = vunpack.c.l.bf16 %v411
      %v429 = vunpack.c.l.bf16 %v412
      %v430 = vunpack.c.l.bf16 %v413
      %v431 = vunpack.c.l.bf16 %v414
      %v432 = vunpack.c.l.bf16 %v415
      %v433 = vunpack.c.l.bf16 %v416
      %v434 = vunpack.c.l.bf16 %v417
      %v435 = vunpack.c.l.bf16 %v418
      %v436 = vunpack.c.l.bf16 %v419
      %v437 = vunpack.c.l.bf16 %v420
      %v438 = vunpack.c.l.bf16 %v421
      %v439 = vunpack.c.l.bf16 %v422
      %v441 = vperm.slane %v423, 0
      %v443 = vmul.f32 %v424, %v441
      %v444 = vmul.f32 %v425, %v441
      %v445 = vmul.f32 %v426, %v441
      %v446 = vmul.f32 %v427, %v441
      %v447 = vmul.f32 %v428, %v441
      %v448 = vmul.f32 %v429, %v441
      %v449 = vmul.f32 %v430, %v441
      %v450 = vmul.f32 %v431, %v441
      %v451 = vmul.f32 %v432, %v441
      %v452 = vmul.f32 %v433, %v441
      %v453 = vmul.f32 %v434, %v441
      %v454 = vmul.f32 %v435, %v441
      %v455 = vmul.f32 %v436, %v441
      %v456 = vmul.f32 %v437, %v441
      %v457 = vmul.f32 %v438, %v441
      %v458 = vmul.f32 %v439, %v441
      %v459 = vadd.f32 %v391, %v443
      %v460 = vadd.f32 %v392, %v444
      %v461 = vadd.f32 %v393, %v445
      %v462 = vadd.f32 %v394, %v446
      %v463 = vadd.f32 %v395, %v447
      %v464 = vadd.f32 %v396, %v448
      %v465 = vadd.f32 %v397, %v449
      %v466 = vadd.f32 %v398, %v450
      %v467 = vadd.f32 %v399, %v451
      %v468 = vadd.f32 %v400, %v452
      %v469 = vadd.f32 %v401, %v453
      %v470 = vadd.f32 %v402, %v454
      %v471 = vadd.f32 %v403, %v455
      %v472 = vadd.f32 %v404, %v456
      %v473 = vadd.f32 %v405, %v457
      %v474 = vadd.f32 %v406, %v458
      %v475 = vld [vmem:[%s5] sm:$0x1]
      %v477 = vperm.slane %v475, 0
      %v479 = vadd.f32 %v459, %v477
      %v480 = vadd.f32 %v460, %v477
      %v481 = vadd.f32 %v461, %v477
      %v482 = vadd.f32 %v462, %v477
      %v483 = vadd.f32 %v463, %v477
      %v484 = vadd.f32 %v464, %v477
      %v485 = vadd.f32 %v465, %v477
      %v486 = vadd.f32 %v466, %v477
      %v487 = vadd.f32 %v467, %v477
      %v488 = vadd.f32 %v468, %v477
      %v489 = vadd.f32 %v469, %v477
      %v490 = vadd.f32 %v470, %v477
      %v491 = vadd.f32 %v471, %v477
      %v492 = vadd.f32 %v472, %v477
      %v493 = vadd.f32 %v473, %v477
      %v494 = vadd.f32 %v474, %v477
      %v495 = vmax.f32 %v479, 0.0
      %v496 = vmax.f32 %v480, 0.0
      %v497 = vmax.f32 %v481, 0.0
      %v498 = vmax.f32 %v482, 0.0
      %v499 = vmax.f32 %v483, 0.0
      %v500 = vmax.f32 %v484, 0.0
      %v501 = vmax.f32 %v485, 0.0
      %v502 = vmax.f32 %v486, 0.0
      %v503 = vmax.f32 %v487, 0.0
      %v504 = vmax.f32 %v488, 0.0
      %v505 = vmax.f32 %v489, 0.0
      %v506 = vmax.f32 %v490, 0.0
      %v507 = vmax.f32 %v491, 0.0
      %v508 = vmax.f32 %v492, 0.0
      %v509 = vmax.f32 %v493, 0.0
      %v510 = vmax.f32 %v494, 0.0
      %vm511 = vcmask 64512
      %512 = vst.msk [vmem:[%s333] sm:$0xff] %vm511, %v495
      %513 = vst.msk [vmem:[%s333 + $0x8] sm:$0xff] %vm511, %v496
      %514 = vst.msk [vmem:[%s333 + $0x10] sm:$0xff] %vm511, %v497
      %515 = vst.msk [vmem:[%s333 + $0x18] sm:$0xff] %vm511, %v498
      %516 = vst.msk [vmem:[%s333 + $0x20] sm:$0xff] %vm511, %v499
      %517 = vst.msk [vmem:[%s333 + $0x28] sm:$0xff] %vm511, %v500
      %518 = vst.msk [vmem:[%s333 + $0x30] sm:$0xff] %vm511, %v501
      %519 = vst.msk [vmem:[%s333 + $0x38] sm:$0xff] %vm511, %v502
      %520 = vst.msk [vmem:[%s333 + $0x40] sm:$0xff] %vm511, %v503
      %521 = vst.msk [vmem:[%s333 + $0x48] sm:$0xff] %vm511, %v504
      %522 = vst.msk [vmem:[%s333 + $0x50] sm:$0xff] %vm511, %v505
      %523 = vst.msk [vmem:[%s333 + $0x58] sm:$0xff] %vm511, %v506
      %524 = vst.msk [vmem:[%s333 + $0x60] sm:$0xff] %vm511, %v507
      %525 = vst.msk [vmem:[%s333 + $0x68] sm:$0xff] %vm511, %v508
      %526 = vst.msk [vmem:[%s333 + $0x70] sm:$0xff] %vm511, %v509
      %527 = vst.msk [vmem:[%s333 + $0x78] sm:$0xff] %vm511, %v510
      %s528 = smul.u32 8, %s22
      %p529 = scmp.lt.s32.totalorder %s21, 1
      %s530 = scalar_select %p529, %s21, 1
      %p531 = scmp.lt.s32.totalorder %s528, 15
      %s532 = scalar_select %p531, %s528, 15
      %s533 = smul.addr %s532, 2
      %s534 = smul.addr %s530, 32
      %s535 = sadd.s32 %s533, %s534
      %s536 = smul.addr %s535, 8
      %s537 = scalar_lea.vmem %s6, %s536
      // Predicated region
      $region45: #{bottleneck_psp_forward.7} parent=43 // pred_check
        %p538 = pneg %p189
      $region46: #{bottleneck_psp_forward.7} parent=43 // pred_check_branch
        %540 = sbr.rel (%p538) target = $region48
      $region47: #{bottleneck_psp_forward.7} parent=43 // pred_region
        %s541 = smul.u32 8, %s22
      $region48: #{bottleneck_psp_forward.7} parent=43 // pred_fallthru
        _
    $region44: #{bottleneck_psp_forward.7} parent=5 // pred_fallthru
      _
    %p542 = scmp.le.s32.totalorder 2, %s12
    // Predicated region
    $region49: #{bottleneck_psp_forward.7} parent=5 // pred_check
      %p543 = pneg %p542
    $region50: #{bottleneck_psp_forward.7} parent=5 // pred_check_branch
      %545 = sbr.rel (%p543) target = $region52
    $region51: #{bottleneck_psp_forward.7} parent=5 // pred_region
      %s546 = ssub.s32 %s12, 2
      // Predicated region
      $region53: #{bottleneck_psp_forward.7} parent=51 // pred_check
        %p547 = pneg %p195
      $region54: #{bottleneck_psp_forward.7} parent=51 // pred_check_branch
        %549 = sbr.rel (%p547) target = $region56
      $region55: #{bottleneck_psp_forward.7} parent=51 // pred_region
        %s550 = smul.u32 8, %s24
        %p551 = scmp.lt.s32.totalorder %s23, 1
        %s552 = scalar_select %p551, %s23, 1
        %p553 = scmp.lt.s32.totalorder %s550, 15
        %s554 = scalar_select %p553, %s550, 15
        %s555 = smul.addr %s554, 2
        %s556 = smul.addr %s552, 32
        %s557 = sadd.s32 %s555, %s556
        %s558 = smul.addr %s557, 8
        %s559 = scalar_lea.vmem %s6, %s558
      $region56: #{bottleneck_psp_forward.7} parent=51 // pred_fallthru
        _
    $region52: #{bottleneck_psp_forward.7} parent=5 // pred_fallthru
      _
  $region6: #{bottleneck_psp_forward.7} parent=0 // loop_footer
    %s16 = sadd.s32 1, %s12
  $region7: #{bottleneck_psp_forward.7} parent=0 // loop_footer_branch
    %11 = sbr.rel target = $region3
  $region8: #{bottleneck_psp_forward.7} parent=0 // loop_exit
    _

// kernel: bottleneck_psp_forward.5
$region0: #{bottleneck_psp_forward.5}
  #allocation0 [shape = 'u32[]', space=smem, size = 0x4, offset = 0x4, fixed_abs, tag = 'smem constant byte address 0x4 - core index']
  #allocation1 [shape = 'u32[72,128]{1,0:T(1,128)}', space=vmem, size = 0x9000, scoped, tag = 'internal scratch']
  #allocation2 [shape = 'bf16[18,33,4]{2,1,0:T(8,128)(2,1)}', space=vmem, size = 0x2d000, scoped, tag = 'scratch operand']
  %s0 = inlined_call_operand.vmem [shape: bf16[2,16,16,4], index: 0, kind: input, shape index: {}]
  %s1 = inlined_call_operand.vmem [shape: bf16[9,4,4], index: 1, kind: input, shape index: {}]
  %s2 = inlined_call_operand.vmem [shape: f32[1,4], index: 2, kind: input, shape index: {}]
  %s3 = inlined_call_operand.vmem [shape: f32[1,4], index: 3, kind: input, shape index: {}]
  %s4 = inlined_call_operand.vmem [shape: bf16[2,16,16,4], index: 4, kind: output, shape index: {0}]
  %s5 = inlined_call_operand.vmem [shape: f32[4,8,4], index: 5, kind: output, shape index: {1}]
  %6 = xla_tuple %s4, %s5
  %s7 = sld [smem:[#allocation0]]
  $region61: #{bottleneck_psp_forward.5} parent=0
    _
  %s9 = ssub.s32 1, %s7
  %s10 = scalar_select 0, %s9, %s7
  loop: start=0, step=1, limit=6
  $region2: #{bottleneck_psp_forward.5} parent=0 // loop_pre_header
    _
  $region3: #{bottleneck_psp_forward.5} parent=0 // loop_header
    %s12 = sphi 0, %s16
    %p13 = scmp.ge.s32.totalorder %s12, 6
    %s19 = sphi 0, %s31
    %s20 = sphi 0, %s27
    %s21 = sphi 0, %s19
    %s22 = sphi 0, %s20
    %s23 = sphi 0, %s21
    %s24 = sphi 0, %s22
    %s34 = sphi 0, %s36
    %s37 = sphi 0, %s34
    %s38 = sphi 0, %s37
    %s54 = sphi 0, %s38
    %s58 = sphi 0, %s58
    %s60 = sphi 0, %s58
    %s61 = sphi 0, %s60
    %s75 = sphi 0, %s61
    %s79 = sphi 0, %s79
    %s81 = sphi 0, %s79
    %s82 = sphi 0, %s81
    %s96 = sphi 0, %s82
    %s100 = sphi 0, %s100
    %s102 = sphi 0, %s100
    %s103 = sphi 0, %s102
    %s117 = sphi 0, %s103
    %s125 = sphi 0, %s127
    %s128 = sphi 0, %s125
    %s129 = sphi 0, %s128
    %s145 = sphi 0, %s129
    %s155 = sphi 0, %s157
    %s158 = sphi 0, %s155
    %s159 = sphi 0, %s158
    %s175 = sphi 0, %s159
  $region4: #{bottleneck_psp_forward.5} parent=0 // loop_header_branch
    %15 = sbr.rel (%p13) target = $region8
  $region5: #{bottleneck_psp_forward.5} parent=0 // loop_body
    %s17 = ssub.s32 %s12, 1
    %s18 = ssub.s32 %s12, 2
    %s25 = sadd.s32 1, %s20
    %p26 = scmp.ge.s32.totalorder %s25, 2
    %s27 = scalar_select %p26, 0, %s25
    %s28 = sadd.s32 1, %s19
    %s29 = scalar_select %p26, %s28, %s19
    %p30 = scmp.ge.s32.totalorder %s29, 2
    %s31 = scalar_select %p30, 0, %s29
    %s32 = ssub.s32 %s19, %s31
    %p33 = scmp.eq.s32.totalorder %s32, 0
    %s35 = sadd.s32 %s34, 1
    %s36 = scalar_select %p33, %s34, %s35
    %p39 = pneg %p33
    %p40 = scmp.eq.s32.totalorder %s12, 3
    %p41 = por %p39, %p40
    %p42 = scmp.ne.s32.totalorder %s34, %s37
    %p43 = scmp.eq.s32.totalorder %s12, 0
    %p44 = por %p42, %p43
    %p45 = scmp.ne.s32.totalorder %s34, %s37
    %p46 = scmp.eq.s32.totalorder %s17, 3
    %p47 = por %p45, %p46
    %p48 = scmp.ne.s32.totalorder %s37, %s38
    %p49 = scmp.eq.s32.totalorder %s17, 0
    %p50 = por %p48, %p49
    %p51 = scmp.ne.s32.totalorder %s37, %s38
    %p52 = scmp.eq.s32.totalorder %s18, 3
    %p53 = por %p51, %p52
    %p55 = scmp.ne.s32.totalorder %s38, %s54
    %p56 = scmp.eq.s32.totalorder %s18, 0
    %p57 = por %p55, %p56
    %s59 = sadd.s32 %s58, 1
    %p62 = scmp.eq.s32.totalorder %s12, 3
    %p63 = scmp.ne.s32.totalorder %s58, %s60
    %p64 = scmp.eq.s32.totalorder %s12, 0
    %p65 = por %p63, %p64
    %p66 = scmp.ne.s32.totalorder %s58, %s60
    %p67 = scmp.eq.s32.totalorder %s17, 3
    %p68 = por %p66, %p67
    %p69 = scmp.ne.s32.totalorder %s60, %s61
    %p70 = scmp.eq.s32.totalorder %s17, 0
    %p71 = por %p69, %p70
    %p72 = scmp.ne.s32.totalorder %s60, %s61
    %p73 = scmp.eq.s32.totalorder %s18, 3
    %p74 = por %p72, %p73
    %p76 = scmp.ne.s32.totalorder %s61, %s75
    %p77 = scmp.eq.s32.totalorder %s18, 0
    %p78 = por %p76, %p77
    %s80 = sadd.s32 %s79, 1
    %p83 = scmp.eq.s32.totalorder %s12, 3
    %p84 = scmp.ne.s32.totalorder %s79, %s81
    %p85 = scmp.eq.s32.totalorder %s12, 0
    %p86 = por %p84, %p85
    %p87 = scmp.ne.s32.totalorder %s79, %s81
    %p88 = scmp.eq.s32.totalorder %s17, 3
    %p89 = por %p87, %p88
    %p90 = scmp.ne.s32.totalorder %s81, %s82
    %p91 = scmp.eq.s32.totalorder %s17, 0
    %p92 = por %p90, %p91
    %p93 = scmp.ne.s32.totalorder %s81, %s82
    %p94 = scmp.eq.s32.totalorder %s18, 3
    %p95 = por %p93, %p94
    %p97 = scmp.ne.s32.totalorder %s82, %s96
    %p98 = scmp.eq.s32.totalorder %s18, 0
    %p99 = por %p97, %p98
    %s101 = sadd.s32 %s100, 1
    %p104 = scmp.eq.s32.totalorder %s12, 3
    %p105 = scmp.ne.s32.totalorder %s100, %s102
    %p106 = scmp.eq.s32.totalorder %s12, 0
    %p107 = por %p105, %p106
    %p108 = scmp.ne.s32.totalorder %s100, %s102
    %p109 = scmp.eq.s32.totalorder %s17, 3
    %p110 = por %p108, %p109
    %p111 = scmp.ne.s32.totalorder %s102, %s103
    %p112 = scmp.eq.s32.totalorder %s17, 0
    %p113 = por %p111, %p112
    %p114 = scmp.ne.s32.totalorder %s102, %s103
    %p115 = scmp.eq.s32.totalorder %s18, 3
    %p116 = por %p114, %p115
    %p118 = scmp.ne.s32.totalorder %s103, %s117
    %p119 = scmp.eq.s32.totalorder %s18, 0
    %p120 = por %p118, %p119
    %s121 = ssub.s32 %s19, %s31
    %s122 = ssub.s32 %s20, %s27
    %s123 = sor.u32 %s121, %s122
    %p124 = scmp.eq.s32.totalorder %s123, 0
    %s126 = sadd.s32 %s125, 1
    %s127 = scalar_select %p124, %s125, %s126
    %p130 = pneg %p124
    %p131 = scmp.eq.s32.totalorder %s12, 3
    %p132 = por %p130, %p131
    %p133 = scmp.ne.s32.totalorder %s125, %s128
    %p134 = scmp.eq.s32.totalorder %s12, 0
    %p135 = por %p133, %p134
    %p136 = scmp.ne.s32.totalorder %s125, %s128
    %p137 = scmp.eq.s32.totalorder %s17, 3
    %p138 = por %p136, %p137
    %p139 = scmp.ne.s32.totalorder %s128, %s129
    %p140 = scmp.eq.s32.totalorder %s17, 0
    %p141 = por %p139, %p140
    %p142 = scmp.ne.s32.totalorder %s128, %s129
    %p143 = scmp.eq.s32.totalorder %s18, 3
    %p144 = por %p142, %p143
    %p146 = scmp.ne.s32.totalorder %s129, %s145
    %p147 = scmp.eq.s32.totalorder %s18, 0
    %p148 = por %p146, %p147
    %s149 = smul.u32 %s19, 2
    %s150 = sadd.s32 %s149, %s20
    %s151 = smul.u32 %s31, 2
    %s152 = sadd.s32 %s151, %s27
    %s153 = ssub.s32 %s150, %s152
    %p154 = scmp.eq.s32.totalorder %s153, 0
    %s156 = sadd.s32 %s155, 1
    %s157 = scalar_select %p154, %s155, %s156
    %p160 = pneg %p154
    %p161 = scmp.eq.s32.totalorder %s12, 3
    %p162 = por %p160, %p161
    %p163 = scmp.ne.s32.totalorder %s155, %s158
    %p164 = scmp.eq.s32.totalorder %s12, 0
    %p165 = por %p163, %p164
    %p166 = scmp.ne.s32.totalorder %s155, %s158
    %p167 = scmp.eq.s32.totalorder %s17, 3
    %p168 = por %p166, %p167
    %p169 = scmp.ne.s32.totalorder %s158, %s159
    %p170 = scmp.eq.s32.totalorder %s17, 0
    %p171 = por %p169, %p170
    %p172 = scmp.ne.s32.totalorder %s158, %s159
    %p173 = scmp.eq.s32.totalorder %s18, 3
    %p174 = por %p172, %p173
    %p176 = scmp.ne.s32.totalorder %s159, %s175
    %p177 = scmp.eq.s32.totalorder %s18, 0
    %p178 = por %p176, %p177
    %p179 = scmp.le.s32.totalorder 1, %s12
    %p180 = scmp.lt.s32.totalorder %s12, 5
    %p181 = pnand %p179, %p180
    %p182 = pneg %p181
    // Predicated region
    $region9: #{bottleneck_psp_forward.5} parent=5 // pred_check
      _
    $region10: #{bottleneck_psp_forward.5} parent=5 // pred_check_branch
      %184 = sbr.rel (%p181) target = $region12
    $region11: #{bottleneck_psp_forward.5} parent=5 // pred_region
      %s185 = ssub.s32 %s12, 1
      // Predicated region
      $region13: #{bottleneck_psp_forward.5} parent=11 // pred_check
        %p186 = pneg %p71
      $region14: #{bottleneck_psp_forward.5} parent=11 // pred_check_branch
        %188 = sbr.rel (%p186) target = $region16
      $region15: #{bottleneck_psp_forward.5} parent=11 // pred_region
        _
      $region16: #{bottleneck_psp_forward.5} parent=11 // pred_fallthru
        _
      // Predicated region
      $region17: #{bottleneck_psp_forward.5} parent=11 // pred_check
        %p189 = pneg %p92
      $region18: #{bottleneck_psp_forward.5} parent=11 // pred_check_branch
        %191 = sbr.rel (%p189) target = $region20
      $region19: #{bottleneck_psp_forward.5} parent=11 // pred_region
        _
      $region20: #{bottleneck_psp_forward.5} parent=11 // pred_fallthru
        _
      // Predicated region
      $region21: #{bottleneck_psp_forward.5} parent=11 // pred_check
        %p192 = pneg %p113
      $region22: #{bottleneck_psp_forward.5} parent=11 // pred_check_branch
        %194 = sbr.rel (%p192) target = $region24
      $region23: #{bottleneck_psp_forward.5} parent=11 // pred_region
        _
      $region24: #{bottleneck_psp_forward.5} parent=11 // pred_fallthru
        _
    $region12: #{bottleneck_psp_forward.5} parent=5 // pred_fallthru
      _
    %p195 = scmp.lt.s32.totalorder %s12, 4
    // Predicated region
    $region25: #{bottleneck_psp_forward.5} parent=5 // pred_check
      %p196 = pneg %p195
    $region26: #{bottleneck_psp_forward.5} parent=5 // pred_check_branch
      %198 = sbr.rel (%p196) target = $region28
    $region27: #{bottleneck_psp_forward.5} parent=5 // pred_region
      // Predicated region
      $region29: #{bottleneck_psp_forward.5} parent=27 // pred_check
        %p199 = pneg %p44
      $region30: #{bottleneck_psp_forward.5} parent=27 // pred_check_branch
        %201 = sbr.rel (%p199) target = $region32
      $region31: #{bottleneck_psp_forward.5} parent=27 // pred_region
        %p202 = scmp.lt.s32.totalorder %s19, 1
        %s203 = scalar_select %p202, %s19, 1
        %s204 = smul.addr %s203, 32
        %s205 = smul.addr %s204, 4
        %s206 = scalar_lea.vmem %s0, %s205
      $region32: #{bottleneck_psp_forward.5} parent=27 // pred_fallthru
        _
    $region28: #{bottleneck_psp_forward.5} parent=5 // pred_fallthru
      _
    %p207 = scmp.le.s32.totalorder 1, %s12
    %p208 = scmp.lt.s32.totalorder %s12, 5
    %p209 = pnand %p207, %p208
    %p210 = pneg %p209
    // Predicated region
    $region33: #{bottleneck_psp_forward.5} parent=5 // pred_check
      _
    $region34: #{bottleneck_psp_forward.5} parent=5 // pred_check_branch
      %212 = sbr.rel (%p209) target = $region36
    $region35: #{bottleneck_psp_forward.5} parent=5 // pred_region
      %s213 = ssub.s32 %s12, 1
      %p214 = scmp.lt.s32.totalorder %s21, 1
      %s215 = scalar_select %p214, %s21, 1
      %s216 = smul.addr %s215, 32
      %s217 = smul.addr %s216, 4
      %s218 = scalar_lea.vmem %s0, %s217
      %p219 = pneg %p50
      %p220 = pneg %p47
      %p221 = pneg %p71
      %p222 = pneg %p68
      %p223 = pneg %p92
      %p224 = pneg %p89
      %p225 = pneg %p113
      %p226 = pneg %p110
      %p227 = pneg %p141
      %p228 = pneg %p138
      %s229 = smul.u32 8, %s22
      %p230 = scmp.lt.s32.totalorder %s21, 1
      %s231 = scalar_select %p230, %s21, 1
      %p232 = scmp.lt.s32.totalorder %s229, 15
      %s233 = scalar_select %p232, %s229, 15
      %s234 = smul.addr %s233, 2
      %s235 = smul.addr %s231, 32
      %s236 = sadd.s32 %s234, %s235
      %s237 = smul.addr %s236, 4
      %s238 = scalar_lea.vmem %s4, %s237
      %p239 = pneg %p171
      %p240 = pneg %p168
      %s241 = smul.u32 %s21, 2
      %s242 = sadd.s32 %s241, %s22
      %p243 = scmp.lt.s32.totalorder %s242, 3
      %s244 = scalar_select %p243, %s242, 3
      %s245 = smul.addr %s244, 8
      %s246 = scalar_lea.vmem %s5, %s245
      %p247 = scmp.lt.s32.totalorder %s21, 1
      %s248 = scalar_select %p247, %s21, 1
      %s249 = smul.addr %s248, 32
      %s250 = smul.addr %s249, 4
      %s251 = scalar_lea.vmem %s0, %s250
      %s252 = smul.u32 8, %s22
      %p253 = scmp.lt.s32.totalorder %s21, 1
      %s254 = scalar_select %p253, %s21, 1
      %p255 = scmp.lt.s32.totalorder %s252, 15
      %s256 = scalar_select %p255, %s252, 15
      %s257 = smul.addr %s256, 2
      %s258 = smul.addr %s254, 32
      %s259 = sadd.s32 %s257, %s258
      %s260 = smul.addr %s259, 4
      %s261 = scalar_lea.vmem %s4, %s260
      %s262 = smul.u32 8, %s22
      %s263 = smul.u32 %s21, 2
      %s264 = sadd.s32 %s263, %s22
      %p265 = scmp.lt.s32.totalorder %s264, 3
      %s266 = scalar_select %p265, %s264, 3
      %s267 = smul.addr %s266, 8
      %s268 = scalar_lea.vmem %s5, %s267
      %s269 = smul.u32 %s21, 2
      %s270 = sadd.s32 %s269, %s22
      %p272 = scmp.eq.s32.totalorder %s22, 0
      // Predicated region
      $region37: #{bottleneck_psp_forward.5} parent=35 // pred_check
        %p273 = pneg %p272
      $region38: #{bottleneck_psp_forward.5} parent=35 // pred_check_branch
        %275 = sbr.rel (%p273) target = $region40
      $region39: #{bottleneck_psp_forward.5} parent=35 // pred_region
        %vm276 = vcmask 27648
        %277 = vst.msk [vmem:[#allocation2] sm:$0xf] %vm276, 0
        %278 = vst.msk [vmem:[#allocation2 + $0x4] sm:$0xf] %vm276, 0
        %279 = vst.msk [vmem:[#allocation2 + $0x8] sm:$0xf] %vm276, 0
        %280 = vst.msk [vmem:[#allocation2 + $0xc] sm:$0xf] %vm276, 0
        %vm281 = vcmask 24576
        %vm282 = vsmask.f32 256
        %vm283 = vmand %vm281, %vm282
        %v284 = vld [vmem:[#allocation2 + $0x10] sm:$0x1]
        %v285 = vsel %vm283, 0, %v284
        %286 = vst [vmem:[#allocation2 + $0x10] sm:$0x1] %v285
        %s287 = scalar_lea.vmem [#allocation2], 340
        %288 = vst.msk [vmem:[%s287] sm:$0xf] %vm276, 0
        %289 = vst.msk [vmem:[%s287 + $0x4] sm:$0xf] %vm276, 0
        %290 = vst.msk [vmem:[%s287 + $0x8] sm:$0xf] %vm276, 0
        %291 = vst.msk [vmem:[%s287 + $0xc] sm:$0xf] %vm276, 0
        %v292 = vld [vmem:[%s287 + $0x10] sm:$0x1]
        %v293 = vsel %vm283, 0, %v292
        %294 = vst [vmem:[%s287 + $0x10] sm:$0x1] %v293
        %s295 = scalar_lea.vmem [#allocation2], 20
        %296 = vst.msk [vmem:[%s295] sm:$0xf] %vm276, 0
        %297 = vst.msk [vmem:[%s295 + $0x4] sm:$0xf] %vm276, 0
        %298 = vst.msk [vmem:[%s295 + $0x14] sm:$0xf] %vm276, 0
        %299 = vst.msk [vmem:[%s295 + $0x18] sm:$0xf] %vm276, 0
        %300 = vst.msk [vmem:[%s295 + $0x28] sm:$0xf] %vm276, 0
        %301 = vst.msk [vmem:[%s295 + $0x2c] sm:$0xf] %vm276, 0
        %302 = vst.msk [vmem:[%s295 + $0x3c] sm:$0xf] %vm276, 0
        %303 = vst.msk [vmem:[%s295 + $0x40] sm:$0xf] %vm276, 0
        %304 = vst.msk [vmem:[%s295 + $0x50] sm:$0xf] %vm276, 0
        %305 = vst.msk [vmem:[%s295 + $0x54] sm:$0xf] %vm276, 0
        %306 = vst.msk [vmem:[%s295 + $0x64] sm:$0xf] %vm276, 0
        %307 = vst.msk [vmem:[%s295 + $0x68] sm:$0xf] %vm276, 0
        %308 = vst.msk [vmem:[%s295 + $0x78] sm:$0xf] %vm276, 0
        %309 = vst.msk [vmem:[%s295 + $0x7c] sm:$0xf] %vm276, 0
        %310 = vst.msk [vmem:[%s295 + $0x8c] sm:$0xf] %vm276, 0
        %311 = vst.msk [vmem:[%s295 + $0x90] sm:$0xf] %vm276, 0
        %312 = vst.msk [vmem:[%s295 + $0xa0] sm:$0xf] %vm276, 0
        %313 = vst.msk [vmem:[%s295 + $0xa4] sm:$0xf] %vm276, 0
        %314 = vst.msk [vmem:[%s295 + $0xb4] sm:$0xf] %vm276, 0
        %315 = vst.msk [vmem:[%s295 + $0xb8] sm:$0xf] %vm276, 0
        %316 = vst.msk [vmem:[%s295 + $0xc8] sm:$0xf] %vm276, 0
        %317 = vst.msk [vmem:[%s295 + $0xcc] sm:$0xf] %vm276, 0
        %318 = vst.msk [vmem:[%s295 + $0xdc] sm:$0xf] %vm276, 0
        %319 = vst.msk [vmem:[%s295 + $0xe0] sm:$0xf] %vm276, 0
        %320 = vst.msk [vmem:[%s295 + $0xf0] sm:$0xf] %vm276, 0
        %321 = vst.msk [vmem:[%s295 + $0xf4] sm:$0xf] %vm276, 0
        %322 = vst.msk [vmem:[%s295 + $0x104] sm:$0xf] %vm276, 0
        %323 = vst.msk [vmem:[%s295 + $0x108] sm:$0xf] %vm276, 0
        %324 = vst.msk [vmem:[%s295 + $0x118] sm:$0xf] %vm276, 0
        %325 = vst.msk [vmem:[%s295 + $0x11c] sm:$0xf] %vm276, 0
        %326 = vst.msk [vmem:[%s295 + $0x12c] sm:$0xf] %vm276, 0
        %327 = vst.msk [vmem:[%s295 + $0x130] sm:$0xf] %vm276, 0
        %v328 = vld [vmem:[%s295 + $0x10] sm:$0x1]
        %v329 = vsel %vm283, 0, %v328
        %330 = vst [vmem:[%s295 + $0x10] sm:$0x1] %v329
        %v331 = vld [vmem:[%s295 + $0x24] sm:$0x1]
        %v332 = vsel %vm283, 0, %v331
        %333 = vst [vmem:[%s295 + $0x24] sm:$0x1] %v332
        %v334 = vld [vmem:[%s295 + $0x38] sm:$0x1]
        %v335 = vsel %vm283, 0, %v334
        %336 = vst [vmem:[%s295 + $0x38] sm:$0x1] %v335
        %v337 = vld [vmem:[%s295 + $0x4c] sm:$0x1]
        %v338 = vsel %vm283, 0, %v337
        %339 = vst [vmem:[%s295 + $0x4c] sm:$0x1] %v338
        %v340 = vld [vmem:[%s295 + $0x60] sm:$0x1]
        %v341 = vsel %vm283, 0, %v340
        %342 = vst [vmem:[%s295 + $0x60] sm:$0x1] %v341
        %v343 = vld [vmem:[%s295 + $0x74] sm:$0x1]
        %v344 = vsel %vm283, 0, %v343
        %345 = vst [vmem:[%s295 + $0x74] sm:$0x1] %v344
        %v346 = vld [vmem:[%s295 + $0x88] sm:$0x1]
        %v347 = vsel %vm283, 0, %v346
        %348 = vst [vmem:[%s295 + $0x88] sm:$0x1] %v347
        %v349 = vld [vmem:[%s295 + $0x9c] sm:$0x1]
        %v350 = vsel %vm283, 0, %v349
        %351 = vst [vmem:[%s295 + $0x9c] sm:$0x1] %v350
        %v352 = vld [vmem:[%s295 + $0xb0] sm:$0x1]
        %v353 = vsel %vm283, 0, %v352
        %354 = vst [vmem:[%s295 + $0xb0] sm:$0x1] %v353
        %v355 = vld [vmem:[%s295 + $0xc4] sm:$0x1]
        %v356 = vsel %vm283, 0, %v355
        %357 = vst [vmem:[%s295 + $0xc4] sm:$0x1] %v356
        %v358 = vld [vmem:[%s295 + $0xd8] sm:$0x1]
        %v359 = vsel %vm283, 0, %v358
        %360 = vst [vmem:[%s295 + $0xd8] sm:$0x1] %v359
        %v361 = vld [vmem:[%s295 + $0xec] sm:$0x1]
        %v362 = vsel %vm283, 0, %v361
        %363 = vst [vmem:[%s295 + $0xec] sm:$0x1] %v362
        %v364 = vld [vmem:[%s295 + $0x100] sm:$0x1]
        %v365 = vsel %vm283, 0, %v364
        %366 = vst [vmem:[%s295 + $0x100] sm:$0x1] %v365
        %v367 = vld [vmem:[%s295 + $0x114] sm:$0x1]
        %v368 = vsel %vm283, 0, %v367
        %369 = vst [vmem:[%s295 + $0x114] sm:$0x1] %v368
        %v370 = vld [vmem:[%s295 + $0x128] sm:$0x1]
        %v371 = vsel %vm283, 0, %v370
        %372 = vst [vmem:[%s295 + $0x128] sm:$0x1] %v371
        %v373 = vld [vmem:[%s295 + $0x13c] sm:$0x1]
        %v374 = vsel %vm283, 0, %v373
        %375 = vst [vmem:[%s295 + $0x13c] sm:$0x1] %v374
        %v376 = vld [vmem:[%s251] sm:$0xf]
        %v377 = vld [vmem:[%s251 + $0x4] sm:$0xf]
        %v378 = vld [vmem:[%s251 + $0x8] sm:$0xf]
        %v379 = vld [vmem:[%s251 + $0xc] sm:$0xf]
        %v380 = vld [vmem:[%s251 + $0x10] sm:$0xf]
        %v381 = vld [vmem:[%s251 + $0x14] sm:$0xf]
        %v382 = vld [vmem:[%s251 + $0x18] sm:$0xf]
        %v383 = vld [vmem:[%s251 + $0x1c] sm:$0xf]
        %v384 = vld [vmem:[%s251 + $0x20] sm:$0xf]
        %v385 = vld [vmem:[%s251 + $0x24] sm:$0xf]
        %v386 = vld [vmem:[%s251 + $0x28] sm:$0xf]
        %v387 = vld [vmem:[%s251 + $0x2c] sm:$0xf]
        %v388 = vld [vmem:[%s251 + $0x30] sm:$0xf]
        %v389 = vld [vmem:[%s251 + $0x34] sm:$0xf]
        %v390 = vld [vmem:[%s251 + $0x38] sm:$0xf]
        %v391 = vld [vmem:[%s251 + $0x3c] sm:$0xf]
        %v392 = vld [vmem:[%s251 + $0x40] sm:$0xf]
        %v393 = vld [vmem:[%s251 + $0x44] sm:$0xf]
        %v394 = vld [vmem:[%s251 + $0x48] sm:$0xf]
        %v395 = vld [vmem:[%s251 + $0x4c] sm:$0xf]
        %v396 = vld [vmem:[%s251 + $0x50] sm:$0xf]
        %v397 = vld [vmem:[%s251 + $0x54] sm:$0xf]
        %v398 = vld [vmem:[%s251 + $0x58] sm:$0xf]
        %v399 = vld [vmem:[%s251 + $0x5c] sm:$0xf]
        %v400 = vld [vmem:[%s251 + $0x60] sm:$0xf]
        %v401 = vld [vmem:[%s251 + $0x64] sm:$0xf]
        %v402 = vld [vmem:[%s251 + $0x68] sm:$0xf]
        %v403 = vld [vmem:[%s251 + $0x6c] sm:$0xf]
        %v404 = vld [vmem:[%s251 + $0x70] sm:$0xf]
        %v405 = vld [vmem:[%s251 + $0x74] sm:$0xf]
        %v406 = vld [vmem:[%s251 + $0x78] sm:$0xf]
        %v407 = vld [vmem:[%s251 + $0x7c] sm:$0xf]
        %v408 = vld [vmem:[%s2] sm:$0x1]
        %v409 = vunpack.c.l.bf16 %v376
        %v410 = vunpack.c.l.bf16 %v377
        %v411 = vunpack.c.l.bf16 %v378
        %v412 = vunpack.c.l.bf16 %v379
        %v413 = vunpack.c.l.bf16 %v380
        %v414 = vunpack.c.l.bf16 %v381
        %v415 = vunpack.c.l.bf16 %v382
        %v416 = vunpack.c.l.bf16 %v383
        %v417 = vunpack.c.l.bf16 %v384
        %v418 = vunpack.c.l.bf16 %v385
        %v419 = vunpack.c.l.bf16 %v386
        %v420 = vunpack.c.l.bf16 %v387
        %v421 = vunpack.c.l.bf16 %v388
        %v422 = vunpack.c.l.bf16 %v389
        %v423 = vunpack.c.l.bf16 %v390
        %v424 = vunpack.c.l.bf16 %v391
        %v425 = vunpack.c.l.bf16 %v392
        %v426 = vunpack.c.l.bf16 %v393
        %v427 = vunpack.c.l.bf16 %v394
        %v428 = vunpack.c.l.bf16 %v395
        %v429 = vunpack.c.l.bf16 %v396
        %v430 = vunpack.c.l.bf16 %v397
        %v431 = vunpack.c.l.bf16 %v398
        %v432 = vunpack.c.l.bf16 %v399
        %v433 = vunpack.c.l.bf16 %v400
        %v434 = vunpack.c.l.bf16 %v401
        %v435 = vunpack.c.l.bf16 %v402
        %v436 = vunpack.c.l.bf16 %v403
        %v437 = vunpack.c.l.bf16 %v404
        %v438 = vunpack.c.l.bf16 %v405
        %v439 = vunpack.c.l.bf16 %v406
        %v440 = vunpack.c.l.bf16 %v407
        %v442 = vperm.slane %v408, 0
        %v444 = vmul.f32 %v409, %v442
        %v445 = vmul.f32 %v410, %v442
        %v446 = vmul.f32 %v411, %v442
        %v447 = vmul.f32 %v412, %v442
        %v448 = vmul.f32 %v413, %v442
        %v449 = vmul.f32 %v414, %v442
        %v450 = vmul.f32 %v415, %v442
        %v451 = vmul.f32 %v416, %v442
        %v452 = vmul.f32 %v417, %v442
        %v453 = vmul.f32 %v418, %v442
        %v454 = vmul.f32 %v419, %v442
        %v455 = vmul.f32 %v420, %v442
        %v456 = vmul.f32 %v421, %v442
        %v457 = vmul.f32 %v422, %v442
        %v458 = vmul.f32 %v423, %v442
        %v459 = vmul.f32 %v424, %v442
        %v460 = vmul.f32 %v425, %v442
        %v461 = vmul.f32 %v426, %v442
        %v462 = vmul.f32 %v427, %v442
        %v463 = vmul.f32 %v428, %v442
        %v464 = vmul.f32 %v429, %v442
        %v465 = vmul.f32 %v430, %v442
        %v466 = vmul.f32 %v431, %v442
        %v467 = vmul.f32 %v432, %v442
        %v468 = vmul.f32 %v433, %v442
        %v469 = vmul.f32 %v434, %v442
        %v470 = vmul.f32 %v435, %v442
        %v471 = vmul.f32 %v436, %v442
        %v472 = vmul.f32 %v437, %v442
        %v473 = vmul.f32 %v438, %v442
        %v474 = vmul.f32 %v439, %v442
        %v475 = vmul.f32 %v440, %v442
        %v476 = vld [vmem:[%s3] sm:$0x1]
        %v478 = vperm.slane %v476, 0
        %v480 = vadd.f32 %v444, %v478
        %v481 = vadd.f32 %v445, %v478
        %v482 = vadd.f32 %v446, %v478
        %v483 = vadd.f32 %v447, %v478
        %v484 = vadd.f32 %v448, %v478
        %v485 = vadd.f32 %v449, %v478
        %v486 = vadd.f32 %v450, %v478
        %v487 = vadd.f32 %v451, %v478
        %v488 = vadd.f32 %v452, %v478
        %v489 = vadd.f32 %v453, %v478
        %v490 = vadd.f32 %v454, %v478
        %v491 = vadd.f32 %v455, %v478
        %v492 = vadd.f32 %v456, %v478
        %v493 = vadd.f32 %v457, %v478
        %v494 = vadd.f32 %v458, %v478
        %v495 = vadd.f32 %v459, %v478
        %v496 = vadd.f32 %v460, %v478
        %v497 = vadd.f32 %v461, %v478
        %v498 = vadd.f32 %v462, %v478
        %v499 = vadd.f32 %v463, %v478
        %v500 = vadd.f32 %v464, %v478
        %v501 = vadd.f32 %v465, %v478
        %v502 = vadd.f32 %v466, %v478
        %v503 = vadd.f32 %v467, %v478
        %v504 = vadd.f32 %v468, %v478
        %v505 = vadd.f32 %v469, %v478
        %v506 = vadd.f32 %v470, %v478
        %v507 = vadd.f32 %v471, %v478
        %v508 = vadd.f32 %v472, %v478
        %v509 = vadd.f32 %v473, %v478
        %v510 = vadd.f32 %v474, %v478
        %v511 = vadd.f32 %v475, %v478
        %v512 = vmax.f32 %v480, 0.0
        %v513 = vmax.f32 %v481, 0.0
        %v514 = vmax.f32 %v482, 0.0
        %v515 = vmax.f32 %v483, 0.0
        %v516 = vmax.f32 %v484, 0.0
        %v517 = vmax.f32 %v485, 0.0
        %v518 = vmax.f32 %v486, 0.0
        %v519 = vmax.f32 %v487, 0.0
        %v520 = vmax.f32 %v488, 0.0
        %v521 = vmax.f32 %v489, 0.0
        %v522 = vmax.f32 %v490, 0.0
        %v523 = vmax.f32 %v491, 0.0
        %v524 = vmax.f32 %v492, 0.0
        %v525 = vmax.f32 %v493, 0.0
        %v526 = vmax.f32 %v494, 0.0
        %v527 = vmax.f32 %v495, 0.0
        %v528 = vmax.f32 %v496, 0.0
        %v529 = vmax.f32 %v497, 0.0
        %v530 = vmax.f32 %v498, 0.0
        %v531 = vmax.f32 %v499, 0.0
        %v532 = vmax.f32 %v500, 0.0
        %v533 = vmax.f32 %v501, 0.0
        %v534 = vmax.f32 %v502, 0.0
        %v535 = vmax.f32 %v503, 0.0
        %v536 = vmax.f32 %v504, 0.0
        %v537 = vmax.f32 %v505, 0.0
        %v538 = vmax.f32 %v506, 0.0
        %v539 = vmax.f32 %v507, 0.0
        %v540 = vmax.f32 %v508, 0.0
        %v541 = vmax.f32 %v509, 0.0
        %v542 = vmax.f32 %v510, 0.0
        %v543 = vmax.f32 %v511, 0.0
        %v544 = vpack.c.bf16 %v512, %v512
        %v545 = vpack.c.bf16 %v513, %v513
        %v546 = vpack.c.bf16 %v514, %v514
        %v547 = vpack.c.bf16 %v515, %v515
        %v548 = vpack.c.bf16 %v516, %v516
        %v549 = vpack.c.bf16 %v517, %v517
        %v550 = vpack.c.bf16 %v518, %v518
        %v551 = vpack.c.bf16 %v519, %v519
        %v552 = vpack.c.bf16 %v520, %v520
        %v553 = vpack.c.bf16 %v521, %v521
        %v554 = vpack.c.bf16 %v522, %v522
        %v555 = vpack.c.bf16 %v523, %v523
        %v556 = vpack.c.bf16 %v524, %v524
        %v557 = vpack.c.bf16 %v525, %v525
        %v558 = vpack.c.bf16 %v526, %v526
        %v559 = vpack.c.bf16 %v527, %v527
        %v560 = vpack.c.bf16 %v528, %v528
        %v561 = vpack.c.bf16 %v529, %v529
        %v562 = vpack.c.bf16 %v530, %v530
        %v563 = vpack.c.bf16 %v531, %v531
        %v564 = vpack.c.bf16 %v532, %v532
        %v565 = vpack.c.bf16 %v533, %v533
        %v566 = vpack.c.bf16 %v534, %v534
        %v567 = vpack.c.bf16 %v535, %v535
        %v568 = vpack.c.bf16 %v536, %v536
        %v569 = vpack.c.bf16 %v537, %v537
        %v570 = vpack.c.bf16 %v538, %v538
        %v571 = vpack.c.bf16 %v539, %v539
        %v572 = vpack.c.bf16 %v540, %v540
        %v573 = vpack.c.bf16 %v541, %v541
        %v574 = vpack.c.bf16 %v542, %v542
        %v575 = vpack.c.bf16 %v543, %v543
        %576 = vst.msk [vmem:[%s295 + $0x8] sm:$0xf] %vm276, %v544
        %577 = vst.msk [vmem:[%s295 + $0xc] sm:$0xf] %vm276, %v545
        %578 = vst.msk [vmem:[%s295 + $0x1c] sm:$0xf] %vm276, %v546
        %579 = vst.msk [vmem:[%s295 + $0x20] sm:$0xf] %vm276, %v547
        %580 = vst.msk [vmem:[%s295 + $0x30] sm:$0xf] %vm276, %v548
        %581 = vst.msk [vmem:[%s295 + $0x34] sm:$0xf] %vm276, %v549
        %582 = vst.msk [vmem:[%s295 + $0x44] sm:$0xf] %vm276, %v550
        %583 = vst.msk [vmem:[%s295 + $0x48] sm:$0xf] %vm276, %v551
        %584 = vst.msk [vmem:[%s295 + $0x58] sm:$0xf] %vm276, %v552
        %585 = vst.msk [vmem:[%s295 + $0x5c] sm:$0xf] %vm276, %v553
        %586 = vst.msk [vmem:[%s295 + $0x6c] sm:$0xf] %vm276, %v554
        %587 = vst.msk [vmem:[%s295 + $0x70] sm:$0xf] %vm276, %v555
        %588 = vst.msk [vmem:[%s295 + $0x80] sm:$0xf] %vm276, %v556
        %589 = vst.msk [vmem:[%s295 + $0x84] sm:$0xf] %vm276, %v557
        %590 = vst.msk [vmem:[%s295 + $0x94] sm:$0xf] %vm276, %v558
        %591 = vst.msk [vmem:[%s295 + $0x98] sm:$0xf] %vm276, %v559
        %592 = vst.msk [vmem:[%s295 + $0xa8] sm:$0xf] %vm276, %v560
        %593 = vst.msk [vmem:[%s295 + $0xac] sm:$0xf] %vm276, %v561
        %594 = vst.msk [vmem:[%s295 + $0xbc] sm:$0xf] %vm276, %v562
        %595 = vst.msk [vmem:[%s295 + $0xc0] sm:$0xf] %vm276, %v563
        %596 = vst.msk [vmem:[%s295 + $0xd0] sm:$0xf] %vm276, %v564
        %597 = vst.msk [vmem:[%s295 + $0xd4] sm:$0xf] %vm276, %v565
        %598 = vst.msk [vmem:[%s295 + $0xe4] sm:$0xf] %vm276, %v566
        %599 = vst.msk [vmem:[%s295 + $0xe8] sm:$0xf] %vm276, %v567
        %600 = vst.msk [vmem:[%s295 + $0xf8] sm:$0xf] %vm276, %v568
        %601 = vst.msk [vmem:[%s295 + $0xfc] sm:$0xf] %vm276, %v569
        %602 = vst.msk [vmem:[%s295 + $0x10c] sm:$0xf] %vm276, %v570
        %603 = vst.msk [vmem:[%s295 + $0x110] sm:$0xf] %vm276, %v571
        %604 = vst.msk [vmem:[%s295 + $0x120] sm:$0xf] %vm276, %v572
        %605 = vst.msk [vmem:[%s295 + $0x124] sm:$0xf] %vm276, %v573
        %606 = vst.msk [vmem:[%s295 + $0x134] sm:$0xf] %vm276, %v574
        %607 = vst.msk [vmem:[%s295 + $0x138] sm:$0xf] %vm276, %v575
      $region40: #{bottleneck_psp_forward.5} parent=35 // pred_fallthru
        _
      %s608 = smul.u32 %s22, 8
      %s609 = smul.u32 %s608, 5
      %s610 = smul.addr %s609, 4
      %s611 = scalar_lea.vmem [#allocation2], %s610
      %v612 = vld [vmem:[%s611 + $0x4] sm:$0x8]
      %v613 = vld [vmem:[%s611 + $0x8] sm:$0xf]
      %v614 = vld [vmem:[%s611 + $0xc] sm:$0xf]
      %v615 = vld [vmem:[%s611 + $0x18] sm:$0x8]
      %v616 = vld [vmem:[%s611 + $0x1c] sm:$0xf]
      %v617 = vld [vmem:[%s611 + $0x20] sm:$0xf]
      %v618 = vld [vmem:[%s611 + $0x2c] sm:$0x8]
      %v619 = vld [vmem:[%s611 + $0x30] sm:$0xf]
      %v620 = vld [vmem:[%s611 + $0x34] sm:$0xf]
      %v621 = vld [vmem:[%s611 + $0x40] sm:$0x8]
      %v622 = vld [vmem:[%s611 + $0x44] sm:$0xf]
      %v623 = vld [vmem:[%s611 + $0x48] sm:$0xf]
      %v624 = vld [vmem:[%s611 + $0x54] sm:$0x8]
      %v625 = vld [vmem:[%s611 + $0x58] sm:$0xf]
      %v626 = vld [vmem:[%s611 + $0x5c] sm:$0xf]
      %v627 = vld [vmem:[%s611 + $0x68] sm:$0x8]
      %v628 = vld [vmem:[%s611 + $0x6c] sm:$0xf]
      %v629 = vld [vmem:[%s611 + $0x70] sm:$0xf]
      %v630 = vld [vmem:[%s611 + $0x7c] sm:$0x8]
      %v631 = vld [vmem:[%s611 + $0x80] sm:$0xf]
      %v632 = vld [vmem:[%s611 + $0x84] sm:$0xf]
      %v633 = vld [vmem:[%s611 + $0x90] sm:$0x8]
      %v634 = vld [vmem:[%s611 + $0x94] sm:$0xf]
      %v635 = vld [vmem:[%s611 + $0x98] sm:$0xf]
      %vm636 = vsmask.f32 256
      %vm637 = vsmask.f32 4368
      %vm638 = vmor %vm636, %vm637
      %v640 = vshrl.u32 %v612, 16
      %v642 = vrot.slane %v640, 7
      %v643 = vrot.slane %v642, 4
      %v645 = vshrl.u32 %v613, 16
      %v647 = vrot.slane %v645, 7
      %v648 = vshll.u32 %v613, 16
      %v650 = vor.u32 %v647, %v648
      %v651 = vsel %vm638, %v643, %v650
      %v652 = vrot.slane %v647, 4
      %v654 = vshrl.u32 %v614, 16
      %v656 = vrot.slane %v654, 7
      %v657 = vshll.u32 %v614, 16
      %v659 = vor.u32 %v656, %v657
      %v660 = vsel %vm638, %v652, %v659
      %v662 = vshrl.u32 %v615, 16
      %v664 = vrot.slane %v662, 7
      %v665 = vrot.slane %v664, 4
      %v667 = vshrl.u32 %v616, 16
      %v669 = vrot.slane %v667, 7
      %v670 = vshll.u32 %v616, 16
      %v672 = vor.u32 %v669, %v670
      %v673 = vsel %vm638, %v665, %v672
      %v674 = vrot.slane %v669, 4
      %v676 = vshrl.u32 %v617, 16
      %v678 = vrot.slane %v676, 7
      %v679 = vshll.u32 %v617, 16
      %v681 = vor.u32 %v678, %v679
      %v682 = vsel %vm638, %v674, %v681
      %v684 = vshrl.u32 %v618, 16
      %v686 = vrot.slane %v684, 7
      %v687 = vrot.slane %v686, 4
      %v689 = vshrl.u32 %v619, 16
      %v691 = vrot.slane %v689, 7
      %v692 = vshll.u32 %v619, 16
      %v694 = vor.u32 %v691, %v692
      %v695 = vsel %vm638, %v687, %v694
      %v696 = vrot.slane %v691, 4
      %v698 = vshrl.u32 %v620, 16
      %v700 = vrot.slane %v698, 7
      %v701 = vshll.u32 %v620, 16
      %v703 = vor.u32 %v700, %v701
      %v704 = vsel %vm638, %v696, %v703
      %v706 = vshrl.u32 %v621, 16
      %v708 = vrot.slane %v706, 7
      %v709 = vrot.slane %v708, 4
      %v711 = vshrl.u32 %v622, 16
      %v713 = vrot.slane %v711, 7
      %v714 = vshll.u32 %v622, 16
      %v716 = vor.u32 %v713, %v714
      %v717 = vsel %vm638, %v709, %v716
      %v718 = vrot.slane %v713, 4
      %v720 = vshrl.u32 %v623, 16
      %v722 = vrot.slane %v720, 7
      %v723 = vshll.u32 %v623, 16
      %v725 = vor.u32 %v722, %v723
      %v726 = vsel %vm638, %v718, %v725
      %v728 = vshrl.u32 %v624, 16
      %v730 = vrot.slane %v728, 7
      %v731 = vrot.slane %v730, 4
      %v733 = vshrl.u32 %v625, 16
      %v735 = vrot.slane %v733, 7
      %v736 = vshll.u32 %v625, 16
      %v738 = vor.u32 %v735, %v736
      %v739 = vsel %vm638, %v731, %v738
      %v740 = vrot.slane %v735, 4
      %v742 = vshrl.u32 %v626, 16
      %v744 = vrot.slane %v742, 7
      %v745 = vshll.u32 %v626, 16
      %v747 = vor.u32 %v744, %v745
      %v748 = vsel %vm638, %v740, %v747
      %v750 = vshrl.u32 %v627, 16
      %v752 = vrot.slane %v750, 7
      %v753 = vrot.slane %v752, 4
      %v755 = vshrl.u32 %v628, 16
      %v757 = vrot.slane %v755, 7
      %v758 = vshll.u32 %v628, 16
      %v760 = vor.u32 %v757, %v758
      %v761 = vsel %vm638, %v753, %v760
      %v762 = vrot.slane %v757, 4
      %v764 = vshrl.u32 %v629, 16
      %v766 = vrot.slane %v764, 7
      %v767 = vshll.u32 %v629, 16
      %v769 = vor.u32 %v766, %v767
      %v770 = vsel %vm638, %v762, %v769
      %v772 = vshrl.u32 %v630, 16
      %v774 = vrot.slane %v772, 7
      %v775 = vrot.slane %v774, 4
      %v777 = vshrl.u32 %v631, 16
      %v779 = vrot.slane %v777, 7
      %v780 = vshll.u32 %v631, 16
      %v782 = vor.u32 %v779, %v780
      %v783 = vsel %vm638, %v775, %v782
      %v784 = vrot.slane %v779, 4
      %v786 = vshrl.u32 %v632, 16
      %v788 = vrot.slane %v786, 7
      %v789 = vshll.u32 %v632, 16
      %v791 = vor.u32 %v788, %v789
      %v792 = vsel %vm638, %v784, %v791
      %v794 = vshrl.u32 %v633, 16
      %v796 = vrot.slane %v794, 7
      %v797 = vrot.slane %v796, 4
      %v799 = vshrl.u32 %v634, 16
      %v801 = vrot.slane %v799, 7
      %v802 = vshll.u32 %v634, 16
      %v804 = vor.u32 %v801, %v802
      %v805 = vsel %vm638, %v797, %v804
      %v806 = vrot.slane %v801, 4
      %v808 = vshrl.u32 %v635, 16
      %v810 = vrot.slane %v808, 7
      %v811 = vshll.u32 %v635, 16
      %v813 = vor.u32 %v810, %v811
      %v814 = vsel %vm638, %v806, %v813
      %v815 = vld [vmem:[%s1] sm:$0x3]
      %s816 = scalar_lea.vmem %s1, 2
      %v817 = vld [vmem:[%s816] sm:$0x3]
      %v834 = vunpack.c.l.b16 %v613
      %v835 = vunpack.c.l.b16 %v614
      %v836 = vunpack.c.l.b16 %v616
      %v837 = vunpack.c.l.b16 %v617
      %v838 = vunpack.c.l.b16 %v619
      %v839 = vunpack.c.l.b16 %v620
      %v840 = vunpack.c.l.b16 %v622
      %v841 = vunpack.c.l.b16 %v623
      %v842 = vunpack.c.l.b16 %v625
      %v843 = vunpack.c.l.b16 %v626
      %v844 = vunpack.c.l.b16 %v628
      %v845 = vunpack.c.l.b16 %v629
      %v846 = vunpack.c.l.b16 %v631
      %v847 = vunpack.c.l.b16 %v632
      %v848 = vunpack.c.l.b16 %v634
      %v849 = vunpack.c.l.b16 %v635
      %v850 = vpack.c.b16 %v835, %v834
      %v851 = vpack.c.b16 %v837, %v836
      %v852 = vpack.c.b16 %v839, %v838
      %v853 = vpack.c.b16 %v841, %v840
      %v854 = vpack.c.b16 %v843, %v842
      %v855 = vpack.c.b16 %v845, %v844
      %v856 = vpack.c.b16 %v847, %v846
      %v857 = vpack.c.b16 %v849, %v848
      %vm858 = vcmask 31744
      %v860 = vsel %vm858, %v850, 0
      %v863 = vsel %vm858, %v851, 0
      %v866 = vsel %vm858, %v852, 0
      %v869 = vsel %vm858, %v853, 0
      %v872 = vsel %vm858, %v854, 0
      %v875 = vsel %vm858, %v855, 0
      %v878 = vsel %vm858, %v856, 0
      %v881 = vsel %vm858, %v857, 0
      %vm883 = vcmask 1041408
      %v885 = vsel %vm883, %v817, 0
      %887 = vmatpush.bf16.msra.mxu0 0
      %888 = vmatpush.bf16.msra.mxu0 0
      %889 = vmatpush.bf16.msra.mxu0 0
      %890 = vmatpush.bf16.msra.mxu0 0
      %891 = vmatpush.bf16.msra.mxu0 0
      %892 = vmatpush.bf16.msra.mxu0 0
      %893 = vmatpush.bf16.msra.mxu0 0
      %894 = vmatpush.bf16.msra.mxu0 %v885
      %895 = vmatmul.bf16.gmra.mxu0 %v860
      %v896 = vpop.f32.mrf.mxu0
      %v897 = vadd.f32 0.0, %v896
      %v898 = vpop.f32.mrf.mxu0
      %v899 = vadd.f32 0.0, %v898
      %900 = vmatmul.bf16.gmra.mxu0 %v863
      %v901 = vpop.f32.mrf.mxu0
      %v902 = vadd.f32 0.0, %v901
      %v903 = vpop.f32.mrf.mxu0
      %v904 = vadd.f32 0.0, %v903
      %905 = vmatmul.bf16.gmra.mxu0 %v866
      %v906 = vpop.f32.mrf.mxu0
      %v907 = vadd.f32 0.0, %v906
      %v908 = vpop.f32.mrf.mxu0
      %v909 = vadd.f32 0.0, %v908
      %910 = vmatmul.bf16.gmra.mxu0 %v869
      %v911 = vpop.f32.mrf.mxu0
      %v912 = vadd.f32 0.0, %v911
      %v913 = vpop.f32.mrf.mxu0
      %v914 = vadd.f32 0.0, %v913
      %915 = vmatmul.bf16.gmra.mxu0 %v872
      %v916 = vpop.f32.mrf.mxu0
      %v917 = vadd.f32 0.0, %v916
      %v918 = vpop.f32.mrf.mxu0
      %v919 = vadd.f32 0.0, %v918
      %920 = vmatmul.bf16.gmra.mxu0 %v875
      %v921 = vpop.f32.mrf.mxu0
      %v922 = vadd.f32 0.0, %v921
      %v923 = vpop.f32.mrf.mxu0
      %v924 = vadd.f32 0.0, %v923
      %925 = vmatmul.bf16.gmra.mxu0 %v878
      %v926 = vpop.f32.mrf.mxu0
      %v927 = vadd.f32 0.0, %v926
      %v928 = vpop.f32.mrf.mxu0
      %v929 = vadd.f32 0.0, %v928
      %930 = vmatmul.bf16.gmra.mxu0 %v881
      %v931 = vpop.f32.mrf.mxu0
      %v932 = vadd.f32 0.0, %v931
      %v933 = vpop.f32.mrf.mxu0
      %v934 = vadd.f32 0.0, %v933
      %935 = vdwg.mxu0
      %v936 = vunpack.c.l.b16 %v651
      %v937 = vunpack.c.l.b16 %v660
      %v938 = vunpack.c.l.b16 %v673
      %v939 = vunpack.c.l.b16 %v682
      %v940 = vunpack.c.l.b16 %v695
      %v941 = vunpack.c.l.b16 %v704
      %v942 = vunpack.c.l.b16 %v717
      %v943 = vunpack.c.l.b16 %v726
      %v944 = vunpack.c.l.b16 %v739
      %v945 = vunpack.c.l.b16 %v748
      %v946 = vunpack.c.l.b16 %v761
      %v947 = vunpack.c.l.b16 %v770
      %v948 = vunpack.c.l.b16 %v783
      %v949 = vunpack.c.l.b16 %v792
      %v950 = vunpack.c.l.b16 %v805
      %v951 = vunpack.c.l.b16 %v814
      %v952 = vpack.c.b16 %v937, %v936
      %v953 = vpack.c.b16 %v939, %v938
      %v954 = vpack.c.b16 %v941, %v940
      %v955 = vpack.c.b16 %v943, %v942
      %v956 = vpack.c.b16 %v945, %v944
      %v957 = vpack.c.b16 %v947, %v946
      %v958 = vpack.c.b16 %v949, %v948
      %v959 = vpack.c.b16 %v951, %v950
      %v961 = vsel %vm858, %v952, 0
      %v964 = vsel %vm858, %v953, 0
      %v967 = vsel %vm858, %v954, 0
      %v970 = vsel %vm858, %v955, 0
      %v973 = vsel %vm858, %v956, 0
      %v976 = vsel %vm858, %v957, 0
      %v979 = vsel %vm858, %v958, 0
      %v982 = vsel %vm858, %v959, 0
      %v985 = vsel %vm883, %v815, 0
      %987 = vmatpush.bf16.msra.mxu0 0
      %988 = vmatpush.bf16.msra.mxu0 0
      %989 = vmatpush.bf16.msra.mxu0 0
      %990 = vmatpush.bf16.msra.mxu0 0
      %991 = vmatpush.bf16.msra.mxu0 0
      %992 = vmatpush.bf16.msra.mxu0 0
      %993 = vmatpush.bf16.msra.mxu0 0
      %994 = vmatpush.bf16.msra.mxu0 %v985
      %995 = vmatmul.bf16.gmra.mxu0 %v961
      %v996 = vpop.f32.mrf.mxu0
      %v997 = vadd.f32 %v897, %v996
      %v998 = vpop.f32.mrf.mxu0
      %v999 = vadd.f32 %v899, %v998
      %1000 = vmatmul.bf16.gmra.mxu0 %v964
      %v1001 = vpop.f32.mrf.mxu0
      %v1002 = vadd.f32 %v902, %v1001
      %v1003 = vpop.f32.mrf.mxu0
      %v1004 = vadd.f32 %v904, %v1003
      %1005 = vmatmul.bf16.gmra.mxu0 %v967
      %v1006 = vpop.f32.mrf.mxu0
      %v1007 = vadd.f32 %v907, %v1006
      %v1008 = vpop.f32.mrf.mxu0
      %v1009 = vadd.f32 %v909, %v1008
      %1010 = vmatmul.bf16.gmra.mxu0 %v970
      %v1011 = vpop.f32.mrf.mxu0
      %v1012 = vadd.f32 %v912, %v1011
      %v1013 = vpop.f32.mrf.mxu0
      %v1014 = vadd.f32 %v914, %v1013
      %1015 = vmatmul.bf16.gmra.mxu0 %v973
      %v1016 = vpop.f32.mrf.mxu0
      %v1017 = vadd.f32 %v917, %v1016
      %v1018 = vpop.f32.mrf.mxu0
      %v1019 = vadd.f32 %v919, %v1018
      %1020 = vmatmul.bf16.gmra.mxu0 %v976
      %v1021 = vpop.f32.mrf.mxu0
      %v1022 = vadd.f32 %v922, %v1021
      %v1023 = vpop.f32.mrf.mxu0
      %v1024 = vadd.f32 %v924, %v1023
      %1025 = vmatmul.bf16.gmra.mxu0 %v979
      %v1026 = vpop.f32.mrf.mxu0
      %v1027 = vadd.f32 %v927, %v1026
      %v1028 = vpop.f32.mrf.mxu0
      %v1029 = vadd.f32 %v929, %v1028
      %1030 = vmatmul.bf16.gmra.mxu0 %v982
      %v1031 = vpop.f32.mrf.mxu0
      %v1032 = vadd.f32 %v932, %v1031
      %v1033 = vpop.f32.mrf.mxu0
      %v1034 = vadd.f32 %v934, %v1033
      %1035 = vdwg.mxu0
      %v1036 = vld [vmem:[%s611 + $0x8] sm:$0xf]
      %v1037 = vld [vmem:[%s611 + $0xc] sm:$0xf]
      %v1038 = vld [vmem:[%s611 + $0x10] sm:$0x1]
      %v1039 = vld [vmem:[%s611 + $0x1c] sm:$0xf]
      %v1040 = vld [vmem:[%s611 + $0x20] sm:$0xf]
      %v1041 = vld [vmem:[%s611 + $0x24] sm:$0x1]
      %v1042 = vld [vmem:[%s611 + $0x30] sm:$0xf]
      %v1043 = vld [vmem:[%s611 + $0x34] sm:$0xf]
      %v1044 = vld [vmem:[%s611 + $0x38] sm:$0x1]
      %v1045 = vld [vmem:[%s611 + $0x44] sm:$0xf]
      %v1046 = vld [vmem:[%s611 + $0x48] sm:$0xf]
      %v1047 = vld [vmem:[%s611 + $0x4c] sm:$0x1]
      %v1048 = vld [vmem:[%s611 + $0x58] sm:$0xf]
      %v1049 = vld [vmem:[%s611 + $0x5c] sm:$0xf]
      %v1050 = vld [vmem:[%s611 + $0x60] sm:$0x1]
      %v1051 = vld [vmem:[%s611 + $0x6c] sm:$0xf]
      %v1052 = vld [vmem:[%s611 + $0x70] sm:$0xf]
      %v1053 = vld [vmem:[%s611 + $0x74] sm:$0x1]
      %v1054 = vld [vmem:[%s611 + $0x80] sm:$0xf]
      %v1055 = vld [vmem:[%s611 + $0x84] sm:$0xf]
      %v1056 = vld [vmem:[%s611 + $0x88] sm:$0x1]
      %v1057 = vld [vmem:[%s611 + $0x94] sm:$0xf]
      %v1058 = vld [vmem:[%s611 + $0x98] sm:$0xf]
      %v1059 = vld [vmem:[%s611 + $0x9c] sm:$0x1]
      %vm1060 = vsmask.f32 3328
      %vm1061 = vsmask.f32 7440
      %vm1062 = vmor %vm1060, %vm1061
      %v1064 = vshrl.u32 %v1036, 16
      %v1066 = vrot.slane %v1064, 4
      %v1067 = vshll.u32 %v1036, 16
      %v1069 = vrot.slane %v1067, 5
      %v1070 = vor.u32 %v1066, %v1069
      %v1071 = vrot.slane %v1070, 4
      %v1073 = vshll.u32 %v1037, 16
      %v1075 = vrot.slane %v1073, 5
      %v1076 = vsel %vm1062, %v1071, %v1075
      %v1077 = vshrl.u32 %v1037, 16
      %v1079 = vrot.slane %v1077, 4
      %v1080 = vor.u32 %v1079, %v1075
      %v1081 = vrot.slane %v1080, 4
      %v1083 = vshll.u32 %v1038, 16
      %v1085 = vrot.slane %v1083, 5
      %v1086 = vsel %vm1062, %v1081, %v1085
      %v1088 = vshrl.u32 %v1039, 16
      %v1090 = vrot.slane %v1088, 4
      %v1091 = vshll.u32 %v1039, 16
      %v1093 = vrot.slane %v1091, 5
      %v1094 = vor.u32 %v1090, %v1093
      %v1095 = vrot.slane %v1094, 4
      %v1097 = vshll.u32 %v1040, 16
      %v1099 = vrot.slane %v1097, 5
      %v1100 = vsel %vm1062, %v1095, %v1099
      %v1101 = vshrl.u32 %v1040, 16
      %v1103 = vrot.slane %v1101, 4
      %v1104 = vor.u32 %v1103, %v1099
      %v1105 = vrot.slane %v1104, 4
      %v1107 = vshll.u32 %v1041, 16
      %v1109 = vrot.slane %v1107, 5
      %v1110 = vsel %vm1062, %v1105, %v1109
      %v1112 = vshrl.u32 %v1042, 16
      %v1114 = vrot.slane %v1112, 4
      %v1115 = vshll.u32 %v1042, 16
      %v1117 = vrot.slane %v1115, 5
      %v1118 = vor.u32 %v1114, %v1117
      %v1119 = vrot.slane %v1118, 4
      %v1121 = vshll.u32 %v1043, 16
      %v1123 = vrot.slane %v1121, 5
      %v1124 = vsel %vm1062, %v1119, %v1123
      %v1125 = vshrl.u32 %v1043, 16
      %v1127 = vrot.slane %v1125, 4
      %v1128 = vor.u32 %v1127, %v1123
      %v1129 = vrot.slane %v1128, 4
      %v1131 = vshll.u32 %v1044, 16
      %v1133 = vrot.slane %v1131, 5
      %v1134 = vsel %vm1062, %v1129, %v1133
      %v1136 = vshrl.u32 %v1045, 16
      %v1138 = vrot.slane %v1136, 4
      %v1139 = vshll.u32 %v1045, 16
      %v1141 = vrot.slane %v1139, 5
      %v1142 = vor.u32 %v1138, %v1141
      %v1143 = vrot.slane %v1142, 4
      %v1145 = vshll.u32 %v1046, 16
      %v1147 = vrot.slane %v1145, 5
      %v1148 = vsel %vm1062, %v1143, %v1147
      %v1149 = vshrl.u32 %v1046, 16
      %v1151 = vrot.slane %v1149, 4
      %v1152 = vor.u32 %v1151, %v1147
      %v1153 = vrot.slane %v1152, 4
      %v1155 = vshll.u32 %v1047, 16
      %v1157 = vrot.slane %v1155, 5
      %v1158 = vsel %vm1062, %v1153, %v1157
      %v1160 = vshrl.u32 %v1048, 16
      %v1162 = vrot.slane %v1160, 4
      %v1163 = vshll.u32 %v1048, 16
      %v1165 = vrot.slane %v1163, 5
      %v1166 = vor.u32 %v1162, %v1165
      %v1167 = vrot.slane %v1166, 4
      %v1169 = vshll.u32 %v1049, 16
      %v1171 = vrot.slane %v1169, 5
      %v1172 = vsel %vm1062, %v1167, %v1171
      %v1173 = vshrl.u32 %v1049, 16
      %v1175 = vrot.slane %v1173, 4
      %v1176 = vor.u32 %v1175, %v1171
      %v1177 = vrot.slane %v1176, 4
      %v1179 = vshll.u32 %v1050, 16
      %v1181 = vrot.slane %v1179, 5
      %v1182 = vsel %vm1062, %v1177, %v1181
      %v1184 = vshrl.u32 %v1051, 16
      %v1186 = vrot.slane %v1184, 4
      %v1187 = vshll.u32 %v1051, 16
      %v1189 = vrot.slane %v1187, 5
      %v1190 = vor.u32 %v1186, %v1189
      %v1191 = vrot.slane %v1190, 4
      %v1193 = vshll.u32 %v1052, 16
      %v1195 = vrot.slane %v1193, 5
      %v1196 = vsel %vm1062, %v1191, %v1195
      %v1197 = vshrl.u32 %v1052, 16
      %v1199 = vrot.slane %v1197, 4
      %v1200 = vor.u32 %v1199, %v1195
      %v1201 = vrot.slane %v1200, 4
      %v1203 = vshll.u32 %v1053, 16
      %v1205 = vrot.slane %v1203, 5
      %v1206 = vsel %vm1062, %v1201, %v1205
      %v1208 = vshrl.u32 %v1054, 16
      %v1210 = vrot.slane %v1208, 4
      %v1211 = vshll.u32 %v1054, 16
      %v1213 = vrot.slane %v1211, 5
      %v1214 = vor.u32 %v1210, %v1213
      %v1215 = vrot.slane %v1214, 4
      %v1217 = vshll.u32 %v1055, 16
      %v1219 = vrot.slane %v1217, 5
      %v1220 = vsel %vm1062, %v1215, %v1219
      %v1221 = vshrl.u32 %v1055, 16
      %v1223 = vrot.slane %v1221, 4
      %v1224 = vor.u32 %v1223, %v1219
      %v1225 = vrot.slane %v1224, 4
      %v1227 = vshll.u32 %v1056, 16
      %v1229 = vrot.slane %v1227, 5
      %v1230 = vsel %vm1062, %v1225, %v1229
      %v1232 = vshrl.u32 %v1057, 16
      %v1234 = vrot.slane %v1232, 4
      %v1235 = vshll.u32 %v1057, 16
      %v1237 = vrot.slane %v1235, 5
      %v1238 = vor.u32 %v1234, %v1237
      %v1239 = vrot.slane %v1238, 4
      %v1241 = vshll.u32 %v1058, 16
      %v1243 = vrot.slane %v1241, 5
      %v1244 = vsel %vm1062, %v1239, %v1243
      %v1245 = vshrl.u32 %v1058, 16
      %v1247 = vrot.slane %v1245, 4
      %v1248 = vor.u32 %v1247, %v1243
      %v1249 = vrot.slane %v1248, 4
      %v1251 = vshll.u32 %v1059, 16
      %v1253 = vrot.slane %v1251, 5
      %v1254 = vsel %vm1062, %v1249, %v1253
      %s1255 = scalar_lea.vmem %s1, 4
      %v1256 = vld [vmem:[%s1255] sm:$0x3]
      %v1257 = vunpack.c.l.b16 %v1076
      %v1258 = vunpack.c.l.b16 %v1086
      %v1259 = vunpack.c.l.b16 %v1100
      %v1260 = vunpack.c.l.b16 %v1110
      %v1261 = vunpack.c.l.b16 %v1124
      %v1262 = vunpack.c.l.b16 %v1134
      %v1263 = vunpack.c.l.b16 %v1148
      %v1264 = vunpack.c.l.b16 %v1158
      %v1265 = vunpack.c.l.b16 %v1172
      %v1266 = vunpack.c.l.b16 %v1182
      %v1267 = vunpack.c.l.b16 %v1196
      %v1268 = vunpack.c.l.b16 %v1206
      %v1269 = vunpack.c.l.b16 %v1220
      %v1270 = vunpack.c.l.b16 %v1230
      %v1271 = vunpack.c.l.b16 %v1244
      %v1272 = vunpack.c.l.b16 %v1254
      %v1273 = vpack.c.b16 %v1258, %v1257
      %v1274 = vpack.c.b16 %v1260, %v1259
      %v1275 = vpack.c.b16 %v1262, %v1261
      %v1276 = vpack.c.b16 %v1264, %v1263
      %v1277 = vpack.c.b16 %v1266, %v1265
      %v1278 = vpack.c.b16 %v1268, %v1267
      %v1279 = vpack.c.b16 %v1270, %v1269
      %v1280 = vpack.c.b16 %v1272, %v1271
      %v1282 = vsel %vm858, %v1273, 0
      %v1285 = vsel %vm858, %v1274, 0
      %v1288 = vsel %vm858, %v1275, 0
      %v1291 = vsel %vm858, %v1276, 0
      %v1294 = vsel %vm858, %v1277, 0
      %v1297 = vsel %vm858, %v1278, 0
      %v1300 = vsel %vm858, %v1279, 0
      %v1303 = vsel %vm858, %v1280, 0
      %v1306 = vsel %vm883, %v1256, 0
      %1308 = vmatpush.bf16.msra.mxu0 0
      %1309 = vmatpush.bf16.msra.mxu0 0
      %1310 = vmatpush.bf16.msra.mxu0 0
      %1311 = vmatpush.bf16.msra.mxu0 0
      %1312 = vmatpush.bf16.msra.mxu0 0
      %1313 = vmatpush.bf16.msra.mxu0 0
      %1314 = vmatpush.bf16.msra.mxu0 0
      %1315 = vmatpush.bf16.msra.mxu0 %v1306
      %1316 = vmatmul.bf16.gmra.mxu0 %v1282
      %v1317 = vpop.f32.mrf.mxu0
      %v1318 = vadd.f32 0.0, %v1317
      %v1319 = vpop.f32.mrf.mxu0
      %v1320 = vadd.f32 0.0, %v1319
      %1321 = vmatmul.bf16.gmra.mxu0 %v1285
      %v1322 = vpop.f32.mrf.mxu0
      %v1323 = vadd.f32 0.0, %v1322
      %v1324 = vpop.f32.mrf.mxu0
      %v1325 = vadd.f32 0.0, %v1324
      %1326 = vmatmul.bf16.gmra.mxu0 %v1288
      %v1327 = vpop.f32.mrf.mxu0
      %v1328 = vadd.f32 0.0, %v1327
      %v1329 = vpop.f32.mrf.mxu0
      %v1330 = vadd.f32 0.0, %v1329
      %1331 = vmatmul.bf16.gmra.mxu0 %v1291
      %v1332 = vpop.f32.mrf.mxu0
      %v1333 = vadd.f32 0.0, %v1332
      %v1334 = vpop.f32.mrf.mxu0
      %v1335 = vadd.f32 0.0, %v1334
      %1336 = vmatmul.bf16.gmra.mxu0 %v1294
      %v1337 = vpop.f32.mrf.mxu0
      %v1338 = vadd.f32 0.0, %v1337
      %v1339 = vpop.f32.mrf.mxu0
      %v1340 = vadd.f32 0.0, %v1339
      %1341 = vmatmul.bf16.gmra.mxu0 %v1297
      %v1342 = vpop.f32.mrf.mxu0
      %v1343 = vadd.f32 0.0, %v1342
      %v1344 = vpop.f32.mrf.mxu0
      %v1345 = vadd.f32 0.0, %v1344
      %1346 = vmatmul.bf16.gmra.mxu0 %v1300
      %v1347 = vpop.f32.mrf.mxu0
      %v1348 = vadd.f32 0.0, %v1347
      %v1349 = vpop.f32.mrf.mxu0
      %v1350 = vadd.f32 0.0, %v1349
      %1351 = vmatmul.bf16.gmra.mxu0 %v1303
      %v1352 = vpop.f32.mrf.mxu0
      %v1353 = vadd.f32 0.0, %v1352
      %v1354 = vpop.f32.mrf.mxu0
      %v1355 = vadd.f32 0.0, %v1354
      %1356 = vdwg.mxu0
      %v1357 = vadd.f32 %v997, %v1318
      %v1358 = vadd.f32 %v999, %v1320
      %v1359 = vadd.f32 %v1002, %v1323
      %v1360 = vadd.f32 %v1004, %v1325
      %v1361 = vadd.f32 %v1007, %v1328
      %v1362 = vadd.f32 %v1009, %v1330
      %v1363 = vadd.f32 %v1012, %v1333
      %v1364 = vadd.f32 %v1014, %v1335
      %v1365 = vadd.f32 %v1017, %v1338
      %v1366 = vadd.f32 %v1019, %v1340
      %v1367 = vadd.f32 %v1022, %v1343
      %v1368 = vadd.f32 %v1024, %v1345
      %v1369 = vadd.f32 %v1027, %v1348
      %v1370 = vadd.f32 %v1029, %v1350
      %v1371 = vadd.f32 %v1032, %v1353
      %v1372 = vadd.f32 %v1034, %v1355
      %s1373 = sadd.s32 %s608, 1
      %s1374 = smul.u32 %s1373, 5
      %s1375 = smul.addr %s1374, 4
      %s1376 = scalar_lea.vmem [#allocation2], %s1375
      %v1377 = vld [vmem:[%s1376 + $0x4] sm:$0x8]
      %v1378 = vld [vmem:[%s1376 + $0x8] sm:$0xf]
      %v1379 = vld [vmem:[%s1376 + $0xc] sm:$0xf]
      %v1380 = vld [vmem:[%s1376 + $0x18] sm:$0x8]
      %v1381 = vld [vmem:[%s1376 + $0x1c] sm:$0xf]
      %v1382 = vld [vmem:[%s1376 + $0x20] sm:$0xf]
      %v1383 = vld [vmem:[%s1376 + $0x2c] sm:$0x8]
      %v1384 = vld [vmem:[%s1376 + $0x30] sm:$0xf]
      %v1385 = vld [vmem:[%s1376 + $0x34] sm:$0xf]
      %v1386 = vld [vmem:[%s1376 + $0x40] sm:$0x8]
      %v1387 = vld [vmem:[%s1376 + $0x44] sm:$0xf]
      %v1388 = vld [vmem:[%s1376 + $0x48] sm:$0xf]
      %v1389 = vld [vmem:[%s1376 + $0x54] sm:$0x8]
      %v1390 = vld [vmem:[%s1376 + $0x58] sm:$0xf]
      %v1391 = vld [vmem:[%s1376 + $0x5c] sm:$0xf]
      %v1392 = vld [vmem:[%s1376 + $0x68] sm:$0x8]
      %v1393 = vld [vmem:[%s1376 + $0x6c] sm:$0xf]
      %v1394 = vld [vmem:[%s1376 + $0x70] sm:$0xf]
      %v1395 = vld [vmem:[%s1376 + $0x7c] sm:$0x8]
      %v1396 = vld [vmem:[%s1376 + $0x80] sm:$0xf]
      %v1397 = vld [vmem:[%s1376 + $0x84] sm:$0xf]
      %v1398 = vld [vmem:[%s1376 + $0x90] sm:$0x8]
      %v1399 = vld [vmem:[%s1376 + $0x94] sm:$0xf]
      %v1400 = vld [vmem:[%s1376 + $0x98] sm:$0xf]
      %v1402 = vshrl.u32 %v1377, 16
      %v1404 = vrot.slane %v1402, 7
      %v1405 = vrot.slane %v1404, 4
      %v1407 = vshrl.u32 %v1378, 16
      %v1409 = vrot.slane %v1407, 7
      %v1410 = vshll.u32 %v1378, 16
      %v1412 = vor.u32 %v1409, %v1410
      %v1413 = vsel %vm638, %v1405, %v1412
      %v1414 = vrot.slane %v1409, 4
      %v1416 = vshrl.u32 %v1379, 16
      %v1418 = vrot.slane %v1416, 7
      %v1419 = vshll.u32 %v1379, 16
      %v1421 = vor.u32 %v1418, %v1419
      %v1422 = vsel %vm638, %v1414, %v1421
      %v1424 = vshrl.u32 %v1380, 16
      %v1426 = vrot.slane %v1424, 7
      %v1427 = vrot.slane %v1426, 4
      %v1429 = vshrl.u32 %v1381, 16
      %v1431 = vrot.slane %v1429, 7
      %v1432 = vshll.u32 %v1381, 16
      %v1434 = vor.u32 %v1431, %v1432
      %v1435 = vsel %vm638, %v1427, %v1434
      %v1436 = vrot.slane %v1431, 4
      %v1438 = vshrl.u32 %v1382, 16
      %v1440 = vrot.slane %v1438, 7
      %v1441 = vshll.u32 %v1382, 16
      %v1443 = vor.u32 %v1440, %v1441
      %v1444 = vsel %vm638, %v1436, %v1443
      %v1446 = vshrl.u32 %v1383, 16
      %v1448 = vrot.slane %v1446, 7
      %v1449 = vrot.slane %v1448, 4
      %v1451 = vshrl.u32 %v1384, 16
      %v1453 = vrot.slane %v1451, 7
      %v1454 = vshll.u32 %v1384, 16
      %v1456 = vor.u32 %v1453, %v1454
      %v1457 = vsel %vm638, %v1449, %v1456
      %v1458 = vrot.slane %v1453, 4
      %v1460 = vshrl.u32 %v1385, 16
      %v1462 = vrot.slane %v1460, 7
      %v1463 = vshll.u32 %v1385, 16
      %v1465 = vor.u32 %v1462, %v1463
      %v1466 = vsel %vm638, %v1458, %v1465
      %v1468 = vshrl.u32 %v1386, 16
      %v1470 = vrot.slane %v1468, 7
      %v1471 = vrot.slane %v1470, 4
      %v1473 = vshrl.u32 %v1387, 16
      %v1475 = vrot.slane %v1473, 7
      %v1476 = vshll.u32 %v1387, 16
      %v1478 = vor.u32 %v1475, %v1476
      %v1479 = vsel %vm638, %v1471, %v1478
      %v1480 = vrot.slane %v1475, 4
      %v1482 = vshrl.u32 %v1388, 16
      %v1484 = vrot.slane %v1482, 7
      %v1485 = vshll.u32 %v1388, 16
      %v1487 = vor.u32 %v1484, %v1485
      %v1488 = vsel %vm638, %v1480, %v1487
      %v1490 = vshrl.u32 %v1389, 16
      %v1492 = vrot.slane %v1490, 7
      %v1493 = vrot.slane %v1492, 4
      %v1495 = vshrl.u32 %v1390, 16
      %v1497 = vrot.slane %v1495, 7
      %v1498 = vshll.u32 %v1390, 16
      %v1500 = vor.u32 %v1497, %v1498
      %v1501 = vsel %vm638, %v1493, %v1500
      %v1502 = vrot.slane %v1497, 4
      %v1504 = vshrl.u32 %v1391, 16
      %v1506 = vrot.slane %v1504, 7
      %v1507 = vshll.u32 %v1391, 16
      %v1509 = vor.u32 %v1506, %v1507
      %v1510 = vsel %vm638, %v1502, %v1509
      %v1512 = vshrl.u32 %v1392, 16
      %v1514 = vrot.slane %v1512, 7
      %v1515 = vrot.slane %v1514, 4
      %v1517 = vshrl.u32 %v1393, 16
      %v1519 = vrot.slane %v1517, 7
      %v1520 = vshll.u32 %v1393, 16
      %v1522 = vor.u32 %v1519, %v1520
      %v1523 = vsel %vm638, %v1515, %v1522
      %v1524 = vrot.slane %v1519, 4
      %v1526 = vshrl.u32 %v1394, 16
      %v1528 = vrot.slane %v1526, 7
      %v1529 = vshll.u32 %v1394, 16
      %v1531 = vor.u32 %v1528, %v1529
      %v1532 = vsel %vm638, %v1524, %v1531
      %v1534 = vshrl.u32 %v1395, 16
      %v1536 = vrot.slane %v1534, 7
      %v1537 = vrot.slane %v1536, 4
      %v1539 = vshrl.u32 %v1396, 16
      %v1541 = vrot.slane %v1539, 7
      %v1542 = vshll.u32 %v1396, 16
      %v1544 = vor.u32 %v1541, %v1542
      %v1545 = vsel %vm638, %v1537, %v1544
      %v1546 = vrot.slane %v1541, 4
      %v1548 = vshrl.u32 %v1397, 16
      %v1550 = vrot.slane %v1548, 7
      %v1551 = vshll.u32 %v1397, 16
      %v1553 = vor.u32 %v1550, %v1551
      %v1554 = vsel %vm638, %v1546, %v1553
      %v1556 = vshrl.u32 %v1398, 16
      %v1558 = vrot.slane %v1556, 7
      %v1559 = vrot.slane %v1558, 4
      %v1561 = vshrl.u32 %v1399, 16
      %v1563 = vrot.slane %v1561, 7
      %v1564 = vshll.u32 %v1399, 16
      %v1566 = vor.u32 %v1563, %v1564
      %v1567 = vsel %vm638, %v1559, %v1566
      %v1568 = vrot.slane %v1563, 4
      %v1570 = vshrl.u32 %v1400, 16
      %v1572 = vrot.slane %v1570, 7
      %v1573 = vshll.u32 %v1400, 16
      %v1575 = vor.u32 %v1572, %v1573
      %v1576 = vsel %vm638, %v1568, %v1575
      %s1577 = scalar_lea.vmem %s1, 6
      %v1578 = vld [vmem:[%s1577] sm:$0x3]
      %v1579 = vunpack.c.l.b16 %v1413
      %v1580 = vunpack.c.l.b16 %v1422
      %v1581 = vunpack.c.l.b16 %v1435
      %v1582 = vunpack.c.l.b16 %v1444
      %v1583 = vunpack.c.l.b16 %v1457
      %v1584 = vunpack.c.l.b16 %v1466
      %v1585 = vunpack.c.l.b16 %v1479
      %v1586 = vunpack.c.l.b16 %v1488
      %v1587 = vunpack.c.l.b16 %v1501
      %v1588 = vunpack.c.l.b16 %v1510
      %v1589 = vunpack.c.l.b16 %v1523
      %v1590 = vunpack.c.l.b16 %v1532
      %v1591 = vunpack.c.l.b16 %v1545
      %v1592 = vunpack.c.l.b16 %v1554
      %v1593 = vunpack.c.l.b16 %v1567
      %v1594 = vunpack.c.l.b16 %v1576
      %v1595 = vpack.c.b16 %v1580, %v1579
      %v1596 = vpack.c.b16 %v1582, %v1581
      %v1597 = vpack.c.b16 %v1584, %v1583
      %v1598 = vpack.c.b16 %v1586, %v1585
      %v1599 = vpack.c.b16 %v1588, %v1587
      %v1600 = vpack.c.b16 %v1590, %v1589
      %v1601 = vpack.c.b16 %v1592, %v1591
      %v1602 = vpack.c.b16 %v1594, %v1593
      %v1604 = vsel %vm858, %v1595, 0
      %v1607 = vsel %vm858, %v1596, 0
      %v1610 = vsel %vm858, %v1597, 0
      %v1613 = vsel %vm858, %v1598, 0
      %v1616 = vsel %vm858, %v1599, 0
      %v1619 = vsel %vm858, %v1600, 0
      %v1622 = vsel %vm858, %v1601, 0
      %v1625 = vsel %vm858, %v1602, 0
      %v1628 = vsel %vm883, %v1578, 0
      %1630 = vmatpush.bf16.msra.mxu0 0
      %1631 = vmatpush.bf16.msra.mxu0 0
      %1632 = vmatpush.bf16.msra.mxu0 0
      %1633 = vmatpush.bf16.msra.mxu0 0
      %1634 = vmatpush.bf16.msra.mxu0 0
      %1635 = vmatpush.bf16.msra.mxu0 0
      %1636 = vmatpush.bf16.msra.mxu0 0
      %1637 = vmatpush.bf16.msra.mxu0 %v1628
      %1638 = vmatmul.bf16.gmra.mxu0 %v1604
      %v1639 = vpop.f32.mrf.mxu0
      %v1640 = vadd.f32 0.0, %v1639
      %v1641 = vpop.f32.mrf.mxu0
      %v1642 = vadd.f32 0.0, %v1641
      %1643 = vmatmul.bf16.gmra.mxu0 %v1607
      %v1644 = vpop.f32.mrf.mxu0
      %v1645 = vadd.f32 0.0, %v1644
      %v1646 = vpop.f32.mrf.mxu0
      %v1647 = vadd.f32 0.0, %v1646
      %1648 = vmatmul.bf16.gmra.mxu0 %v1610
      %v1649 = vpop.f32.mrf.mxu0
      %v1650 = vadd.f32 0.0, %v1649
      %v1651 = vpop.f32.mrf.mxu0
      %v1652 = vadd.f32 0.0, %v1651
      %1653 = vmatmul.bf16.gmra.mxu0 %v1613
      %v1654 = vpop.f32.mrf.mxu0
      %v1655 = vadd.f32 0.0, %v1654
      %v1656 = vpop.f32.mrf.mxu0
      %v1657 = vadd.f32 0.0, %v1656
      %1658 = vmatmul.bf16.gmra.mxu0 %v1616
      %v1659 = vpop.f32.mrf.mxu0
      %v1660 = vadd.f32 0.0, %v1659
      %v1661 = vpop.f32.mrf.mxu0
      %v1662 = vadd.f32 0.0, %v1661
      %1663 = vmatmul.bf16.gmra.mxu0 %v1619
      %v1664 = vpop.f32.mrf.mxu0
      %v1665 = vadd.f32 0.0, %v1664
      %v1666 = vpop.f32.mrf.mxu0
      %v1667 = vadd.f32 0.0, %v1666
      %1668 = vmatmul.bf16.gmra.mxu0 %v1622
      %v1669 = vpop.f32.mrf.mxu0
      %v1670 = vadd.f32 0.0, %v1669
      %v1671 = vpop.f32.mrf.mxu0
      %v1672 = vadd.f32 0.0, %v1671
      %1673 = vmatmul.bf16.gmra.mxu0 %v1625
      %v1674 = vpop.f32.mrf.mxu0
      %v1675 = vadd.f32 0.0, %v1674
      %v1676 = vpop.f32.mrf.mxu0
      %v1677 = vadd.f32 0.0, %v1676
      %1678 = vdwg.mxu0
      %v1679 = vadd.f32 %v1357, %v1640
      %v1680 = vadd.f32 %v1358, %v1642
      %v1681 = vadd.f32 %v1359, %v1645
      %v1682 = vadd.f32 %v1360, %v1647
      %v1683 = vadd.f32 %v1361, %v1650
      %v1684 = vadd.f32 %v1362, %v1652
      %v1685 = vadd.f32 %v1363, %v1655
      %v1686 = vadd.f32 %v1364, %v1657
      %v1687 = vadd.f32 %v1365, %v1660
      %v1688 = vadd.f32 %v1366, %v1662
      %v1689 = vadd.f32 %v1367, %v1665
      %v1690 = vadd.f32 %v1368, %v1667
      %v1691 = vadd.f32 %v1369, %v1670
      %v1692 = vadd.f32 %v1370, %v1672
      %v1693 = vadd.f32 %v1371, %v1675
      %v1694 = vadd.f32 %v1372, %v1677
      %s1695 = scalar_lea.vmem %s1, 8
      %v1696 = vld [vmem:[%s1695] sm:$0x3]
      %v1713 = vunpack.c.l.b16 %v1378
      %v1714 = vunpack.c.l.b16 %v1379
      %v1715 = vunpack.c.l.b16 %v1381
      %v1716 = vunpack.c.l.b16 %v1382
      %v1717 = vunpack.c.l.b16 %v1384
      %v1718 = vunpack.c.l.b16 %v1385
      %v1719 = vunpack.c.l.b16 %v1387
      %v1720 = vunpack.c.l.b16 %v1388
      %v1721 = vunpack.c.l.b16 %v1390
      %v1722 = vunpack.c.l.b16 %v1391
      %v1723 = vunpack.c.l.b16 %v1393
      %v1724 = vunpack.c.l.b16 %v1394
      %v1725 = vunpack.c.l.b16 %v1396
      %v1726 = vunpack.c.l.b16 %v1397
      %v1727 = vunpack.c.l.b16 %v1399
      %v1728 = vunpack.c.l.b16 %v1400
      %v1729 = vpack.c.b16 %v1714, %v1713
      %v1730 = vpack.c.b16 %v1716, %v1715
      %v1731 = vpack.c.b16 %v1718, %v1717
      %v1732 = vpack.c.b16 %v1720, %v1719
      %v1733 = vpack.c.b16 %v1722, %v1721
      %v1734 = vpack.c.b16 %v1724, %v1723
      %v1735 = vpack.c.b16 %v1726, %v1725
      %v1736 = vpack.c.b16 %v1728, %v1727
      %v1738 = vsel %vm858, %v1729, 0
      %v1741 = vsel %vm858, %v1730, 0
      %v1744 = vsel %vm858, %v1731, 0
      %v1747 = vsel %vm858, %v1732, 0
      %v1750 = vsel %vm858, %v1733, 0
      %v1753 = vsel %vm858, %v1734, 0
      %v1756 = vsel %vm858, %v1735, 0
      %v1759 = vsel %vm858, %v1736, 0
      %v1762 = vsel %vm883, %v1696, 0
      %1764 = vmatpush.bf16.msra.mxu0 0
      %1765 = vmatpush.bf16.msra.mxu0 0
      %1766 = vmatpush.bf16.msra.mxu0 0
      %1767 = vmatpush.bf16.msra.mxu0 0
      %1768 = vmatpush.bf16.msra.mxu0 0
      %1769 = vmatpush.bf16.msra.mxu0 0
      %1770 = vmatpush.bf16.msra.mxu0 0
      %1771 = vmatpush.bf16.msra.mxu0 %v1762
      %1772 = vmatmul.bf16.gmra.mxu0 %v1738
      %v1773 = vpop.f32.mrf.mxu0
      %v1774 = vadd.f32 0.0, %v1773
      %v1775 = vpop.f32.mrf.mxu0
      %v1776 = vadd.f32 0.0, %v1775
      %1777 = vmatmul.bf16.gmra.mxu0 %v1741
      %v1778 = vpop.f32.mrf.mxu0
      %v1779 = vadd.f32 0.0, %v1778
      %v1780 = vpop.f32.mrf.mxu0
      %v1781 = vadd.f32 0.0, %v1780
      %1782 = vmatmul.bf16.gmra.mxu0 %v1744
      %v1783 = vpop.f32.mrf.mxu0
      %v1784 = vadd.f32 0.0, %v1783
      %v1785 = vpop.f32.mrf.mxu0
      %v1786 = vadd.f32 0.0, %v1785
      %1787 = vmatmul.bf16.gmra.mxu0 %v1747
      %v1788 = vpop.f32.mrf.mxu0
      %v1789 = vadd.f32 0.0, %v1788
      %v1790 = vpop.f32.mrf.mxu0
      %v1791 = vadd.f32 0.0, %v1790
      %1792 = vmatmul.bf16.gmra.mxu0 %v1750
      %v1793 = vpop.f32.mrf.mxu0
      %v1794 = vadd.f32 0.0, %v1793
      %v1795 = vpop.f32.mrf.mxu0
      %v1796 = vadd.f32 0.0, %v1795
      %1797 = vmatmul.bf16.gmra.mxu0 %v1753
      %v1798 = vpop.f32.mrf.mxu0
      %v1799 = vadd.f32 0.0, %v1798
      %v1800 = vpop.f32.mrf.mxu0
      %v1801 = vadd.f32 0.0, %v1800
      %1802 = vmatmul.bf16.gmra.mxu0 %v1756
      %v1803 = vpop.f32.mrf.mxu0
      %v1804 = vadd.f32 0.0, %v1803
      %v1805 = vpop.f32.mrf.mxu0
      %v1806 = vadd.f32 0.0, %v1805
      %1807 = vmatmul.bf16.gmra.mxu0 %v1759
      %v1808 = vpop.f32.mrf.mxu0
      %v1809 = vadd.f32 0.0, %v1808
      %v1810 = vpop.f32.mrf.mxu0
      %v1811 = vadd.f32 0.0, %v1810
      %1812 = vdwg.mxu0
      %v1813 = vadd.f32 %v1679, %v1774
      %v1814 = vadd.f32 %v1680, %v1776
      %v1815 = vadd.f32 %v1681, %v1779
      %v1816 = vadd.f32 %v1682, %v1781
      %v1817 = vadd.f32 %v1683, %v1784
      %v1818 = vadd.f32 %v1684, %v1786
      %v1819 = vadd.f32 %v1685, %v1789
      %v1820 = vadd.f32 %v1686, %v1791
      %v1821 = vadd.f32 %v1687, %v1794
      %v1822 = vadd.f32 %v1688, %v1796
      %v1823 = vadd.f32 %v1689, %v1799
      %v1824 = vadd.f32 %v1690, %v1801
      %v1825 = vadd.f32 %v1691, %v1804
      %v1826 = vadd.f32 %v1692, %v1806
      %v1827 = vadd.f32 %v1693, %v1809
      %v1828 = vadd.f32 %v1694, %v1811
      %v1829 = vld [vmem:[%s1376 + $0x8] sm:$0xf]
      %v1830 = vld [vmem:[%s1376 + $0xc] sm:$0xf]
      %v1831 = vld [vmem:[%s1376 + $0x10] sm:$0x1]
      %v1832 = vld [vmem:[%s1376 + $0x1c] sm:$0xf]
      %v1833 = vld [vmem:[%s1376 + $0x20] sm:$0xf]
      %v1834 = vld [vmem:[%s1376 + $0x24] sm:$0x1]
      %v1835 = vld [vmem:[%s1376 + $0x30] sm:$0xf]
      %v1836 = vld [vmem:[%s1376 + $0x34] sm:$0xf]
      %v1837 = vld [vmem:[%s1376 + $0x38] sm:$0x1]
      %v1838 = vld [vmem:[%s1376 + $0x44] sm:$0xf]
      %v1839 = vld [vmem:[%s1376 + $0x48] sm:$0xf]
      %v1840 = vld [vmem:[%s1376 + $0x4c] sm:$0x1]
      %v1841 = vld [vmem:[%s1376 + $0x58] sm:$0xf]
      %v1842 = vld [vmem:[%s1376 + $0x5c] sm:$0xf]
      %v1843 = vld [vmem:[%s1376 + $0x60] sm:$0x1]
      %v1844 = vld [vmem:[%s1376 + $0x6c] sm:$0xf]
      %v1845 = vld [vmem:[%s1376 + $0x70] sm:$0xf]
      %v1846 = vld [vmem:[%s1376 + $0x74] sm:$0x1]
      %v1847 = vld [vmem:[%s1376 + $0x80] sm:$0xf]
      %v1848 = vld [vmem:[%s1376 + $0x84] sm:$0xf]
      %v1849 = vld [vmem:[%s1376 + $0x88] sm:$0x1]
      %v1850 = vld [vmem:[%s1376 + $0x94] sm:$0xf]
      %v1851 = vld [vmem:[%s1376 + $0x98] sm:$0xf]
      %v1852 = vld [vmem:[%s1376 + $0x9c] sm:$0x1]
      %v1854 = vshrl.u32 %v1829, 16
      %v1856 = vrot.slane %v1854, 4
      %v1857 = vshll.u32 %v1829, 16
      %v1859 = vrot.slane %v1857, 5
      %v1860 = vor.u32 %v1856, %v1859
      %v1861 = vrot.slane %v1860, 4
      %v1863 = vshll.u32 %v1830, 16
      %v1865 = vrot.slane %v1863, 5
      %v1866 = vsel %vm1062, %v1861, %v1865
      %v1867 = vshrl.u32 %v1830, 16
      %v1869 = vrot.slane %v1867, 4
      %v1870 = vor.u32 %v1869, %v1865
      %v1871 = vrot.slane %v1870, 4
      %v1873 = vshll.u32 %v1831, 16
      %v1875 = vrot.slane %v1873, 5
      %v1876 = vsel %vm1062, %v1871, %v1875
      %v1878 = vshrl.u32 %v1832, 16
      %v1880 = vrot.slane %v1878, 4
      %v1881 = vshll.u32 %v1832, 16
      %v1883 = vrot.slane %v1881, 5
      %v1884 = vor.u32 %v1880, %v1883
      %v1885 = vrot.slane %v1884, 4
      %v1887 = vshll.u32 %v1833, 16
      %v1889 = vrot.slane %v1887, 5
      %v1890 = vsel %vm1062, %v1885, %v1889
      %v1891 = vshrl.u32 %v1833, 16
      %v1893 = vrot.slane %v1891, 4
      %v1894 = vor.u32 %v1893, %v1889
      %v1895 = vrot.slane %v1894, 4
      %v1897 = vshll.u32 %v1834, 16
      %v1899 = vrot.slane %v1897, 5
      %v1900 = vsel %vm1062, %v1895, %v1899
      %v1902 = vshrl.u32 %v1835, 16
      %v1904 = vrot.slane %v1902, 4
      %v1905 = vshll.u32 %v1835, 16
      %v1907 = vrot.slane %v1905, 5
      %v1908 = vor.u32 %v1904, %v1907
      %v1909 = vrot.slane %v1908, 4
      %v1911 = vshll.u32 %v1836, 16
      %v1913 = vrot.slane %v1911, 5
      %v1914 = vsel %vm1062, %v1909, %v1913
      %v1915 = vshrl.u32 %v1836, 16
      %v1917 = vrot.slane %v1915, 4
      %v1918 = vor.u32 %v1917, %v1913
      %v1919 = vrot.slane %v1918, 4
      %v1921 = vshll.u32 %v1837, 16
      %v1923 = vrot.slane %v1921, 5
      %v1924 = vsel %vm1062, %v1919, %v1923
      %v1926 = vshrl.u32 %v1838, 16
      %v1928 = vrot.slane %v1926, 4
      %v1929 = vshll.u32 %v1838, 16
      %v1931 = vrot.slane %v1929, 5
      %v1932 = vor.u32 %v1928, %v1931
      %v1933 = vrot.slane %v1932, 4
      %v1935 = vshll.u32 %v1839, 16
      %v1937 = vrot.slane %v1935, 5
      %v1938 = vsel %vm1062, %v1933, %v1937
      %v1939 = vshrl.u32 %v1839, 16
      %v1941 = vrot.slane %v1939, 4
      %v1942 = vor.u32 %v1941, %v1937
      %v1943 = vrot.slane %v1942, 4
      %v1945 = vshll.u32 %v1840, 16
      %v1947 = vrot.slane %v1945, 5
      %v1948 = vsel %vm1062, %v1943, %v1947
      %v1950 = vshrl.u32 %v1841, 16
      %v1952 = vrot.slane %v1950, 4
      %v1953 = vshll.u32 %v1841, 16
      %v1955 = vrot.slane %v1953, 5
      %v1956 = vor.u32 %v1952, %v1955
      %v1957 = vrot.slane %v1956, 4
      %v1959 = vshll.u32 %v1842, 16
      %v1961 = vrot.slane %v1959, 5
      %v1962 = vsel %vm1062, %v1957, %v1961
      %v1963 = vshrl.u32 %v1842, 16
      %v1965 = vrot.slane %v1963, 4
      %v1966 = vor.u32 %v1965, %v1961
      %v1967 = vrot.slane %v1966, 4
      %v1969 = vshll.u32 %v1843, 16
      %v1971 = vrot.slane %v1969, 5
      %v1972 = vsel %vm1062, %v1967, %v1971
      %v1974 = vshrl.u32 %v1844, 16
      %v1976 = vrot.slane %v1974, 4
      %v1977 = vshll.u32 %v1844, 16
      %v1979 = vrot.slane %v1977, 5
      %v1980 = vor.u32 %v1976, %v1979
      %v1981 = vrot.slane %v1980, 4
      %v1983 = vshll.u32 %v1845, 16
      %v1985 = vrot.slane %v1983, 5
      %v1986 = vsel %vm1062, %v1981, %v1985
      %v1987 = vshrl.u32 %v1845, 16
      %v1989 = vrot.slane %v1987, 4
      %v1990 = vor.u32 %v1989, %v1985
      %v1991 = vrot.slane %v1990, 4
      %v1993 = vshll.u32 %v1846, 16
      %v1995 = vrot.slane %v1993, 5
      %v1996 = vsel %vm1062, %v1991, %v1995
      %v1998 = vshrl.u32 %v1847, 16
      %v2000 = vrot.slane %v1998, 4
      %v2001 = vshll.u32 %v1847, 16
      %v2003 = vrot.slane %v2001, 5
      %v2004 = vor.u32 %v2000, %v2003
      %v2005 = vrot.slane %v2004, 4
      %v2007 = vshll.u32 %v1848, 16
      %v2009 = vrot.slane %v2007, 5
      %v2010 = vsel %vm1062, %v2005, %v2009
      %v2011 = vshrl.u32 %v1848, 16
      %v2013 = vrot.slane %v2011, 4
      %v2014 = vor.u32 %v2013, %v2009
      %v2015 = vrot.slane %v2014, 4
      %v2017 = vshll.u32 %v1849, 16
      %v2019 = vrot.slane %v2017, 5
      %v2020 = vsel %vm1062, %v2015, %v2019
      %v2022 = vshrl.u32 %v1850, 16
      %v2024 = vrot.slane %v2022, 4
      %v2025 = vshll.u32 %v1850, 16
      %v2027 = vrot.slane %v2025, 5
      %v2028 = vor.u32 %v2024, %v2027
      %v2029 = vrot.slane %v2028, 4
      %v2031 = vshll.u32 %v1851, 16
      %v2033 = vrot.slane %v2031, 5
      %v2034 = vsel %vm1062, %v2029, %v2033
      %v2035 = vshrl.u32 %v1851, 16
      %v2037 = vrot.slane %v2035, 4
      %v2038 = vor.u32 %v2037, %v2033
      %v2039 = vrot.slane %v2038, 4
      %v2041 = vshll.u32 %v1852, 16
      %v2043 = vrot.slane %v2041, 5
      %v2044 = vsel %vm1062, %v2039, %v2043
      %s2045 = scalar_lea.vmem %s1, 10
      %v2046 = vld [vmem:[%s2045] sm:$0x3]
      %v2047 = vunpack.c.l.b16 %v1866
      %v2048 = vunpack.c.l.b16 %v1876
      %v2049 = vunpack.c.l.b16 %v1890
      %v2050 = vunpack.c.l.b16 %v1900
      %v2051 = vunpack.c.l.b16 %v1914
      %v2052 = vunpack.c.l.b16 %v1924
      %v2053 = vunpack.c.l.b16 %v1938
      %v2054 = vunpack.c.l.b16 %v1948
      %v2055 = vunpack.c.l.b16 %v1962
      %v2056 = vunpack.c.l.b16 %v1972
      %v2057 = vunpack.c.l.b16 %v1986
      %v2058 = vunpack.c.l.b16 %v1996
      %v2059 = vunpack.c.l.b16 %v2010
      %v2060 = vunpack.c.l.b16 %v2020
      %v2061 = vunpack.c.l.b16 %v2034
      %v2062 = vunpack.c.l.b16 %v2044
      %v2063 = vpack.c.b16 %v2048, %v2047
      %v2064 = vpack.c.b16 %v2050, %v2049
      %v2065 = vpack.c.b16 %v2052, %v2051
      %v2066 = vpack.c.b16 %v2054, %v2053
      %v2067 = vpack.c.b16 %v2056, %v2055
      %v2068 = vpack.c.b16 %v2058, %v2057
      %v2069 = vpack.c.b16 %v2060, %v2059
      %v2070 = vpack.c.b16 %v2062, %v2061
      %v2072 = vsel %vm858, %v2063, 0
      %v2075 = vsel %vm858, %v2064, 0
      %v2078 = vsel %vm858, %v2065, 0
      %v2081 = vsel %vm858, %v2066, 0
      %v2084 = vsel %vm858, %v2067, 0
      %v2087 = vsel %vm858, %v2068, 0
      %v2090 = vsel %vm858, %v2069, 0
      %v2093 = vsel %vm858, %v2070, 0
      %v2096 = vsel %vm883, %v2046, 0
      %2098 = vmatpush.bf16.msra.mxu0 0
      %2099 = vmatpush.bf16.msra.mxu0 0
      %2100 = vmatpush.bf16.msra.mxu0 0
      %2101 = vmatpush.bf16.msra.mxu0 0
      %2102 = vmatpush.bf16.msra.mxu0 0
      %2103 = vmatpush.bf16.msra.mxu0 0
      %2104 = vmatpush.bf16.msra.mxu0 0
      %2105 = vmatpush.bf16.msra.mxu0 %v2096
      %2106 = vmatmul.bf16.gmra.mxu0 %v2072
      %v2107 = vpop.f32.mrf.mxu0
      %v2108 = vadd.f32 0.0, %v2107
      %v2109 = vpop.f32.mrf.mxu0
      %v2110 = vadd.f32 0.0, %v2109
      %2111 = vmatmul.bf16.gmra.mxu0 %v2075
      %v2112 = vpop.f32.mrf.mxu0
      %v2113 = vadd.f32 0.0, %v2112
      %v2114 = vpop.f32.mrf.mxu0
      %v2115 = vadd.f32 0.0, %v2114
      %2116 = vmatmul.bf16.gmra.mxu0 %v2078
      %v2117 = vpop.f32.mrf.mxu0
      %v2118 = vadd.f32 0.0, %v2117
      %v2119 = vpop.f32.mrf.mxu0
      %v2120 = vadd.f32 0.0, %v2119
      %2121 = vmatmul.bf16.gmra.mxu0 %v2081
      %v2122 = vpop.f32.mrf.mxu0
      %v2123 = vadd.f32 0.0, %v2122
      %v2124 = vpop.f32.mrf.mxu0
      %v2125 = vadd.f32 0.0, %v2124
      %2126 = vmatmul.bf16.gmra.mxu0 %v2084
      %v2127 = vpop.f32.mrf.mxu0
      %v2128 = vadd.f32 0.0, %v2127
      %v2129 = vpop.f32.mrf.mxu0
      %v2130 = vadd.f32 0.0, %v2129
      %2131 = vmatmul.bf16.gmra.mxu0 %v2087
      %v2132 = vpop.f32.mrf.mxu0
      %v2133 = vadd.f32 0.0, %v2132
      %v2134 = vpop.f32.mrf.mxu0
      %v2135 = vadd.f32 0.0, %v2134
      %2136 = vmatmul.bf16.gmra.mxu0 %v2090
      %v2137 = vpop.f32.mrf.mxu0
      %v2138 = vadd.f32 0.0, %v2137
      %v2139 = vpop.f32.mrf.mxu0
      %v2140 = vadd.f32 0.0, %v2139
      %2141 = vmatmul.bf16.gmra.mxu0 %v2093
      %v2142 = vpop.f32.mrf.mxu0
      %v2143 = vadd.f32 0.0, %v2142
      %v2144 = vpop.f32.mrf.mxu0
      %v2145 = vadd.f32 0.0, %v2144
      %2146 = vdwg.mxu0
      %v2147 = vadd.f32 %v1813, %v2108
      %v2148 = vadd.f32 %v1814, %v2110
      %v2149 = vadd.f32 %v1815, %v2113
      %v2150 = vadd.f32 %v1816, %v2115
      %v2151 = vadd.f32 %v1817, %v2118
      %v2152 = vadd.f32 %v1818, %v2120
      %v2153 = vadd.f32 %v1819, %v2123
      %v2154 = vadd.f32 %v1820, %v2125
      %v2155 = vadd.f32 %v1821, %v2128
      %v2156 = vadd.f32 %v1822, %v2130
      %v2157 = vadd.f32 %v1823, %v2133
      %v2158 = vadd.f32 %v1824, %v2135
      %v2159 = vadd.f32 %v1825, %v2138
      %v2160 = vadd.f32 %v1826, %v2140
      %v2161 = vadd.f32 %v1827, %v2143
      %v2162 = vadd.f32 %v1828, %v2145
      %s2163 = sadd.s32 %s608, 2
      %s2164 = smul.u32 %s2163, 5
      %s2165 = smul.addr %s2164, 4
      %s2166 = scalar_lea.vmem [#allocation2], %s2165
      %v2167 = vld [vmem:[%s2166 + $0x4] sm:$0x8]
      %v2168 = vld [vmem:[%s2166 + $0x8] sm:$0xf]
      %v2169 = vld [vmem:[%s2166 + $0xc] sm:$0xf]
      %v2170 = vld [vmem:[%s2166 + $0x18] sm:$0x8]
      %v2171 = vld [vmem:[%s2166 + $0x1c] sm:$0xf]
      %v2172 = vld [vmem:[%s2166 + $0x20] sm:$0xf]
      %v2173 = vld [vmem:[%s2166 + $0x2c] sm:$0x8]
      %v2174 = vld [vmem:[%s2166 + $0x30] sm:$0xf]
      %v2175 = vld [vmem:[%s2166 + $0x34] sm:$0xf]
      %v2176 = vld [vmem:[%s2166 + $0x40] sm:$0x8]
      %v2177 = vld [vmem:[%s2166 + $0x44] sm:$0xf]
      %v2178 = vld [vmem:[%s2166 + $0x48] sm:$0xf]
      %v2179 = vld [vmem:[%s2166 + $0x54] sm:$0x8]
      %v2180 = vld [vmem:[%s2166 + $0x58] sm:$0xf]
      %v2181 = vld [vmem:[%s2166 + $0x5c] sm:$0xf]
      %v2182 = vld [vmem:[%s2166 + $0x68] sm:$0x8]
      %v2183 = vld [vmem:[%s2166 + $0x6c] sm:$0xf]
      %v2184 = vld [vmem:[%s2166 + $0x70] sm:$0xf]
      %v2185 = vld [vmem:[%s2166 + $0x7c] sm:$0x8]
      %v2186 = vld [vmem:[%s2166 + $0x80] sm:$0xf]
      %v2187 = vld [vmem:[%s2166 + $0x84] sm:$0xf]
      %v2188 = vld [vmem:[%s2166 + $0x90] sm:$0x8]
      %v2189 = vld [vmem:[%s2166 + $0x94] sm:$0xf]
      %v2190 = vld [vmem:[%s2166 + $0x98] sm:$0xf]
      %v2192 = vshrl.u32 %v2167, 16
      %v2194 = vrot.slane %v2192, 7
      %v2195 = vrot.slane %v2194, 4
      %v2197 = vshrl.u32 %v2168, 16
      %v2199 = vrot.slane %v2197, 7
      %v2200 = vshll.u32 %v2168, 16
      %v2202 = vor.u32 %v2199, %v2200
      %v2203 = vsel %vm638, %v2195, %v2202
      %v2204 = vrot.slane %v2199, 4
      %v2206 = vshrl.u32 %v2169, 16
      %v2208 = vrot.slane %v2206, 7
      %v2209 = vshll.u32 %v2169, 16
      %v2211 = vor.u32 %v2208, %v2209
      %v2212 = vsel %vm638, %v2204, %v2211
      %v2214 = vshrl.u32 %v2170, 16
      %v2216 = vrot.slane %v2214, 7
      %v2217 = vrot.slane %v2216, 4
      %v2219 = vshrl.u32 %v2171, 16
      %v2221 = vrot.slane %v2219, 7
      %v2222 = vshll.u32 %v2171, 16
      %v2224 = vor.u32 %v2221, %v2222
      %v2225 = vsel %vm638, %v2217, %v2224
      %v2226 = vrot.slane %v2221, 4
      %v2228 = vshrl.u32 %v2172, 16
      %v2230 = vrot.slane %v2228, 7
      %v2231 = vshll.u32 %v2172, 16
      %v2233 = vor.u32 %v2230, %v2231
      %v2234 = vsel %vm638, %v2226, %v2233
      %v2236 = vshrl.u32 %v2173, 16
      %v2238 = vrot.slane %v2236, 7
      %v2239 = vrot.slane %v2238, 4
      %v2241 = vshrl.u32 %v2174, 16
      %v2243 = vrot.slane %v2241, 7
      %v2244 = vshll.u32 %v2174, 16
      %v2246 = vor.u32 %v2243, %v2244
      %v2247 = vsel %vm638, %v2239, %v2246
      %v2248 = vrot.slane %v2243, 4
      %v2250 = vshrl.u32 %v2175, 16
      %v2252 = vrot.slane %v2250, 7
      %v2253 = vshll.u32 %v2175, 16
      %v2255 = vor.u32 %v2252, %v2253
      %v2256 = vsel %vm638, %v2248, %v2255
      %v2258 = vshrl.u32 %v2176, 16
      %v2260 = vrot.slane %v2258, 7
      %v2261 = vrot.slane %v2260, 4
      %v2263 = vshrl.u32 %v2177, 16
      %v2265 = vrot.slane %v2263, 7
      %v2266 = vshll.u32 %v2177, 16
      %v2268 = vor.u32 %v2265, %v2266
      %v2269 = vsel %vm638, %v2261, %v2268
      %v2270 = vrot.slane %v2265, 4
      %v2272 = vshrl.u32 %v2178, 16
      %v2274 = vrot.slane %v2272, 7
      %v2275 = vshll.u32 %v2178, 16
      %v2277 = vor.u32 %v2274, %v2275
      %v2278 = vsel %vm638, %v2270, %v2277
      %v2280 = vshrl.u32 %v2179, 16
      %v2282 = vrot.slane %v2280, 7
      %v2283 = vrot.slane %v2282, 4
      %v2285 = vshrl.u32 %v2180, 16
      %v2287 = vrot.slane %v2285, 7
      %v2288 = vshll.u32 %v2180, 16
      %v2290 = vor.u32 %v2287, %v2288
      %v2291 = vsel %vm638, %v2283, %v2290
      %v2292 = vrot.slane %v2287, 4
      %v2294 = vshrl.u32 %v2181, 16
      %v2296 = vrot.slane %v2294, 7
      %v2297 = vshll.u32 %v2181, 16
      %v2299 = vor.u32 %v2296, %v2297
      %v2300 = vsel %vm638, %v2292, %v2299
      %v2302 = vshrl.u32 %v2182, 16
      %v2304 = vrot.slane %v2302, 7
      %v2305 = vrot.slane %v2304, 4
      %v2307 = vshrl.u32 %v2183, 16
      %v2309 = vrot.slane %v2307, 7
      %v2310 = vshll.u32 %v2183, 16
      %v2312 = vor.u32 %v2309, %v2310
      %v2313 = vsel %vm638, %v2305, %v2312
      %v2314 = vrot.slane %v2309, 4
      %v2316 = vshrl.u32 %v2184, 16
      %v2318 = vrot.slane %v2316, 7
      %v2319 = vshll.u32 %v2184, 16
      %v2321 = vor.u32 %v2318, %v2319
      %v2322 = vsel %vm638, %v2314, %v2321
      %v2324 = vshrl.u32 %v2185, 16
      %v2326 = vrot.slane %v2324, 7
      %v2327 = vrot.slane %v2326, 4
      %v2329 = vshrl.u32 %v2186, 16
      %v2331 = vrot.slane %v2329, 7
      %v2332 = vshll.u32 %v2186, 16
      %v2334 = vor.u32 %v2331, %v2332
      %v2335 = vsel %vm638, %v2327, %v2334
      %v2336 = vrot.slane %v2331, 4
      %v2338 = vshrl.u32 %v2187, 16
      %v2340 = vrot.slane %v2338, 7
      %v2341 = vshll.u32 %v2187, 16
      %v2343 = vor.u32 %v2340, %v2341
      %v2344 = vsel %vm638, %v2336, %v2343
      %v2346 = vshrl.u32 %v2188, 16
      %v2348 = vrot.slane %v2346, 7
      %v2349 = vrot.slane %v2348, 4
      %v2351 = vshrl.u32 %v2189, 16
      %v2353 = vrot.slane %v2351, 7
      %v2354 = vshll.u32 %v2189, 16
      %v2356 = vor.u32 %v2353, %v2354
      %v2357 = vsel %vm638, %v2349, %v2356
      %v2358 = vrot.slane %v2353, 4
      %v2360 = vshrl.u32 %v2190, 16
      %v2362 = vrot.slane %v2360, 7
      %v2363 = vshll.u32 %v2190, 16
      %v2365 = vor.u32 %v2362, %v2363
      %v2366 = vsel %vm638, %v2358, %v2365
      %s2367 = scalar_lea.vmem %s1, 12
      %v2368 = vld [vmem:[%s2367] sm:$0x3]
      %v2369 = vunpack.c.l.b16 %v2203
      %v2370 = vunpack.c.l.b16 %v2212
      %v2371 = vunpack.c.l.b16 %v2225
      %v2372 = vunpack.c.l.b16 %v2234
      %v2373 = vunpack.c.l.b16 %v2247
      %v2374 = vunpack.c.l.b16 %v2256
      %v2375 = vunpack.c.l.b16 %v2269
      %v2376 = vunpack.c.l.b16 %v2278
      %v2377 = vunpack.c.l.b16 %v2291
      %v2378 = vunpack.c.l.b16 %v2300
      %v2379 = vunpack.c.l.b16 %v2313
      %v2380 = vunpack.c.l.b16 %v2322
      %v2381 = vunpack.c.l.b16 %v2335
      %v2382 = vunpack.c.l.b16 %v2344
      %v2383 = vunpack.c.l.b16 %v2357
      %v2384 = vunpack.c.l.b16 %v2366
      %v2385 = vpack.c.b16 %v2370, %v2369
      %v2386 = vpack.c.b16 %v2372, %v2371
      %v2387 = vpack.c.b16 %v2374, %v2373
      %v2388 = vpack.c.b16 %v2376, %v2375
      %v2389 = vpack.c.b16 %v2378, %v2377
      %v2390 = vpack.c.b16 %v2380, %v2379
      %v2391 = vpack.c.b16 %v2382, %v2381
      %v2392 = vpack.c.b16 %v2384, %v2383
      %v2394 = vsel %vm858, %v2385, 0
      %v2397 = vsel %vm858, %v2386, 0
      %v2400 = vsel %vm858, %v2387, 0
      %v2403 = vsel %vm858, %v2388, 0
      %v2406 = vsel %vm858, %v2389, 0
      %v2409 = vsel %vm858, %v2390, 0
      %v2412 = vsel %vm858, %v2391, 0
      %v2415 = vsel %vm858, %v2392, 0
      %v2418 = vsel %vm883, %v2368, 0
      %2420 = vmatpush.bf16.msra.mxu0 0
      %2421 = vmatpush.bf16.msra.mxu0 0
      %2422 = vmatpush.bf16.msra.mxu0 0
      %2423 = vmatpush.bf16.msra.mxu0 0
      %2424 = vmatpush.bf16.msra.mxu0 0
      %2425 = vmatpush.bf16.msra.mxu0 0
      %2426 = vmatpush.bf16.msra.mxu0 0
      %2427 = vmatpush.bf16.msra.mxu0 %v2418
      %2428 = vmatmul.bf16.gmra.mxu0 %v2394
      %v2429 = vpop.f32.mrf.mxu0
      %v2430 = vadd.f32 0.0, %v2429
      %v2431 = vpop.f32.mrf.mxu0
      %v2432 = vadd.f32 0.0, %v2431
      %2433 = vmatmul.bf16.gmra.mxu0 %v2397
      %v2434 = vpop.f32.mrf.mxu0
      %v2435 = vadd.f32 0.0, %v2434
      %v2436 = vpop.f32.mrf.mxu0
      %v2437 = vadd.f32 0.0, %v2436
      %2438 = vmatmul.bf16.gmra.mxu0 %v2400
      %v2439 = vpop.f32.mrf.mxu0
      %v2440 = vadd.f32 0.0, %v2439
      %v2441 = vpop.f32.mrf.mxu0
      %v2442 = vadd.f32 0.0, %v2441
      %2443 = vmatmul.bf16.gmra.mxu0 %v2403
      %v2444 = vpop.f32.mrf.mxu0
      %v2445 = vadd.f32 0.0, %v2444
      %v2446 = vpop.f32.mrf.mxu0
      %v2447 = vadd.f32 0.0, %v2446
      %2448 = vmatmul.bf16.gmra.mxu0 %v2406
      %v2449 = vpop.f32.mrf.mxu0
      %v2450 = vadd.f32 0.0, %v2449
      %v2451 = vpop.f32.mrf.mxu0
      %v2452 = vadd.f32 0.0, %v2451
      %2453 = vmatmul.bf16.gmra.mxu0 %v2409
      %v2454 = vpop.f32.mrf.mxu0
      %v2455 = vadd.f32 0.0, %v2454
      %v2456 = vpop.f32.mrf.mxu0
      %v2457 = vadd.f32 0.0, %v2456
      %2458 = vmatmul.bf16.gmra.mxu0 %v2412
      %v2459 = vpop.f32.mrf.mxu0
      %v2460 = vadd.f32 0.0, %v2459
      %v2461 = vpop.f32.mrf.mxu0
      %v2462 = vadd.f32 0.0, %v2461
      %2463 = vmatmul.bf16.gmra.mxu0 %v2415
      %v2464 = vpop.f32.mrf.mxu0
      %v2465 = vadd.f32 0.0, %v2464
      %v2466 = vpop.f32.mrf.mxu0
      %v2467 = vadd.f32 0.0, %v2466
      %2468 = vdwg.mxu0
      %v2469 = vadd.f32 %v2147, %v2430
      %v2470 = vadd.f32 %v2148, %v2432
      %v2471 = vadd.f32 %v2149, %v2435
      %v2472 = vadd.f32 %v2150, %v2437
      %v2473 = vadd.f32 %v2151, %v2440
      %v2474 = vadd.f32 %v2152, %v2442
      %v2475 = vadd.f32 %v2153, %v2445
      %v2476 = vadd.f32 %v2154, %v2447
      %v2477 = vadd.f32 %v2155, %v2450
      %v2478 = vadd.f32 %v2156, %v2452
      %v2479 = vadd.f32 %v2157, %v2455
      %v2480 = vadd.f32 %v2158, %v2457
      %v2481 = vadd.f32 %v2159, %v2460
      %v2482 = vadd.f32 %v2160, %v2462
      %v2483 = vadd.f32 %v2161, %v2465
      %v2484 = vadd.f32 %v2162, %v2467
      %s2485 = scalar_lea.vmem %s1, 14
      %v2486 = vld [vmem:[%s2485] sm:$0x3]
      %v2503 = vunpack.c.l.b16 %v2168
      %v2504 = vunpack.c.l.b16 %v2169
      %v2505 = vunpack.c.l.b16 %v2171
      %v2506 = vunpack.c.l.b16 %v2172
      %v2507 = vunpack.c.l.b16 %v2174
      %v2508 = vunpack.c.l.b16 %v2175
      %v2509 = vunpack.c.l.b16 %v2177
      %v2510 = vunpack.c.l.b16 %v2178
      %v2511 = vunpack.c.l.b16 %v2180
      %v2512 = vunpack.c.l.b16 %v2181
      %v2513 = vunpack.c.l.b16 %v2183
      %v2514 = vunpack.c.l.b16 %v2184
      %v2515 = vunpack.c.l.b16 %v2186
      %v2516 = vunpack.c.l.b16 %v2187
      %v2517 = vunpack.c.l.b16 %v2189
      %v2518 = vunpack.c.l.b16 %v2190
      %v2519 = vpack.c.b16 %v2504, %v2503
      %v2520 = vpack.c.b16 %v2506, %v2505
      %v2521 = vpack.c.b16 %v2508, %v2507
      %v2522 = vpack.c.b16 %v2510, %v2509
      %v2523 = vpack.c.b16 %v2512, %v2511
      %v2524 = vpack.c.b16 %v2514, %v2513
      %v2525 = vpack.c.b16 %v2516, %v2515
      %v2526 = vpack.c.b16 %v2518, %v2517
      %v2528 = vsel %vm858, %v2519, 0
      %v2531 = vsel %vm858, %v2520, 0
      %v2534 = vsel %vm858, %v2521, 0
      %v2537 = vsel %vm858, %v2522, 0
      %v2540 = vsel %vm858, %v2523, 0
      %v2543 = vsel %vm858, %v2524, 0
      %v2546 = vsel %vm858, %v2525, 0
      %v2549 = vsel %vm858, %v2526, 0
      %v2552 = vsel %vm883, %v2486, 0
      %2554 = vmatpush.bf16.msra.mxu0 0
      %2555 = vmatpush.bf16.msra.mxu0 0
      %2556 = vmatpush.bf16.msra.mxu0 0
      %2557 = vmatpush.bf16.msra.mxu0 0
      %2558 = vmatpush.bf16.msra.mxu0 0
      %2559 = vmatpush.bf16.msra.mxu0 0
      %2560 = vmatpush.bf16.msra.mxu0 0
      %2561 = vmatpush.bf16.msra.mxu0 %v2552
      %2562 = vmatmul.bf16.gmra.mxu0 %v2528
      %v2563 = vpop.f32.mrf.mxu0
      %v2564 = vadd.f32 0.0, %v2563
      %v2565 = vpop.f32.mrf.mxu0
      %v2566 = vadd.f32 0.0, %v2565
      %2567 = vmatmul.bf16.gmra.mxu0 %v2531
      %v2568 = vpop.f32.mrf.mxu0
      %v2569 = vadd.f32 0.0, %v2568
      %v2570 = vpop.f32.mrf.mxu0
      %v2571 = vadd.f32 0.0, %v2570
      %2572 = vmatmul.bf16.gmra.mxu0 %v2534
      %v2573 = vpop.f32.mrf.mxu0
      %v2574 = vadd.f32 0.0, %v2573
      %v2575 = vpop.f32.mrf.mxu0
      %v2576 = vadd.f32 0.0, %v2575
      %2577 = vmatmul.bf16.gmra.mxu0 %v2537
      %v2578 = vpop.f32.mrf.mxu0
      %v2579 = vadd.f32 0.0, %v2578
      %v2580 = vpop.f32.mrf.mxu0
      %v2581 = vadd.f32 0.0, %v2580
      %2582 = vmatmul.bf16.gmra.mxu0 %v2540
      %v2583 = vpop.f32.mrf.mxu0
      %v2584 = vadd.f32 0.0, %v2583
      %v2585 = vpop.f32.mrf.mxu0
      %v2586 = vadd.f32 0.0, %v2585
      %2587 = vmatmul.bf16.gmra.mxu0 %v2543
      %v2588 = vpop.f32.mrf.mxu0
      %v2589 = vadd.f32 0.0, %v2588
      %v2590 = vpop.f32.mrf.mxu0
      %v2591 = vadd.f32 0.0, %v2590
      %2592 = vmatmul.bf16.gmra.mxu0 %v2546
      %v2593 = vpop.f32.mrf.mxu0
      %v2594 = vadd.f32 0.0, %v2593
      %v2595 = vpop.f32.mrf.mxu0
      %v2596 = vadd.f32 0.0, %v2595
      %2597 = vmatmul.bf16.gmra.mxu0 %v2549
      %v2598 = vpop.f32.mrf.mxu0
      %v2599 = vadd.f32 0.0, %v2598
      %v2600 = vpop.f32.mrf.mxu0
      %v2601 = vadd.f32 0.0, %v2600
      %2602 = vdwg.mxu0
      %v2603 = vadd.f32 %v2469, %v2564
      %v2604 = vadd.f32 %v2470, %v2566
      %v2605 = vadd.f32 %v2471, %v2569
      %v2606 = vadd.f32 %v2472, %v2571
      %v2607 = vadd.f32 %v2473, %v2574
      %v2608 = vadd.f32 %v2474, %v2576
      %v2609 = vadd.f32 %v2475, %v2579
      %v2610 = vadd.f32 %v2476, %v2581
      %v2611 = vadd.f32 %v2477, %v2584
      %v2612 = vadd.f32 %v2478, %v2586
      %v2613 = vadd.f32 %v2479, %v2589
      %v2614 = vadd.f32 %v2480, %v2591
      %v2615 = vadd.f32 %v2481, %v2594
      %v2616 = vadd.f32 %v2482, %v2596
      %v2617 = vadd.f32 %v2483, %v2599
      %v2618 = vadd.f32 %v2484, %v2601
      %v2619 = vld [vmem:[%s2166 + $0x8] sm:$0xf]
      %v2620 = vld [vmem:[%s2166 + $0xc] sm:$0xf]
      %v2621 = vld [vmem:[%s2166 + $0x10] sm:$0x1]
      %v2622 = vld [vmem:[%s2166 + $0x1c] sm:$0xf]
      %v2623 = vld [vmem:[%s2166 + $0x20] sm:$0xf]
      %v2624 = vld [vmem:[%s2166 + $0x24] sm:$0x1]
      %v2625 = vld [vmem:[%s2166 + $0x30] sm:$0xf]
      %v2626 = vld [vmem:[%s2166 + $0x34] sm:$0xf]
      %v2627 = vld [vmem:[%s2166 + $0x38] sm:$0x1]
      %v2628 = vld [vmem:[%s2166 + $0x44] sm:$0xf]
      %v2629 = vld [vmem:[%s2166 + $0x48] sm:$0xf]
      %v2630 = vld [vmem:[%s2166 + $0x4c] sm:$0x1]
      %v2631 = vld [vmem:[%s2166 + $0x58] sm:$0xf]
      %v2632 = vld [vmem:[%s2166 + $0x5c] sm:$0xf]
      %v2633 = vld [vmem:[%s2166 + $0x60] sm:$0x1]
      %v2634 = vld [vmem:[%s2166 + $0x6c] sm:$0xf]
      %v2635 = vld [vmem:[%s2166 + $0x70] sm:$0xf]
      %v2636 = vld [vmem:[%s2166 + $0x74] sm:$0x1]
      %v2637 = vld [vmem:[%s2166 + $0x80] sm:$0xf]
      %v2638 = vld [vmem:[%s2166 + $0x84] sm:$0xf]
      %v2639 = vld [vmem:[%s2166 + $0x88] sm:$0x1]
      %v2640 = vld [vmem:[%s2166 + $0x94] sm:$0xf]
      %v2641 = vld [vmem:[%s2166 + $0x98] sm:$0xf]
      %v2642 = vld [vmem:[%s2166 + $0x9c] sm:$0x1]
      %v2644 = vshrl.u32 %v2619, 16
      %v2646 = vrot.slane %v2644, 4
      %v2647 = vshll.u32 %v2619, 16
      %v2649 = vrot.slane %v2647, 5
      %v2650 = vor.u32 %v2646, %v2649
      %v2651 = vrot.slane %v2650, 4
      %v2653 = vshll.u32 %v2620, 16
      %v2655 = vrot.slane %v2653, 5
      %v2656 = vsel %vm1062, %v2651, %v2655
      %v2657 = vshrl.u32 %v2620, 16
      %v2659 = vrot.slane %v2657, 4
      %v2660 = vor.u32 %v2659, %v2655
      %v2661 = vrot.slane %v2660, 4
      %v2663 = vshll.u32 %v2621, 16
      %v2665 = vrot.slane %v2663, 5
      %v2666 = vsel %vm1062, %v2661, %v2665
      %v2668 = vshrl.u32 %v2622, 16
      %v2670 = vrot.slane %v2668, 4
      %v2671 = vshll.u32 %v2622, 16
      %v2673 = vrot.slane %v2671, 5
      %v2674 = vor.u32 %v2670, %v2673
      %v2675 = vrot.slane %v2674, 4
      %v2677 = vshll.u32 %v2623, 16
      %v2679 = vrot.slane %v2677, 5
      %v2680 = vsel %vm1062, %v2675, %v2679
      %v2681 = vshrl.u32 %v2623, 16
      %v2683 = vrot.slane %v2681, 4
      %v2684 = vor.u32 %v2683, %v2679
      %v2685 = vrot.slane %v2684, 4
      %v2687 = vshll.u32 %v2624, 16
      %v2689 = vrot.slane %v2687, 5
      %v2690 = vsel %vm1062, %v2685, %v2689
      %v2692 = vshrl.u32 %v2625, 16
      %v2694 = vrot.slane %v2692, 4
      %v2695 = vshll.u32 %v2625, 16
      %v2697 = vrot.slane %v2695, 5
      %v2698 = vor.u32 %v2694, %v2697
      %v2699 = vrot.slane %v2698, 4
      %v2701 = vshll.u32 %v2626, 16
      %v2703 = vrot.slane %v2701, 5
      %v2704 = vsel %vm1062, %v2699, %v2703
      %v2705 = vshrl.u32 %v2626, 16
      %v2707 = vrot.slane %v2705, 4
      %v2708 = vor.u32 %v2707, %v2703
      %v2709 = vrot.slane %v2708, 4
      %v2711 = vshll.u32 %v2627, 16
      %v2713 = vrot.slane %v2711, 5
      %v2714 = vsel %vm1062, %v2709, %v2713
      %v2716 = vshrl.u32 %v2628, 16
      %v2718 = vrot.slane %v2716, 4
      %v2719 = vshll.u32 %v2628, 16
      %v2721 = vrot.slane %v2719, 5
      %v2722 = vor.u32 %v2718, %v2721
      %v2723 = vrot.slane %v2722, 4
      %v2725 = vshll.u32 %v2629, 16
      %v2727 = vrot.slane %v2725, 5
      %v2728 = vsel %vm1062, %v2723, %v2727
      %v2729 = vshrl.u32 %v2629, 16
      %v2731 = vrot.slane %v2729, 4
      %v2732 = vor.u32 %v2731, %v2727
      %v2733 = vrot.slane %v2732, 4
      %v2735 = vshll.u32 %v2630, 16
      %v2737 = vrot.slane %v2735, 5
      %v2738 = vsel %vm1062, %v2733, %v2737
      %v2740 = vshrl.u32 %v2631, 16
      %v2742 = vrot.slane %v2740, 4
      %v2743 = vshll.u32 %v2631, 16
      %v2745 = vrot.slane %v2743, 5
      %v2746 = vor.u32 %v2742, %v2745
      %v2747 = vrot.slane %v2746, 4
      %v2749 = vshll.u32 %v2632, 16
      %v2751 = vrot.slane %v2749, 5
      %v2752 = vsel %vm1062, %v2747, %v2751
      %v2753 = vshrl.u32 %v2632, 16
      %v2755 = vrot.slane %v2753, 4
      %v2756 = vor.u32 %v2755, %v2751
      %v2757 = vrot.slane %v2756, 4
      %v2759 = vshll.u32 %v2633, 16
      %v2761 = vrot.slane %v2759, 5
      %v2762 = vsel %vm1062, %v2757, %v2761
      %v2764 = vshrl.u32 %v2634, 16
      %v2766 = vrot.slane %v2764, 4
      %v2767 = vshll.u32 %v2634, 16
      %v2769 = vrot.slane %v2767, 5
      %v2770 = vor.u32 %v2766, %v2769
      %v2771 = vrot.slane %v2770, 4
      %v2773 = vshll.u32 %v2635, 16
      %v2775 = vrot.slane %v2773, 5
      %v2776 = vsel %vm1062, %v2771, %v2775
      %v2777 = vshrl.u32 %v2635, 16
      %v2779 = vrot.slane %v2777, 4
      %v2780 = vor.u32 %v2779, %v2775
      %v2781 = vrot.slane %v2780, 4
      %v2783 = vshll.u32 %v2636, 16
      %v2785 = vrot.slane %v2783, 5
      %v2786 = vsel %vm1062, %v2781, %v2785
      %v2788 = vshrl.u32 %v2637, 16
      %v2790 = vrot.slane %v2788, 4
      %v2791 = vshll.u32 %v2637, 16
      %v2793 = vrot.slane %v2791, 5
      %v2794 = vor.u32 %v2790, %v2793
      %v2795 = vrot.slane %v2794, 4
      %v2797 = vshll.u32 %v2638, 16
      %v2799 = vrot.slane %v2797, 5
      %v2800 = vsel %vm1062, %v2795, %v2799
      %v2801 = vshrl.u32 %v2638, 16
      %v2803 = vrot.slane %v2801, 4
      %v2804 = vor.u32 %v2803, %v2799
      %v2805 = vrot.slane %v2804, 4
      %v2807 = vshll.u32 %v2639, 16
      %v2809 = vrot.slane %v2807, 5
      %v2810 = vsel %vm1062, %v2805, %v2809
      %v2812 = vshrl.u32 %v2640, 16
      %v2814 = vrot.slane %v2812, 4
      %v2815 = vshll.u32 %v2640, 16
      %v2817 = vrot.slane %v2815, 5
      %v2818 = vor.u32 %v2814, %v2817
      %v2819 = vrot.slane %v2818, 4
      %v2821 = vshll.u32 %v2641, 16
      %v2823 = vrot.slane %v2821, 5
      %v2824 = vsel %vm1062, %v2819, %v2823
      %v2825 = vshrl.u32 %v2641, 16
      %v2827 = vrot.slane %v2825, 4
      %v2828 = vor.u32 %v2827, %v2823
      %v2829 = vrot.slane %v2828, 4
      %v2831 = vshll.u32 %v2642, 16
      %v2833 = vrot.slane %v2831, 5
      %v2834 = vsel %vm1062, %v2829, %v2833
      %s2835 = scalar_lea.vmem %s1, 16
      %v2836 = vld [vmem:[%s2835] sm:$0x3]
      %v2837 = vunpack.c.l.b16 %v2656
      %v2838 = vunpack.c.l.b16 %v2666
      %v2839 = vunpack.c.l.b16 %v2680
      %v2840 = vunpack.c.l.b16 %v2690
      %v2841 = vunpack.c.l.b16 %v2704
      %v2842 = vunpack.c.l.b16 %v2714
      %v2843 = vunpack.c.l.b16 %v2728
      %v2844 = vunpack.c.l.b16 %v2738
      %v2845 = vunpack.c.l.b16 %v2752
      %v2846 = vunpack.c.l.b16 %v2762
      %v2847 = vunpack.c.l.b16 %v2776
      %v2848 = vunpack.c.l.b16 %v2786
      %v2849 = vunpack.c.l.b16 %v2800
      %v2850 = vunpack.c.l.b16 %v2810
      %v2851 = vunpack.c.l.b16 %v2824
      %v2852 = vunpack.c.l.b16 %v2834
      %v2853 = vpack.c.b16 %v2838, %v2837
      %v2854 = vpack.c.b16 %v2840, %v2839
      %v2855 = vpack.c.b16 %v2842, %v2841
      %v2856 = vpack.c.b16 %v2844, %v2843
      %v2857 = vpack.c.b16 %v2846, %v2845
      %v2858 = vpack.c.b16 %v2848, %v2847
      %v2859 = vpack.c.b16 %v2850, %v2849
      %v2860 = vpack.c.b16 %v2852, %v2851
      %v2862 = vsel %vm858, %v2853, 0
      %v2865 = vsel %vm858, %v2854, 0
      %v2868 = vsel %vm858, %v2855, 0
      %v2871 = vsel %vm858, %v2856, 0
      %v2874 = vsel %vm858, %v2857, 0
      %v2877 = vsel %vm858, %v2858, 0
      %v2880 = vsel %vm858, %v2859, 0
      %v2883 = vsel %vm858, %v2860, 0
      %v2886 = vsel %vm883, %v2836, 0
      %2888 = vmatpush.bf16.msra.mxu0 0
      %2889 = vmatpush.bf16.msra.mxu0 0
      %2890 = vmatpush.bf16.msra.mxu0 0
      %2891 = vmatpush.bf16.msra.mxu0 0
      %2892 = vmatpush.bf16.msra.mxu0 0
      %2893 = vmatpush.bf16.msra.mxu0 0
      %2894 = vmatpush.bf16.msra.mxu0 0
      %2895 = vmatpush.bf16.msra.mxu0 %v2886
      %2896 = vmatmul.bf16.gmra.mxu0 %v2862
      %v2897 = vpop.f32.mrf.mxu0
      %v2898 = vadd.f32 0.0, %v2897
      %v2899 = vpop.f32.mrf.mxu0
      %v2900 = vadd.f32 0.0, %v2899
      %2901 = vmatmul.bf16.gmra.mxu0 %v2865
      %v2902 = vpop.f32.mrf.mxu0
      %v2903 = vadd.f32 0.0, %v2902
      %v2904 = vpop.f32.mrf.mxu0
      %v2905 = vadd.f32 0.0, %v2904
      %2906 = vmatmul.bf16.gmra.mxu0 %v2868
      %v2907 = vpop.f32.mrf.mxu0
      %v2908 = vadd.f32 0.0, %v2907
      %v2909 = vpop.f32.mrf.mxu0
      %v2910 = vadd.f32 0.0, %v2909
      %2911 = vmatmul.bf16.gmra.mxu0 %v2871
      %v2912 = vpop.f32.mrf.mxu0
      %v2913 = vadd.f32 0.0, %v2912
      %v2914 = vpop.f32.mrf.mxu0
      %v2915 = vadd.f32 0.0, %v2914
      %2916 = vmatmul.bf16.gmra.mxu0 %v2874
      %v2917 = vpop.f32.mrf.mxu0
      %v2918 = vadd.f32 0.0, %v2917
      %v2919 = vpop.f32.mrf.mxu0
      %v2920 = vadd.f32 0.0, %v2919
      %2921 = vmatmul.bf16.gmra.mxu0 %v2877
      %v2922 = vpop.f32.mrf.mxu0
      %v2923 = vadd.f32 0.0, %v2922
      %v2924 = vpop.f32.mrf.mxu0
      %v2925 = vadd.f32 0.0, %v2924
      %2926 = vmatmul.bf16.gmra.mxu0 %v2880
      %v2927 = vpop.f32.mrf.mxu0
      %v2928 = vadd.f32 0.0, %v2927
      %v2929 = vpop.f32.mrf.mxu0
      %v2930 = vadd.f32 0.0, %v2929
      %2931 = vmatmul.bf16.gmra.mxu0 %v2883
      %v2932 = vpop.f32.mrf.mxu0
      %v2933 = vadd.f32 0.0, %v2932
      %v2934 = vpop.f32.mrf.mxu0
      %v2935 = vadd.f32 0.0, %v2934
      %2936 = vdwg.mxu0
      %v2937 = vadd.f32 %v2603, %v2898
      %v2938 = vadd.f32 %v2604, %v2900
      %v2939 = vadd.f32 %v2605, %v2903
      %v2940 = vadd.f32 %v2606, %v2905
      %v2941 = vadd.f32 %v2607, %v2908
      %v2942 = vadd.f32 %v2608, %v2910
      %v2943 = vadd.f32 %v2609, %v2913
      %v2944 = vadd.f32 %v2610, %v2915
      %v2945 = vadd.f32 %v2611, %v2918
      %v2946 = vadd.f32 %v2612, %v2920
      %v2947 = vadd.f32 %v2613, %v2923
      %v2948 = vadd.f32 %v2614, %v2925
      %v2949 = vadd.f32 %v2615, %v2928
      %v2950 = vadd.f32 %v2616, %v2930
      %v2951 = vadd.f32 %v2617, %v2933
      %v2952 = vadd.f32 %v2618, %v2935
      %v2953 = vpack.c.bf16 %v2937, %v2937
      %v2954 = vpack.c.bf16 %v2938, %v2938
      %v2955 = vpack.c.bf16 %v2939, %v2939
      %v2956 = vpack.c.bf16 %v2940, %v2940
      %v2957 = vpack.c.bf16 %v2941, %v2941
      %v2958 = vpack.c.bf16 %v2942, %v2942
      %v2959 = vpack.c.bf16 %v2943, %v2943
      %v2960 = vpack.c.bf16 %v2944, %v2944
      %v2961 = vpack.c.bf16 %v2945, %v2945
      %v2962 = vpack.c.bf16 %v2946, %v2946
      %v2963 = vpack.c.bf16 %v2947, %v2947
      %v2964 = vpack.c.bf16 %v2948, %v2948
      %v2965 = vpack.c.bf16 %v2949, %v2949
      %v2966 = vpack.c.bf16 %v2950, %v2950
      %v2967 = vpack.c.bf16 %v2951, %v2951
      %v2968 = vpack.c.bf16 %v2952, %v2952
      %vm2969 = vcmask 27648
      %2970 = vst.msk [vmem:[%s261] sm:$0xf] %vm2969, %v2953
      %2971 = vst.msk [vmem:[%s261 + $0x4] sm:$0xf] %vm2969, %v2954
      %2972 = vst.msk [vmem:[%s261 + $0x8] sm:$0xf] %vm2969, %v2955
      %2973 = vst.msk [vmem:[%s261 + $0xc] sm:$0xf] %vm2969, %v2956
      %2974 = vst.msk [vmem:[%s261 + $0x10] sm:$0xf] %vm2969, %v2957
      %2975 = vst.msk [vmem:[%s261 + $0x14] sm:$0xf] %vm2969, %v2958
      %2976 = vst.msk [vmem:[%s261 + $0x18] sm:$0xf] %vm2969, %v2959
      %2977 = vst.msk [vmem:[%s261 + $0x1c] sm:$0xf] %vm2969, %v2960
      %2978 = vst.msk [vmem:[%s261 + $0x20] sm:$0xf] %vm2969, %v2961
      %2979 = vst.msk [vmem:[%s261 + $0x24] sm:$0xf] %vm2969, %v2962
      %2980 = vst.msk [vmem:[%s261 + $0x28] sm:$0xf] %vm2969, %v2963
      %2981 = vst.msk [vmem:[%s261 + $0x2c] sm:$0xf] %vm2969, %v2964
      %2982 = vst.msk [vmem:[%s261 + $0x30] sm:$0xf] %vm2969, %v2965
      %2983 = vst.msk [vmem:[%s261 + $0x34] sm:$0xf] %vm2969, %v2966
      %2984 = vst.msk [vmem:[%s261 + $0x38] sm:$0xf] %vm2969, %v2967
      %2985 = vst.msk [vmem:[%s261 + $0x3c] sm:$0xf] %vm2969, %v2968
      %v2986 = vsel %vm858, %v2937, 0.0
      %v2987 = vsel %vm858, %v2938, 0.0
      %v2988 = vadd.f32 %v2986, %v2987
      %v2989 = vsel %vm858, %v2939, 0.0
      %v2990 = vadd.f32 %v2988, %v2989
      %v2991 = vsel %vm858, %v2940, 0.0
      %v2992 = vadd.f32 %v2990, %v2991
      %v2993 = vsel %vm858, %v2941, 0.0
      %v2994 = vadd.f32 %v2992, %v2993
      %v2995 = vsel %vm858, %v2942, 0.0
      %v2996 = vadd.f32 %v2994, %v2995
      %v2997 = vsel %vm858, %v2943, 0.0
      %v2998 = vadd.f32 %v2996, %v2997
      %v2999 = vsel %vm858, %v2944, 0.0
      %v3000 = vadd.f32 %v2998, %v2999
      %v3001 = vsel %vm858, %v2945, 0.0
      %v3002 = vadd.f32 %v3000, %v3001
      %v3003 = vsel %vm858, %v2946, 0.0
      %v3004 = vadd.f32 %v3002, %v3003
      %v3005 = vsel %vm858, %v2947, 0.0
      %v3006 = vadd.f32 %v3004, %v3005
      %v3007 = vsel %vm858, %v2948, 0.0
      %v3008 = vadd.f32 %v3006, %v3007
      %v3009 = vsel %vm858, %v2949, 0.0
      %v3010 = vadd.f32 %v3008, %v3009
      %v3011 = vsel %vm858, %v2950, 0.0
      %v3012 = vadd.f32 %v3010, %v3011
      %v3013 = vsel %vm858, %v2951, 0.0
      %v3014 = vadd.f32 %v3012, %v3013
      %v3015 = vsel %vm858, %v2952, 0.0
      %v3016 = vadd.f32 %v3014, %v3015
      %v3017 = vrot.slane %v3016, 4
      %v3018 = vadd.f32 %v3016, %v3017
      %v3019 = vrot.slane %v3018, 2
      %v3020 = vadd.f32 %v3018, %v3019
      %v3021 = vrot.slane %v3020, 1
      %v3022 = vadd.f32 %v3020, %v3021
      %v3023 = vmul.f32 %v2937, %v2937
      %v3024 = vmul.f32 %v2938, %v2938
      %v3025 = vmul.f32 %v2939, %v2939
      %v3026 = vmul.f32 %v2940, %v2940
      %v3027 = vmul.f32 %v2941, %v2941
      %v3028 = vmul.f32 %v2942, %v2942
      %v3029 = vmul.f32 %v2943, %v2943
      %v3030 = vmul.f32 %v2944, %v2944
      %v3031 = vmul.f32 %v2945, %v2945
      %v3032 = vmul.f32 %v2946, %v2946
      %v3033 = vmul.f32 %v2947, %v2947
      %v3034 = vmul.f32 %v2948, %v2948
      %v3035 = vmul.f32 %v2949, %v2949
      %v3036 = vmul.f32 %v2950, %v2950
      %v3037 = vmul.f32 %v2951, %v2951
      %v3038 = vmul.f32 %v2952, %v2952
      %v3039 = vsel %vm858, %v3023, 0.0
      %v3040 = vsel %vm858, %v3024, 0.0
      %v3041 = vadd.f32 %v3039, %v3040
      %v3042 = vsel %vm858, %v3025, 0.0
      %v3043 = vadd.f32 %v3041, %v3042
      %v3044 = vsel %vm858, %v3026, 0.0
      %v3045 = vadd.f32 %v3043, %v3044
      %v3046 = vsel %vm858, %v3027, 0.0
      %v3047 = vadd.f32 %v3045, %v3046
      %v3048 = vsel %vm858, %v3028, 0.0
      %v3049 = vadd.f32 %v3047, %v3048
      %v3050 = vsel %vm858, %v3029, 0.0
      %v3051 = vadd.f32 %v3049, %v3050
      %v3052 = vsel %vm858, %v3030, 0.0
      %v3053 = vadd.f32 %v3051, %v3052
      %v3054 = vsel %vm858, %v3031, 0.0
      %v3055 = vadd.f32 %v3053, %v3054
      %v3056 = vsel %vm858, %v3032, 0.0
      %v3057 = vadd.f32 %v3055, %v3056
      %v3058 = vsel %vm858, %v3033, 0.0
      %v3059 = vadd.f32 %v3057, %v3058
      %v3060 = vsel %vm858, %v3034, 0.0
      %v3061 = vadd.f32 %v3059, %v3060
      %v3062 = vsel %vm858, %v3035, 0.0
      %v3063 = vadd.f32 %v3061, %v3062
      %v3064 = vsel %vm858, %v3036, 0.0
      %v3065 = vadd.f32 %v3063, %v3064
      %v3066 = vsel %vm858, %v3037, 0.0
      %v3067 = vadd.f32 %v3065, %v3066
      %v3068 = vsel %vm858, %v3038, 0.0
      %v3069 = vadd.f32 %v3067, %v3068
      %v3070 = vrot.slane %v3069, 4
      %v3071 = vadd.f32 %v3069, %v3070
      %v3072 = vrot.slane %v3071, 2
      %v3073 = vadd.f32 %v3071, %v3072
      %v3074 = vrot.slane %v3073, 1
      %v3075 = vadd.f32 %v3073, %v3074
      %v3076 = vlaneseq
      %v3077 = vshrl.u32 %v3076, 7
      %vm3078 = vcmp.eq.s32.totalorder %v3077, 0
      %vm3079 = vcmp.eq.s32.totalorder %v3077, 1
      %v3080 = vsel %vm3079, %v3075, 0.0
      %v3081 = vsel %vm3078, %v3022, %v3080
      %3082 = vst.msk [vmem:[%s268] sm:$0xff] %vm858, %v3081
      %s3083 = smul.u32 8, %s22
      %p3084 = scmp.lt.s32.totalorder %s21, 1
      %s3085 = scalar_select %p3084, %s21, 1
      %p3086 = scmp.lt.s32.totalorder %s3083, 15
      %s3087 = scalar_select %p3086, %s3083, 15
      %s3088 = smul.addr %s3087, 2
      %s3089 = smul.addr %s3085, 32
      %s3090 = sadd.s32 %s3088, %s3089
      %s3091 = smul.addr %s3090, 4
      %s3092 = scalar_lea.vmem %s4, %s3091
      %s3093 = smul.u32 %s21, 2
      %s3094 = sadd.s32 %s3093, %s22
      %p3095 = scmp.lt.s32.totalorder %s3094, 3
      %s3096 = scalar_select %p3095, %s3094, 3
      %s3097 = smul.addr %s3096, 8
      %s3098 = scalar_lea.vmem %s5, %s3097
      // Predicated region
      $region41: #{bottleneck_psp_forward.5} parent=35 // pred_check
        %p3099 = pneg %p138
      $region42: #{bottleneck_psp_forward.5} parent=35 // pred_check_branch
        %3101 = sbr.rel (%p3099) target = $region44
      $region43: #{bottleneck_psp_forward.5} parent=35 // pred_region
        %s3102 = smul.u32 8, %s22
      $region44: #{bottleneck_psp_forward.5} parent=35 // pred_fallthru
        _
      // Predicated region
      $region45: #{bottleneck_psp_forward.5} parent=35 // pred_check
        %p3103 = pneg %p168
      $region46: #{bottleneck_psp_forward.5} parent=35 // pred_check_branch
        %3105 = sbr.rel (%p3103) target = $region48
      $region47: #{bottleneck_psp_forward.5} parent=35 // pred_region
        %s3106 = smul.u32 %s21, 2
        %s3107 = sadd.s32 %s3106, %s22
      $region48: #{bottleneck_psp_forward.5} parent=35 // pred_fallthru
        _
    $region36: #{bottleneck_psp_forward.5} parent=5 // pred_fallthru
      _
    %p3108 = scmp.le.s32.totalorder 2, %s12
    // Predicated region
    $region49: #{bottleneck_psp_forward.5} parent=5 // pred_check
      %p3109 = pneg %p3108
    $region50: #{bottleneck_psp_forward.5} parent=5 // pred_check_branch
      %3111 = sbr.rel (%p3109) target = $region52
    $region51: #{bottleneck_psp_forward.5} parent=5 // pred_region
      %s3112 = ssub.s32 %s12, 2
      // Predicated region
      $region53: #{bottleneck_psp_forward.5} parent=51 // pred_check
        %p3113 = pneg %p144
      $region54: #{bottleneck_psp_forward.5} parent=51 // pred_check_branch
        %3115 = sbr.rel (%p3113) target = $region56
      $region55: #{bottleneck_psp_forward.5} parent=51 // pred_region
        %s3116 = smul.u32 8, %s24
        %p3117 = scmp.lt.s32.totalorder %s23, 1
        %s3118 = scalar_select %p3117, %s23, 1
        %p3119 = scmp.lt.s32.totalorder %s3116, 15
        %s3120 = scalar_select %p3119, %s3116, 15
        %s3121 = smul.addr %s3120, 2
        %s3122 = smul.addr %s3118, 32
        %s3123 = sadd.s32 %s3121, %s3122
        %s3124 = smul.addr %s3123, 4
        %s3125 = scalar_lea.vmem %s4, %s3124
      $region56: #{bottleneck_psp_forward.5} parent=51 // pred_fallthru
        _
      // Predicated region
      $region57: #{bottleneck_psp_forward.5} parent=51 // pred_check
        %p3126 = pneg %p174
      $region58: #{bottleneck_psp_forward.5} parent=51 // pred_check_branch
        %3128 = sbr.rel (%p3126) target = $region60
      $region59: #{bottleneck_psp_forward.5} parent=51 // pred_region
        %s3129 = smul.u32 %s23, 2
        %s3130 = sadd.s32 %s3129, %s24
        %p3131 = scmp.lt.s32.totalorder %s3130, 3
        %s3132 = scalar_select %p3131, %s3130, 3
        %s3133 = smul.addr %s3132, 8
        %s3134 = scalar_lea.vmem %s5, %s3133
      $region60: #{bottleneck_psp_forward.5} parent=51 // pred_fallthru
        _
    $region52: #{bottleneck_psp_forward.5} parent=5 // pred_fallthru
      _
  $region6: #{bottleneck_psp_forward.5} parent=0 // loop_footer
    %s16 = sadd.s32 1, %s12
  $region7: #{bottleneck_psp_forward.5} parent=0 // loop_footer_branch
    %11 = sbr.rel target = $region3
  $region8: #{bottleneck_psp_forward.5} parent=0 // loop_exit
    _

</llo_original>
